<compile_context>
chip_gen: v7x
topology: tpu7x:2x2x1
jax: 0.10.0
libtpu: 0.0.40
codegen_flags: <defaults>
</compile_context>

<pallas_src>
import functools

import jax
import jax.numpy as jnp
from jax import lax
from jax.experimental import pallas as pl
from jax.experimental.pallas import tpu as pltpu

EPS = 1e-5
LANE = 128


def _round_up(v, m):
    return (v + m - 1) // m * m


# ------------------------------ in-kernel helpers ---------------------------- #

def _conv3x3_from_pad(pad_ref, w_ref, ho, wo_pad):
    """3x3 / stride-1 conv from a zero-padded (ho+2, wo_pad+2, C) VMEM scratch.

    Three per-ky matmuls with K = 3*C accumulate in f32 (smaller materialized
    patch than a single K = 9*C concat, MXU contraction still full).
    """
    c = pad_ref.shape[-1]
    acc = None
    for ky in range(3):
        taps = [pad_ref[ky:ky + ho, kx:kx + wo_pad, :] for kx in range(3)]
        p = jnp.concatenate(taps, axis=-1).reshape(ho * wo_pad, 3 * c)
        d = jnp.dot(p, w_ref[ky], preferred_element_type=jnp.float32)
        acc = d if acc is None else acc + d
    return acc


def _conv3x3_s2_from_phases(allp, w_ref, ph_h, ho, wo_pad):
    """3x3 / stride-2 conv from the 4 space-to-depth phases of the padded input.

    allp: (4*ph_h, ph_w, C); phase (p, q) holds xpad[p::2, q::2] in rows
    [(p*2+q)*ph_h : +ph_h], so every tap is an unstrided static slice.
    """
    c = allp.shape[-1]
    acc = None
    for ky in range(3):
        taps = []
        for kx in range(3):
            pidx = (ky % 2) * 2 + (kx % 2)
            ro, co = ky // 2, kx // 2
            taps.append(allp[pidx * ph_h + ro:pidx * ph_h + ro + ho,
                             co:co + wo_pad, :])
        p = jnp.concatenate(taps, axis=-1).reshape(ho * wo_pad, 3 * c)
        d = jnp.dot(p, w_ref[ky], preferred_element_type=jnp.float32)
        acc = d if acc is None else acc + d
    return acc


def _stats(acc, ho, wo, wo_pad):
    """Per-channel (sum, sum_sq) over the *valid* output positions of one image."""
    # TODO(synk): E[x^2]-E[x]^2 in f32 can cancel for very-large-mean channels;
    # acceptable for post-conv activations at these scales.
    if wo_pad != wo:      # mask the columns that exist only for sublane alignment
        col = lax.broadcasted_iota(jnp.int32, (ho * wo_pad, 1), 0) % wo_pad
        m = (col < wo).astype(jnp.float32)
        s = jnp.sum(acc * m, axis=0, keepdims=True)
        ss = jnp.sum(acc * acc * m, axis=0, keepdims=True)
    else:
        s = jnp.sum(acc, axis=0, keepdims=True)
        ss = jnp.sum(acc * acc, axis=0, keepdims=True)
    return jnp.concatenate([s, ss], axis=0)                       # (2, N)


# --------------------------------- kernels ----------------------------------- #

def conv1_s1_kernel(x_ref, w_ref, *refs, ho, wo, wo_pad, has_ds, cout_p):
    """Stride-1 conv1 (+ fused 1x1 downsample); zero-pad done in a VMEM scratch."""
    if has_ds:
        y_ref, ident_ref, stats_ref, pad_ref = refs
    else:
        y_ref, stats_ref, pad_ref = refs
    pad_ref[...] = jnp.zeros_like(pad_ref)
    pad_ref[1:1 + ho, 1:1 + wo, :] = x_ref[0]
    acc = _conv3x3_from_pad(pad_ref, w_ref, ho, wo_pad)
    stats_ref[0] = _stats(acc, ho, wo, wo_pad)
    if has_ds:
        y_ref[0] = acc[:, :cout_p].astype(y_ref.dtype)
        ident_ref[0] = acc[:, cout_p:].astype(ident_ref.dtype)
    else:
        y_ref[0] = acc.astype(y_ref.dtype)


def conv1_s2_kernel(ph_ref, w_ref, *refs, ph_h, ho, wo, wo_pad, has_ds, cout_p):
    """Stride-2 conv1 (+ fused 1x1 downsample) from the phase-split padded input."""
    if has_ds:
        y_ref, ident_ref, stats_ref = refs
    else:
        y_ref, stats_ref = refs
    acc = _conv3x3_s2_from_phases(ph_ref[0], w_ref, ph_h, ho, wo_pad)
    stats_ref[0] = _stats(acc, ho, wo, wo_pad)
    if has_ds:
        y_ref[0] = acc[:, :cout_p].astype(y_ref.dtype)
        ident_ref[0] = acc[:, cout_p:].astype(ident_ref.dtype)
    else:
        y_ref[0] = acc.astype(y_ref.dtype)


def conv2_kernel(y1_ref, sc_ref, sh_ref, w_ref, y2_ref, stats_ref, pad_ref,
                 *, ho, wo, wo_pad):
    """Fused BN1 affine + ReLU + in-VMEM zero-pad + 3x3/stride-1 conv2 + BN2 stats."""
    a = jnp.maximum(y1_ref[0].astype(jnp.float32) * sc_ref[...] + sh_ref[...], 0.0)
    if wo_pad != wo:      # zero alignment-only columns so conv2's right-edge pad is 0
        col = lax.broadcasted_iota(jnp.int32, (ho * wo_pad, 1), 0) % wo_pad
        a = a * (col < wo).astype(jnp.float32)
    pad_ref[...] = jnp.zeros_like(pad_ref)
    pad_ref[1:1 + ho, 1:1 + wo_pad, :] = a.astype(jnp.bfloat16).reshape(ho, wo_pad, -1)
    acc = _conv3x3_from_pad(pad_ref, w_ref, ho, wo_pad)
    stats_ref[0] = _stats(acc, ho, wo, wo_pad)
    y2_ref[0] = acc.astype(y2_ref.dtype)


def final_add_kernel(y_ref, id_ref, s2_ref, b2_ref, out_ref):
    """out = relu(bn2(y2_raw) + identity)   (no downsample path)."""
    y = y_ref[0].astype(jnp.float32) * s2_ref[...] + b2_ref[...]
    out_ref[0] = jnp.maximum(y + id_ref[0].astype(jnp.float32), 0.0).astype(out_ref.dtype)


def final_ds_kernel(y_ref, id_ref, s2_ref, b2_ref, sd_ref, bd_ref, out_ref):
    """out = relu(bn2(y2_raw) + bn_d(ident_raw))   (downsample path)."""
    y = y_ref[0].astype(jnp.float32) * s2_ref[...] + b2_ref[...]
    i = id_ref[0].astype(jnp.float32) * sd_ref[...] + bd_ref[...]
    out_ref[0] = jnp.maximum(y + i, 0.0).astype(out_ref.dtype)


# ------------------------------ wrapper helpers ------------------------------ #

def _make_phases_s2(x, ho, wo_pad):
    """(N,H,W,C) -> (N, 4*ph_h, ph_w, C): space-to-depth phases of the zero-padded x."""
    n, h, w, c = x.shape
    ph_h, ph_w = ho + 1, wo_pad + 1
    hp, wp = 2 * ph_h, 2 * ph_w
    xp = jnp.pad(x, ((0, 0), (1, hp - h - 1), (1, wp - w - 1), (0, 0)))
    ph = jnp.stack([xp[:, p::2, q::2, :] for p in range(2) for q in range(2)], axis=1)
    return ph.reshape(n, 4 * ph_h, ph_w, c), ph_h


def _fold_w3x3(w, cin_p, cout_p):
    """(Cout,Cin,3,3) -> (3, 3*cin_p, cout_p): per-ky groups, kx-major rows in a group."""
    cout, cin = w.shape[0], w.shape[1]
    wt = jnp.transpose(w, (2, 3, 1, 0)).astype(jnp.float32)      # (ky, kx, Cin, Cout)
    wt = jnp.pad(wt, ((0, 0), (0, 0), (0, cin_p - cin), (0, cout_p - cout)))
    return wt.reshape(3, 3 * cin_p, cout_p)


def _bn_scale_shift(stats, gamma, beta, count, c_pad):
    """Fold training-mode BN (batch stats, biased variance) into y*scale + shift."""
    mean = stats[0] / count
    var = jnp.maximum(stats[1] / count - mean * mean, 0.0)
    inv = lax.rsqrt(var + EPS)
    g = jnp.pad(gamma.astype(jnp.float32), (0, c_pad - gamma.shape[0]),
                constant_values=1.0)
    b = jnp.pad(beta.astype(jnp.float32), (0, c_pad - beta.shape[0]))
    scale = g * inv
    shift = b - mean * scale
    return scale.reshape(1, c_pad), shift.reshape(1, c_pad)


# --------------------------------- forward ----------------------------------- #

def basic_block_forward(x_nchw, params, stride):
    x = jnp.transpose(x_nchw, (0, 2, 3, 1)).astype(jnp.float32)     # NCHW -> NHWC
    n, h, w_sz, cin = x.shape
    cout = params["w1"].shape[0]
    cin_p, cout_p = _round_up(cin, LANE), _round_up(cout, LANE)
    ho = (h - 1) // stride + 1
    wo = (w_sz - 1) // stride + 1
    wo_pad = _round_up(wo, 8)                   # sublane-aligned flattened rows
    m_pad = ho * wo_pad
    count = n * ho * wo
    need_ds = (stride != 1) or (cin != cout)
    nw = 2 * cout_p if need_ds else cout_p

    x_p = jnp.pad(x, ((0, 0), (0, 0), (0, 0), (0, cin_p - cin))).astype(jnp.bfloat16)

    # conv1 weight; 1x1 downsample weight folded onto extra N columns of the center
    # tap so the same matmul also emits the raw identity (no second read of x).
    w1f = _fold_w3x3(params["w1"], cin_p, cout_p)
    if need_ds:
        wd2d = jnp.pad(params["wd"][:, :, 0, 0].T.astype(jnp.float32),
                       ((0, cin_p - cin), (0, cout_p - cout)))
        wdf = jnp.zeros((3, 3 * cin_p, cout_p), jnp.float32)
        wdf = wdf.at[1, cin_p:2 * cin_p, :].set(wd2d)               # center tap only
        w1f = jnp.concatenate([w1f, wdf], axis=-1)
    w1b = w1f.astype(jnp.bfloat16)
    w2b = _fold_w3x3(params["w2"], cout_p, cout_p).astype(jnp.bfloat16)

    par = pltpu.CompilerParams(dimension_semantics=("parallel",))
    act_spec = pl.BlockSpec((1, m_pad, cout_p), lambda i: (i, 0, 0))
    row_spec = pl.BlockSpec((1, cout_p), lambda i: (0, 0))
    act_shape = jax.ShapeDtypeStruct((n, m_pad, cout_p), jnp.bfloat16)
    stats1_spec = pl.BlockSpec((1, 2, nw), lambda i: (i, 0, 0))
    stats1_shape = jax.ShapeDtypeStruct((n, 2, nw), jnp.float32)
    stats2_spec = pl.BlockSpec((1, 2, cout_p), lambda i: (i, 0, 0))
    stats2_shape = jax.ShapeDtypeStruct((n, 2, cout_p), jnp.float32)
    w1_spec = pl.BlockSpec((3, 3 * cin_p, nw), lambda i: (0, 0, 0))
    out1_specs = (act_spec, act_spec, stats1_spec) if need_ds else (act_spec, stats1_spec)
    out1_shape = (act_shape, act_shape, stats1_shape) if need_ds else (act_shape, stats1_shape)

    # ---- pass 1: conv1 (+ fused 1x1 downsample) -> bf16 raw + BN statistics ---- #
    if stride == 1:
        outs = pl.pallas_call(
            functools.partial(conv1_s1_kernel, ho=ho, wo=wo, wo_pad=wo_pad,
                              has_ds=need_ds, cout_p=cout_p),
            grid=(n,),
            in_specs=[pl.BlockSpec((1, h, w_sz, cin_p), lambda i: (i, 0, 0, 0)),
                      w1_spec],
            out_specs=out1_specs,
            out_shape=out1_shape,
            scratch_shapes=[pltpu.VMEM((ho + 2, wo_pad + 2, cin_p), jnp.bfloat16)],
            compiler_params=par,
        )(x_p, w1b)
    else:
        assert stride == 2, "BasicBlock uses stride 1 or 2"
        ph1, ph_h = _make_phases_s2(x_p, ho, wo_pad)
        outs = pl.pallas_call(
            functools.partial(conv1_s2_kernel, ph_h=ph_h, ho=ho, wo=wo, wo_pad=wo_pad,
                              has_ds=need_ds, cout_p=cout_p),
            grid=(n,),
            in_specs=[pl.BlockSpec((1, 4 * ph_h, wo_pad + 1, cin_p),
                                   lambda i: (i, 0, 0, 0)),
                      w1_spec],
            out_specs=out1_specs,
            out_shape=out1_shape,
            compiler_params=par,
        )(ph1, w1b)

    if need_ds:
        y1_raw, ident_raw, stats1_steps = outs
    else:
        y1_raw, stats1_steps = outs
    stats1 = jnp.sum(stats1_steps, axis=0)                          # tiny reduction
    scale1, shift1 = _bn_scale_shift(stats1[:, :cout_p], params["gamma1"],
                                     params["beta1"], count, cout_p)

    # ---- pass 2: fused BN1+ReLU -> conv2 (in-VMEM pad) -> bf16 raw + BN2 stats ---- #
    y2_raw, stats2_steps = pl.pallas_call(
        functools.partial(conv2_kernel, ho=ho, wo=wo, wo_pad=wo_pad),
        grid=(n,),
        in_specs=[act_spec, row_spec, row_spec,
                  pl.BlockSpec((3, 3 * cout_p, cout_p), lambda i: (0, 0, 0))],
        out_specs=(act_spec, stats2_spec),
        out_shape=(act_shape, stats2_shape),
        scratch_shapes=[pltpu.VMEM((ho + 2, wo_pad + 2, cout_p), jnp.bfloat16)],
        compiler_params=par,
    )(y1_raw, scale1, shift1, w2b)
    scale2, shift2 = _bn_scale_shift(jnp.sum(stats2_steps, axis=0), params["gamma2"],
                                     params["beta2"], count, cout_p)

    # ---- pass 3: BN2 (+ downsample BN) + residual add + ReLU (bf16 out) ---- #
    if need_ds:
        scaled, shiftd = _bn_scale_shift(stats1[:, cout_p:], params["gammad"],
                                         params["betad"], count, cout_p)
        out = pl.pallas_call(
            final_ds_kernel,
            grid=(n,),
            in_specs=[act_spec, act_spec, row_spec, row_spec, row_spec, row_spec],
            out_specs=act_spec,
            out_shape=act_shape,
            compiler_params=par,
        )(y2_raw, ident_raw, scale2, shift2, scaled, shiftd)
    else:
        ident = x_p                                    # stride 1, cin_p == cout_p here
        if wo_pad != wo:
            ident = jnp.pad(ident, ((0, 0), (0, 0), (0, wo_pad - wo), (0, 0)))
        ident = ident.reshape(n, m_pad, cin_p)
        out = pl.pallas_call(
            final_add_kernel,
            grid=(n,),
            in_specs=[act_spec, act_spec, row_spec, row_spec],
            out_specs=act_spec,
            out_shape=act_shape,
            compiler_params=par,
        )(y2_raw, ident, scale2, shift2)

    out = out.reshape(n, ho, wo_pad, cout_p)[:, :, :wo, :cout]
    return jnp.transpose(out, (0, 3, 1, 2)).astype(jnp.float32)     # NHWC -> NCHW


# ---------------------------- pure-JAX reference ----------------------------- #

def _ref_bn(x, gamma, beta):
    mean = jnp.mean(x, axis=(0, 2, 3), keepdims=True)
    var = jnp.mean((x - mean) ** 2, axis=(0, 2, 3), keepdims=True)
    return ((x - mean) * lax.rsqrt(var + EPS) * gamma.reshape(1, -1, 1, 1)
            + beta.reshape(1, -1, 1, 1))


def ref_forward(x_nchw, params, stride):
    x = x_nchw.astype(jnp.float32)
    dn = ("NCHW", "OIHW", "NCHW")
    out = lax.conv_general_dilated(x, params["w1"], (stride, stride),
                                   ((1, 1), (1, 1)), dimension_numbers=dn)
    out = jnp.maximum(_ref_bn(out, params["gamma1"], params["beta1"]), 0.0)
    out = lax.conv_general_dilated(out, params["w2"], (1, 1),
                                   ((1, 1), (1, 1)), dimension_numbers=dn)
    out = _ref_bn(out, params["gamma2"], params["beta2"])
    cin, cout = params["w1"].shape[1], params["w1"].shape[0]
    if stride != 1 or cin != cout:
        ident = lax.conv_general_dilated(x, params["wd"], (stride, stride),
                                         "VALID", dimension_numbers=dn)
        ident = _ref_bn(ident, params["gammad"], params["betad"])
    else:
        ident = x
    return jnp.maximum(out + ident, 0.0)


# ------------------------------------ main ----------------------------------- #

if __name__ == "__main__":
    # --- case 1: stride-2 block with 1x1-conv + BN downsample (Cin 4 -> Cout 8)
    key = jax.random.PRNGKey(0)
    ks = jax.random.split(key, 8)
    n, cin, cout, h, w = 2, 4, 8, 16, 16
    stride = 2
    params = {
        "w1": jax.random.normal(ks[0], (cout, cin, 3, 3), jnp.float32) * 0.1,
        "gamma1": 1.0 + 0.1 * jax.random.normal(ks[1], (cout,), jnp.float32),
        "beta1": 0.1 * jax.random.normal(ks[2], (cout,), jnp.float32),
        "w2": jax.random.normal(ks[3], (cout, cout, 3, 3), jnp.float32) * 0.1,
        "gamma2": 1.0 + 0.1 * jax.random.normal(ks[4], (cout,), jnp.float32),
        "beta2": 0.1 * jax.random.normal(ks[5], (cout,), jnp.float32),
        "wd": jax.random.normal(ks[6], (cout, cin, 1, 1), jnp.float32) * 0.1,
        "gammad": jnp.ones((cout,), jnp.float32),
        "betad": jnp.zeros((cout,), jnp.float32),
    }
    x = jax.random.normal(jax.random.PRNGKey(42), (n, cin, h, w), jnp.float32)

    fwd = jax.jit(functools.partial(basic_block_forward, stride=stride))
    y = jax.block_until_ready(fwd(x, params))
    y_ref = jax.block_until_ready(ref_forward(x, params, stride))
    assert y.shape == y_ref.shape == (n, cout, h // stride, w // stride), y.shape
    # bf16 MXU operands + bf16 inter-pass activations (f32 accumulation / statistics)
    # -> relaxed tolerance vs the f32 reference.
    assert jnp.allclose(y, y_ref, atol=5e-2, rtol=5e-2), float(
        jnp.max(jnp.abs(y - y_ref)))

    # --- case 2: stride-1 identity block (Cin == Cout = 8), no downsample -----
    ks2 = jax.random.split(jax.random.PRNGKey(1), 6)
    c2 = 8
    params2 = {
        "w1": jax.random.normal(ks2[0], (c2, c2, 3, 3), jnp.float32) * 0.1,
        "gamma1": 1.0 + 0.1 * jax.random.normal(ks2[1], (c2,), jnp.float32),
        "beta1": 0.1 * jax.random.normal(ks2[2], (c2,), jnp.float32),
        "w2": jax.random.normal(ks2[3], (c2, c2, 3, 3), jnp.float32) * 0.1,
        "gamma2": 1.0 + 0.1 * jax.random.normal(ks2[4], (c2,), jnp.float32),
        "beta2": 0.1 * jax.random.normal(ks2[5], (c2,), jnp.float32),
    }
    x2 = jax.random.normal(jax.random.PRNGKey(43), (n, c2, h, w), jnp.float32)

    fwd2 = jax.jit(functools.partial(basic_block_forward, stride=1))
    y2 = jax.block_until_ready(fwd2(x2, params2))
    y2_ref = jax.block_until_ready(ref_forward(x2, params2, 1))
    assert y2.shape == y2_ref.shape == (n, c2, h, w), y2.shape
    assert jnp.allclose(y2, y2_ref, atol=5e-2, rtol=5e-2), float(
        jnp.max(jnp.abs(y2 - y2_ref)))

    print("KERNEL_OK")
</pallas_src>

<mosaic_0001>
module attributes {stable_mosaic.version = 11 : i64} {
  func.func @conv1_s2_kernel(%arg0: i32, %arg1: memref<1x36x9x128xbf16, #tpu.memory_space<vmem>>, %arg2: memref<3x384x256xbf16, #tpu.memory_space<vmem>>, %arg3: memref<1x64x128xbf16, #tpu.memory_space<vmem>>, %arg4: memref<1x64x128xbf16, #tpu.memory_space<vmem>>, %arg5: memref<1x2x256xf32, #tpu.memory_space<vmem>>) attributes {dimension_semantics = [#tpu.dimension_semantics<parallel>], iteration_bounds = array<i64: 2>, scalar_prefetch = 0 : i64, scratch_operands = 0 : i64, tpu.core_type = #tpu.core_type<tc>, window_params = [{transform_indices = @transform_0, window_bounds = array<i64: 1, 36, 9, 128>}, {pipeline_mode = #tpu.pipeline_mode<synchronous>, transform_indices = @transform_1, window_bounds = array<i64: 3, 384, 256>}, {transform_indices = @transform_2, window_bounds = array<i64: 1, 64, 128>}, {transform_indices = @transform_3, window_bounds = array<i64: 1, 64, 128>}, {transform_indices = @transform_4, window_bounds = array<i64: 1, 2, 256>}]} {
    %c0 = arith.constant 0 : index
    %c0_0 = arith.constant 0 : index
    %c0_1 = arith.constant 0 : index
    %c0_2 = arith.constant 0 : index
    %0 = vector.load %arg1[%c0, %c0_0, %c0_1, %c0_2] : memref<1x36x9x128xbf16, #tpu.memory_space<vmem>>, vector<1x36x9x128xbf16>
    %1 = vector.shape_cast %0 : vector<1x36x9x128xbf16> to vector<36x9x128xbf16>
    %2 = vector.extract_strided_slice %1 {offsets = [0, 0, 0], sizes = [8, 8, 128], strides = [1, 1, 1]} : vector<36x9x128xbf16> to vector<8x8x128xbf16>
    %3 = vector.extract_strided_slice %1 {offsets = [9, 0, 0], sizes = [8, 8, 128], strides = [1, 1, 1]} : vector<36x9x128xbf16> to vector<8x8x128xbf16>
    %4 = vector.extract_strided_slice %1 {offsets = [0, 1, 0], sizes = [8, 8, 128], strides = [1, 1, 1]} : vector<36x9x128xbf16> to vector<8x8x128xbf16>
    %5 = tpu.concatenate %2, %3, %4 in 2 : vector<8x8x128xbf16>, vector<8x8x128xbf16>, vector<8x8x128xbf16> -> vector<8x8x384xbf16>
    %6 = vector.shape_cast %5 : vector<8x8x384xbf16> to vector<64x384xbf16>
    %c0_3 = arith.constant 0 : index
    %c0_4 = arith.constant 0 : index
    %c0_5 = arith.constant 0 : index
    %7 = vector.load %arg2[%c0_3, %c0_4, %c0_5] : memref<3x384x256xbf16, #tpu.memory_space<vmem>>, vector<1x384x256xbf16>
    %8 = vector.shape_cast %7 : vector<1x384x256xbf16> to vector<384x256xbf16>
    %cst = arith.constant dense<0.000000e+00> : vector<64x256xf32>
    %9 = tpu.matmul %6, %8, %cst {dimension_numbers = #tpu.dot_dimension_numbers<[1], [0], [0], [1], [0, 0, 1, 1], [], []>} : vector<64x384xbf16>, vector<384x256xbf16>, vector<64x256xf32> -> vector<64x256xf32>
    %10 = vector.extract_strided_slice %1 {offsets = [18, 0, 0], sizes = [8, 8, 128], strides = [1, 1, 1]} : vector<36x9x128xbf16> to vector<8x8x128xbf16>
    %11 = vector.extract_strided_slice %1 {offsets = [27, 0, 0], sizes = [8, 8, 128], strides = [1, 1, 1]} : vector<36x9x128xbf16> to vector<8x8x128xbf16>
    %12 = vector.extract_strided_slice %1 {offsets = [18, 1, 0], sizes = [8, 8, 128], strides = [1, 1, 1]} : vector<36x9x128xbf16> to vector<8x8x128xbf16>
    %13 = tpu.concatenate %10, %11, %12 in 2 : vector<8x8x128xbf16>, vector<8x8x128xbf16>, vector<8x8x128xbf16> -> vector<8x8x384xbf16>
    %14 = vector.shape_cast %13 : vector<8x8x384xbf16> to vector<64x384xbf16>
    %c1 = arith.constant 1 : index
    %c0_6 = arith.constant 0 : index
    %c0_7 = arith.constant 0 : index
    %15 = vector.load %arg2[%c1, %c0_6, %c0_7] : memref<3x384x256xbf16, #tpu.memory_space<vmem>>, vector<1x384x256xbf16>
    %16 = vector.shape_cast %15 : vector<1x384x256xbf16> to vector<384x256xbf16>
    %cst_8 = arith.constant dense<0.000000e+00> : vector<64x256xf32>
    %17 = tpu.matmul %14, %16, %cst_8 {dimension_numbers = #tpu.dot_dimension_numbers<[1], [0], [0], [1], [0, 0, 1, 1], [], []>} : vector<64x384xbf16>, vector<384x256xbf16>, vector<64x256xf32> -> vector<64x256xf32>
    %18 = arith.addf %9, %17 : vector<64x256xf32>
    %19 = vector.extract_strided_slice %1 {offsets = [1, 0, 0], sizes = [8, 8, 128], strides = [1, 1, 1]} : vector<36x9x128xbf16> to vector<8x8x128xbf16>
    %20 = vector.extract_strided_slice %1 {offsets = [10, 0, 0], sizes = [8, 8, 128], strides = [1, 1, 1]} : vector<36x9x128xbf16> to vector<8x8x128xbf16>
    %21 = vector.extract_strided_slice %1 {offsets = [1, 1, 0], sizes = [8, 8, 128], strides = [1, 1, 1]} : vector<36x9x128xbf16> to vector<8x8x128xbf16>
    %22 = tpu.concatenate %19, %20, %21 in 2 : vector<8x8x128xbf16>, vector<8x8x128xbf16>, vector<8x8x128xbf16> -> vector<8x8x384xbf16>
    %23 = vector.shape_cast %22 : vector<8x8x384xbf16> to vector<64x384xbf16>
    %c2 = arith.constant 2 : index
    %c0_9 = arith.constant 0 : index
    %c0_10 = arith.constant 0 : index
    %24 = vector.load %arg2[%c2, %c0_9, %c0_10] : memref<3x384x256xbf16, #tpu.memory_space<vmem>>, vector<1x384x256xbf16>
    %25 = vector.shape_cast %24 : vector<1x384x256xbf16> to vector<384x256xbf16>
    %cst_11 = arith.constant dense<0.000000e+00> : vector<64x256xf32>
    %26 = tpu.matmul %23, %25, %cst_11 {dimension_numbers = #tpu.dot_dimension_numbers<[1], [0], [0], [1], [0, 0, 1, 1], [], []>} : vector<64x384xbf16>, vector<384x256xbf16>, vector<64x256xf32> -> vector<64x256xf32>
    %27 = arith.addf %18, %26 : vector<64x256xf32>
    %cst_12 = arith.constant dense<0.000000e+00> : vector<256xf32>
    %28 = vector.multi_reduction <add>, %27, %cst_12 [0] : vector<64x256xf32> to vector<256xf32>
    %29 = vector.shape_cast %28 : vector<256xf32> to vector<1x256xf32>
    %30 = arith.mulf %27, %27 : vector<64x256xf32>
    %cst_13 = arith.constant dense<0.000000e+00> : vector<256xf32>
    %31 = vector.multi_reduction <add>, %30, %cst_13 [0] : vector<64x256xf32> to vector<256xf32>
    %32 = vector.shape_cast %31 : vector<256xf32> to vector<1x256xf32>
    %33 = tpu.concatenate %29, %32 in 0 : vector<1x256xf32>, vector<1x256xf32> -> vector<2x256xf32>
    %c0_14 = arith.constant 0 : index
    %c0_15 = arith.constant 0 : index
    %c0_16 = arith.constant 0 : index
    %34 = vector.load %arg5[%c0_14, %c0_15, %c0_16] : memref<1x2x256xf32, #tpu.memory_space<vmem>>, vector<1x2x256xf32>
    %35 = vector.shape_cast %34 : vector<1x2x256xf32> to vector<2x256xf32>
    %36 = vector.shape_cast %33 : vector<2x256xf32> to vector<1x2x256xf32>
    tpu.vector_store %arg5[%c0_14, %c0_15, %c0_16], %36 {strides = array<i32>} : memref<1x2x256xf32, #tpu.memory_space<vmem>>, vector<1x2x256xf32>,
    %37 = vector.extract_strided_slice %27 {offsets = [0, 0], sizes = [64, 128], strides = [1, 1]} : vector<64x256xf32> to vector<64x128xf32>
    %38 = arith.truncf %37 : vector<64x128xf32> to vector<64x128xbf16>
    %c0_17 = arith.constant 0 : index
    %c0_18 = arith.constant 0 : index
    %c0_19 = arith.constant 0 : index
    %39 = vector.load %arg3[%c0_17, %c0_18, %c0_19] : memref<1x64x128xbf16, #tpu.memory_space<vmem>>, vector<1x64x128xbf16>
    %40 = vector.shape_cast %39 : vector<1x64x128xbf16> to vector<64x128xbf16>
    %41 = vector.shape_cast %38 : vector<64x128xbf16> to vector<1x64x128xbf16>
    tpu.vector_store %arg3[%c0_17, %c0_18, %c0_19], %41 {strides = array<i32>} : memref<1x64x128xbf16, #tpu.memory_space<vmem>>, vector<1x64x128xbf16>,
    %42 = vector.extract_strided_slice %27 {offsets = [0, 128], sizes = [64, 128], strides = [1, 1]} : vector<64x256xf32> to vector<64x128xf32>
    %43 = arith.truncf %42 : vector<64x128xf32> to vector<64x128xbf16>
    %c0_20 = arith.constant 0 : index
    %c0_21 = arith.constant 0 : index
    %c0_22 = arith.constant 0 : index
    %44 = vector.load %arg4[%c0_20, %c0_21, %c0_22] : memref<1x64x128xbf16, #tpu.memory_space<vmem>>, vector<1x64x128xbf16>
    %45 = vector.shape_cast %44 : vector<1x64x128xbf16> to vector<64x128xbf16>
    %46 = vector.shape_cast %43 : vector<64x128xbf16> to vector<1x64x128xbf16>
    tpu.vector_store %arg4[%c0_20, %c0_21, %c0_22], %46 {strides = array<i32>} : memref<1x64x128xbf16, #tpu.memory_space<vmem>>, vector<1x64x128xbf16>,
    return
  }
  func.func @transform_0(%arg0: i32) -> (i32, i32, i32, i32) {
    %c0_i32 = arith.constant 0 : i32
    %c0_i32_0 = arith.constant 0 : i32
    %c0_i32_1 = arith.constant 0 : i32
    %c0_i32_2 = arith.constant 0 : i32
    return %arg0, %c0_i32, %c0_i32_0, %c0_i32_1 : i32, i32, i32, i32
  }
  func.func @transform_1(%arg0: i32) -> (i32, i32, i32) {
    %c0_i32 = arith.constant 0 : i32
    %c0_i32_0 = arith.constant 0 : i32
    %c0_i32_1 = arith.constant 0 : i32
    %c0_i32_2 = arith.constant 0 : i32
    return %c0_i32, %c0_i32_0, %c0_i32_1 : i32, i32, i32
  }
  func.func @transform_2(%arg0: i32) -> (i32, i32, i32) {
    %c0_i32 = arith.constant 0 : i32
    %c0_i32_0 = arith.constant 0 : i32
    %c0_i32_1 = arith.constant 0 : i32
    return %arg0, %c0_i32, %c0_i32_0 : i32, i32, i32
  }
  func.func @transform_3(%arg0: i32) -> (i32, i32, i32) {
    %c0_i32 = arith.constant 0 : i32
    %c0_i32_0 = arith.constant 0 : i32
    %c0_i32_1 = arith.constant 0 : i32
    return %arg0, %c0_i32, %c0_i32_0 : i32, i32, i32
  }
  func.func @transform_4(%arg0: i32) -> (i32, i32, i32) {
    %c0_i32 = arith.constant 0 : i32
    %c0_i32_0 = arith.constant 0 : i32
    %c0_i32_1 = arith.constant 0 : i32
    return %arg0, %c0_i32, %c0_i32_0 : i32, i32, i32
  }
}

module attributes {stable_mosaic.version = 11 : i64} {
  func.func @conv2_kernel(%arg0: i32, %arg1: memref<1x64x128xbf16, #tpu.memory_space<vmem>>, %arg2: memref<1x128xf32, #tpu.memory_space<vmem>>, %arg3: memref<1x128xf32, #tpu.memory_space<vmem>>, %arg4: memref<3x384x128xbf16, #tpu.memory_space<vmem>>, %arg5: memref<1x64x128xbf16, #tpu.memory_space<vmem>>, %arg6: memref<1x2x128xf32, #tpu.memory_space<vmem>>, %arg7: memref<10x10x128xbf16, #tpu.memory_space<vmem>>) attributes {dimension_semantics = [#tpu.dimension_semantics<parallel>], iteration_bounds = array<i64: 2>, scalar_prefetch = 0 : i64, scratch_operands = 1 : i64, tpu.core_type = #tpu.core_type<tc>, window_params = [{transform_indices = @transform_0, window_bounds = array<i64: 1, 64, 128>}, {pipeline_mode = #tpu.pipeline_mode<synchronous>, transform_indices = @transform_1, window_bounds = array<i64: 1, 128>}, {pipeline_mode = #tpu.pipeline_mode<synchronous>, transform_indices = @transform_2, window_bounds = array<i64: 1, 128>}, {pipeline_mode = #tpu.pipeline_mode<synchronous>, transform_indices = @transform_3, window_bounds = array<i64: 3, 384, 128>}, {transform_indices = @transform_4, window_bounds = array<i64: 1, 64, 128>}, {transform_indices = @transform_5, window_bounds = array<i64: 1, 2, 128>}]} {
    %c0 = arith.constant 0 : index
    %c0_0 = arith.constant 0 : index
    %c0_1 = arith.constant 0 : index
    %0 = vector.load %arg1[%c0, %c0_0, %c0_1] : memref<1x64x128xbf16, #tpu.memory_space<vmem>>, vector<1x64x128xbf16>
    %1 = vector.shape_cast %0 : vector<1x64x128xbf16> to vector<64x128xbf16>
    %2 = arith.extf %1 : vector<64x128xbf16> to vector<64x128xf32>
    %c0_2 = arith.constant 0 : index
    %c0_3 = arith.constant 0 : index
    %3 = vector.load %arg2[%c0_2, %c0_3] : memref<1x128xf32, #tpu.memory_space<vmem>>, vector<1x128xf32>
    %4 = vector.broadcast %3 : vector<1x128xf32> to vector<64x128xf32>
    %5 = arith.mulf %2, %4 : vector<64x128xf32>
    %c0_4 = arith.constant 0 : index
    %c0_5 = arith.constant 0 : index
    %6 = vector.load %arg3[%c0_4, %c0_5] : memref<1x128xf32, #tpu.memory_space<vmem>>, vector<1x128xf32>
    %7 = vector.broadcast %6 : vector<1x128xf32> to vector<64x128xf32>
    %8 = arith.addf %5, %7 : vector<64x128xf32>
    %cst = arith.constant 0.000000e+00 : f32
    %9 = vector.broadcast %cst : f32 to vector<64x128xf32>
    %10 = arith.maximumf %8, %9 : vector<64x128xf32>
    %cst_6 = arith.constant 0.000000e+00 : bf16
    %11 = vector.broadcast %cst_6 : bf16 to vector<10x10x128xbf16>
    %c0_7 = arith.constant 0 : index
    %c0_8 = arith.constant 0 : index
    %c0_9 = arith.constant 0 : index
    %12 = vector.load %arg7[%c0_7, %c0_8, %c0_9] : memref<10x10x128xbf16, #tpu.memory_space<vmem>>, vector<10x10x128xbf16>
    tpu.vector_store %arg7[%c0_7, %c0_8, %c0_9], %11 {strides = array<i32>} : memref<10x10x128xbf16, #tpu.memory_space<vmem>>, vector<10x10x128xbf16>,
    %13 = arith.truncf %10 : vector<64x128xf32> to vector<64x128xbf16>
    %14 = vector.shape_cast %13 : vector<64x128xbf16> to vector<8x8x128xbf16>
    %c1 = arith.constant 1 : index
    %c1_10 = arith.constant 1 : index
    %c0_11 = arith.constant 0 : index
    %15 = vector.load %arg7[%c1, %c1_10, %c0_11] : memref<10x10x128xbf16, #tpu.memory_space<vmem>>, vector<8x8x128xbf16>
    tpu.vector_store %arg7[%c1, %c1_10, %c0_11], %14 {strides = array<i32>} : memref<10x10x128xbf16, #tpu.memory_space<vmem>>, vector<8x8x128xbf16>,
    %c0_12 = arith.constant 0 : index
    %c0_13 = arith.constant 0 : index
    %c0_14 = arith.constant 0 : index
    %16 = vector.load %arg7[%c0_12, %c0_13, %c0_14] : memref<10x10x128xbf16, #tpu.memory_space<vmem>>, vector<8x8x128xbf16>
    %c0_15 = arith.constant 0 : index
    %c1_16 = arith.constant 1 : index
    %c0_17 = arith.constant 0 : index
    %17 = vector.load %arg7[%c0_15, %c1_16, %c0_17] : memref<10x10x128xbf16, #tpu.memory_space<vmem>>, vector<8x8x128xbf16>
    %c0_18 = arith.constant 0 : index
    %c2 = arith.constant 2 : index
    %c0_19 = arith.constant 0 : index
    %18 = vector.load %arg7[%c0_18, %c2, %c0_19] : memref<10x10x128xbf16, #tpu.memory_space<vmem>>, vector<8x8x128xbf16>
    %19 = tpu.concatenate %16, %17, %18 in 2 : vector<8x8x128xbf16>, vector<8x8x128xbf16>, vector<8x8x128xbf16> -> vector<8x8x384xbf16>
    %20 = vector.shape_cast %19 : vector<8x8x384xbf16> to vector<64x384xbf16>
    %c0_20 = arith.constant 0 : index
    %c0_21 = arith.constant 0 : index
    %c0_22 = arith.constant 0 : index
    %21 = vector.load %arg4[%c0_20, %c0_21, %c0_22] : memref<3x384x128xbf16, #tpu.memory_space<vmem>>, vector<1x384x128xbf16>
    %22 = vector.shape_cast %21 : vector<1x384x128xbf16> to vector<384x128xbf16>
    %cst_23 = arith.constant dense<0.000000e+00> : vector<64x128xf32>
    %23 = tpu.matmul %20, %22, %cst_23 {dimension_numbers = #tpu.dot_dimension_numbers<[1], [0], [0], [1], [0, 0, 1, 1], [], []>} : vector<64x384xbf16>, vector<384x128xbf16>, vector<64x128xf32> -> vector<64x128xf32>
    %c1_24 = arith.constant 1 : index
    %c0_25 = arith.constant 0 : index
    %c0_26 = arith.constant 0 : index
    %24 = vector.load %arg7[%c1_24, %c0_25, %c0_26] : memref<10x10x128xbf16, #tpu.memory_space<vmem>>, vector<8x8x128xbf16>
    %c1_27 = arith.constant 1 : index
    %c1_28 = arith.constant 1 : index
    %c0_29 = arith.constant 0 : index
    %25 = vector.load %arg7[%c1_27, %c1_28, %c0_29] : memref<10x10x128xbf16, #tpu.memory_space<vmem>>, vector<8x8x128xbf16>
    %c1_30 = arith.constant 1 : index
    %c2_31 = arith.constant 2 : index
    %c0_32 = arith.constant 0 : index
    %26 = vector.load %arg7[%c1_30, %c2_31, %c0_32] : memref<10x10x128xbf16, #tpu.memory_space<vmem>>, vector<8x8x128xbf16>
    %27 = tpu.concatenate %24, %25, %26 in 2 : vector<8x8x128xbf16>, vector<8x8x128xbf16>, vector<8x8x128xbf16> -> vector<8x8x384xbf16>
    %28 = vector.shape_cast %27 : vector<8x8x384xbf16> to vector<64x384xbf16>
    %c1_33 = arith.constant 1 : index
    %c0_34 = arith.constant 0 : index
    %c0_35 = arith.constant 0 : index
    %29 = vector.load %arg4[%c1_33, %c0_34, %c0_35] : memref<3x384x128xbf16, #tpu.memory_space<vmem>>, vector<1x384x128xbf16>
    %30 = vector.shape_cast %29 : vector<1x384x128xbf16> to vector<384x128xbf16>
    %cst_36 = arith.constant dense<0.000000e+00> : vector<64x128xf32>
    %31 = tpu.matmul %28, %30, %cst_36 {dimension_numbers = #tpu.dot_dimension_numbers<[1], [0], [0], [1], [0, 0, 1, 1], [], []>} : vector<64x384xbf16>, vector<384x128xbf16>, vector<64x128xf32> -> vector<64x128xf32>
    %32 = arith.addf %23, %31 : vector<64x128xf32>
    %c2_37 = arith.constant 2 : index
    %c0_38 = arith.constant 0 : index
    %c0_39 = arith.constant 0 : index
    %33 = vector.load %arg7[%c2_37, %c0_38, %c0_39] : memref<10x10x128xbf16, #tpu.memory_space<vmem>>, vector<8x8x128xbf16>
    %c2_40 = arith.constant 2 : index
    %c1_41 = arith.constant 1 : index
    %c0_42 = arith.constant 0 : index
    %34 = vector.load %arg7[%c2_40, %c1_41, %c0_42] : memref<10x10x128xbf16, #tpu.memory_space<vmem>>, vector<8x8x128xbf16>
    %c2_43 = arith.constant 2 : index
    %c2_44 = arith.constant 2 : index
    %c0_45 = arith.constant 0 : index
    %35 = vector.load %arg7[%c2_43, %c2_44, %c0_45] : memref<10x10x128xbf16, #tpu.memory_space<vmem>>, vector<8x8x128xbf16>
    %36 = tpu.concatenate %33, %34, %35 in 2 : vector<8x8x128xbf16>, vector<8x8x128xbf16>, vector<8x8x128xbf16> -> vector<8x8x384xbf16>
    %37 = vector.shape_cast %36 : vector<8x8x384xbf16> to vector<64x384xbf16>
    %c2_46 = arith.constant 2 : index
    %c0_47 = arith.constant 0 : index
    %c0_48 = arith.constant 0 : index
    %38 = vector.load %arg4[%c2_46, %c0_47, %c0_48] : memref<3x384x128xbf16, #tpu.memory_space<vmem>>, vector<1x384x128xbf16>
    %39 = vector.shape_cast %38 : vector<1x384x128xbf16> to vector<384x128xbf16>
    %cst_49 = arith.constant dense<0.000000e+00> : vector<64x128xf32>
    %40 = tpu.matmul %37, %39, %cst_49 {dimension_numbers = #tpu.dot_dimension_numbers<[1], [0], [0], [1], [0, 0, 1, 1], [], []>} : vector<64x384xbf16>, vector<384x128xbf16>, vector<64x128xf32> -> vector<64x128xf32>
    %41 = arith.addf %32, %40 : vector<64x128xf32>
    %cst_50 = arith.constant dense<0.000000e+00> : vector<128xf32>
    %42 = vector.multi_reduction <add>, %41, %cst_50 [0] : vector<64x128xf32> to vector<128xf32>
    %43 = vector.shape_cast %42 : vector<128xf32> to vector<1x128xf32>
    %44 = arith.mulf %41, %41 : vector<64x128xf32>
    %cst_51 = arith.constant dense<0.000000e+00> : vector<128xf32>
    %45 = vector.multi_reduction <add>, %44, %cst_51 [0] : vector<64x128xf32> to vector<128xf32>
    %46 = vector.shape_cast %45 : vector<128xf32> to vector<1x128xf32>
    %47 = tpu.concatenate %43, %46 in 0 : vector<1x128xf32>, vector<1x128xf32> -> vector<2x128xf32>
    %c0_52 = arith.constant 0 : index
    %c0_53 = arith.constant 0 : index
    %c0_54 = arith.constant 0 : index
    %48 = vector.load %arg6[%c0_52, %c0_53, %c0_54] : memref<1x2x128xf32, #tpu.memory_space<vmem>>, vector<1x2x128xf32>
    %49 = vector.shape_cast %48 : vector<1x2x128xf32> to vector<2x128xf32>
    %50 = vector.shape_cast %47 : vector<2x128xf32> to vector<1x2x128xf32>
    tpu.vector_store %arg6[%c0_52, %c0_53, %c0_54], %50 {strides = array<i32>} : memref<1x2x128xf32, #tpu.memory_space<vmem>>, vector<1x2x128xf32>,
    %51 = arith.truncf %41 : vector<64x128xf32> to vector<64x128xbf16>
    %c0_55 = arith.constant 0 : index
    %c0_56 = arith.constant 0 : index
    %c0_57 = arith.constant 0 : index
    %52 = vector.load %arg5[%c0_55, %c0_56, %c0_57] : memref<1x64x128xbf16, #tpu.memory_space<vmem>>, vector<1x64x128xbf16>
    %53 = vector.shape_cast %52 : vector<1x64x128xbf16> to vector<64x128xbf16>
    %54 = vector.shape_cast %51 : vector<64x128xbf16> to vector<1x64x128xbf16>
    tpu.vector_store %arg5[%c0_55, %c0_56, %c0_57], %54 {strides = array<i32>} : memref<1x64x128xbf16, #tpu.memory_space<vmem>>, vector<1x64x128xbf16>,
    return
  }
  func.func @transform_0(%arg0: i32) -> (i32, i32, i32) {
    %c0_i32 = arith.constant 0 : i32
    %c0_i32_0 = arith.constant 0 : i32
    %c0_i32_1 = arith.constant 0 : i32
    return %arg0, %c0_i32, %c0_i32_0 : i32, i32, i32
  }
  func.func @transform_1(%arg0: i32) -> (i32, i32) {
    %c0_i32 = arith.constant 0 : i32
    %c0_i32_0 = arith.constant 0 : i32
    %c0_i32_1 = arith.constant 0 : i32
    return %c0_i32, %c0_i32_0 : i32, i32
  }
  func.func @transform_2(%arg0: i32) -> (i32, i32) {
    %c0_i32 = arith.constant 0 : i32
    %c0_i32_0 = arith.constant 0 : i32
    %c0_i32_1 = arith.constant 0 : i32
    return %c0_i32, %c0_i32_0 : i32, i32
  }
  func.func @transform_3(%arg0: i32) -> (i32, i32, i32) {
    %c0_i32 = arith.constant 0 : i32
    %c0_i32_0 = arith.constant 0 : i32
    %c0_i32_1 = arith.constant 0 : i32
    %c0_i32_2 = arith.constant 0 : i32
    return %c0_i32, %c0_i32_0, %c0_i32_1 : i32, i32, i32
  }
  func.func @transform_4(%arg0: i32) -> (i32, i32, i32) {
    %c0_i32 = arith.constant 0 : i32
    %c0_i32_0 = arith.constant 0 : i32
    %c0_i32_1 = arith.constant 0 : i32
    return %arg0, %c0_i32, %c0_i32_0 : i32, i32, i32
  }
  func.func @transform_5(%arg0: i32) -> (i32, i32, i32) {
    %c0_i32 = arith.constant 0 : i32
    %c0_i32_0 = arith.constant 0 : i32
    %c0_i32_1 = arith.constant 0 : i32
    return %arg0, %c0_i32, %c0_i32_0 : i32, i32, i32
  }
}

module attributes {stable_mosaic.version = 11 : i64} {
  func.func @final_ds_kernel(%arg0: i32, %arg1: memref<1x64x128xbf16, #tpu.memory_space<vmem>>, %arg2: memref<1x64x128xbf16, #tpu.memory_space<vmem>>, %arg3: memref<1x128xf32, #tpu.memory_space<vmem>>, %arg4: memref<1x128xf32, #tpu.memory_space<vmem>>, %arg5: memref<1x128xf32, #tpu.memory_space<vmem>>, %arg6: memref<1x128xf32, #tpu.memory_space<vmem>>, %arg7: memref<1x64x128xbf16, #tpu.memory_space<vmem>>) attributes {dimension_semantics = [#tpu.dimension_semantics<parallel>], iteration_bounds = array<i64: 2>, scalar_prefetch = 0 : i64, scratch_operands = 0 : i64, tpu.core_type = #tpu.core_type<tc>, window_params = [{transform_indices = @transform_0, window_bounds = array<i64: 1, 64, 128>}, {transform_indices = @transform_1, window_bounds = array<i64: 1, 64, 128>}, {pipeline_mode = #tpu.pipeline_mode<synchronous>, transform_indices = @transform_2, window_bounds = array<i64: 1, 128>}, {pipeline_mode = #tpu.pipeline_mode<synchronous>, transform_indices = @transform_3, window_bounds = array<i64: 1, 128>}, {pipeline_mode = #tpu.pipeline_mode<synchronous>, transform_indices = @transform_4, window_bounds = array<i64: 1, 128>}, {pipeline_mode = #tpu.pipeline_mode<synchronous>, transform_indices = @transform_5, window_bounds = array<i64: 1, 128>}, {transform_indices = @transform_6, window_bounds = array<i64: 1, 64, 128>}]} {
    %c0 = arith.constant 0 : index
    %c0_0 = arith.constant 0 : index
    %c0_1 = arith.constant 0 : index
    %0 = vector.load %arg1[%c0, %c0_0, %c0_1] : memref<1x64x128xbf16, #tpu.memory_space<vmem>>, vector<1x64x128xbf16>
    %1 = vector.shape_cast %0 : vector<1x64x128xbf16> to vector<64x128xbf16>
    %2 = arith.extf %1 : vector<64x128xbf16> to vector<64x128xf32>
    %c0_2 = arith.constant 0 : index
    %c0_3 = arith.constant 0 : index
    %3 = vector.load %arg3[%c0_2, %c0_3] : memref<1x128xf32, #tpu.memory_space<vmem>>, vector<1x128xf32>
    %4 = vector.broadcast %3 : vector<1x128xf32> to vector<64x128xf32>
    %5 = arith.mulf %2, %4 : vector<64x128xf32>
    %c0_4 = arith.constant 0 : index
    %c0_5 = arith.constant 0 : index
    %6 = vector.load %arg4[%c0_4, %c0_5] : memref<1x128xf32, #tpu.memory_space<vmem>>, vector<1x128xf32>
    %7 = vector.broadcast %6 : vector<1x128xf32> to vector<64x128xf32>
    %8 = arith.addf %5, %7 : vector<64x128xf32>
    %c0_6 = arith.constant 0 : index
    %c0_7 = arith.constant 0 : index
    %c0_8 = arith.constant 0 : index
    %9 = vector.load %arg2[%c0_6, %c0_7, %c0_8] : memref<1x64x128xbf16, #tpu.memory_space<vmem>>, vector<1x64x128xbf16>
    %10 = vector.shape_cast %9 : vector<1x64x128xbf16> to vector<64x128xbf16>
    %11 = arith.extf %10 : vector<64x128xbf16> to vector<64x128xf32>
    %c0_9 = arith.constant 0 : index
    %c0_10 = arith.constant 0 : index
    %12 = vector.load %arg5[%c0_9, %c0_10] : memref<1x128xf32, #tpu.memory_space<vmem>>, vector<1x128xf32>
    %13 = vector.broadcast %12 : vector<1x128xf32> to vector<64x128xf32>
    %14 = arith.mulf %11, %13 : vector<64x128xf32>
    %c0_11 = arith.constant 0 : index
    %c0_12 = arith.constant 0 : index
    %15 = vector.load %arg6[%c0_11, %c0_12] : memref<1x128xf32, #tpu.memory_space<vmem>>, vector<1x128xf32>
    %16 = vector.broadcast %15 : vector<1x128xf32> to vector<64x128xf32>
    %17 = arith.addf %14, %16 : vector<64x128xf32>
    %18 = arith.addf %8, %17 : vector<64x128xf32>
    %cst = arith.constant 0.000000e+00 : f32
    %19 = vector.broadcast %cst : f32 to vector<64x128xf32>
    %20 = arith.maximumf %18, %19 : vector<64x128xf32>
    %21 = arith.truncf %20 : vector<64x128xf32> to vector<64x128xbf16>
    %c0_13 = arith.constant 0 : index
    %c0_14 = arith.constant 0 : index
    %c0_15 = arith.constant 0 : index
    %22 = vector.load %arg7[%c0_13, %c0_14, %c0_15] : memref<1x64x128xbf16, #tpu.memory_space<vmem>>, vector<1x64x128xbf16>
    %23 = vector.shape_cast %22 : vector<1x64x128xbf16> to vector<64x128xbf16>
    %24 = vector.shape_cast %21 : vector<64x128xbf16> to vector<1x64x128xbf16>
    tpu.vector_store %arg7[%c0_13, %c0_14, %c0_15], %24 {strides = array<i32>} : memref<1x64x128xbf16, #tpu.memory_space<vmem>>, vector<1x64x128xbf16>,
    return
  }
  func.func @transform_0(%arg0: i32) -> (i32, i32, i32) {
    %c0_i32 = arith.constant 0 : i32
    %c0_i32_0 = arith.constant 0 : i32
    %c0_i32_1 = arith.constant 0 : i32
    return %arg0, %c0_i32, %c0_i32_0 : i32, i32, i32
  }
  func.func @transform_1(%arg0: i32) -> (i32, i32, i32) {
    %c0_i32 = arith.constant 0 : i32
    %c0_i32_0 = arith.constant 0 : i32
    %c0_i32_1 = arith.constant 0 : i32
    return %arg0, %c0_i32, %c0_i32_0 : i32, i32, i32
  }
  func.func @transform_2(%arg0: i32) -> (i32, i32) {
    %c0_i32 = arith.constant 0 : i32
    %c0_i32_0 = arith.constant 0 : i32
    %c0_i32_1 = arith.constant 0 : i32
    return %c0_i32, %c0_i32_0 : i32, i32
  }
  func.func @transform_3(%arg0: i32) -> (i32, i32) {
    %c0_i32 = arith.constant 0 : i32
    %c0_i32_0 = arith.constant 0 : i32
    %c0_i32_1 = arith.constant 0 : i32
    return %c0_i32, %c0_i32_0 : i32, i32
  }
  func.func @transform_4(%arg0: i32) -> (i32, i32) {
    %c0_i32 = arith.constant 0 : i32
    %c0_i32_0 = arith.constant 0 : i32
    %c0_i32_1 = arith.constant 0 : i32
    return %c0_i32, %c0_i32_0 : i32, i32
  }
  func.func @transform_5(%arg0: i32) -> (i32, i32) {
    %c0_i32 = arith.constant 0 : i32
    %c0_i32_0 = arith.constant 0 : i32
    %c0_i32_1 = arith.constant 0 : i32
    return %c0_i32, %c0_i32_0 : i32, i32
  }
  func.func @transform_6(%arg0: i32) -> (i32, i32, i32) {
    %c0_i32 = arith.constant 0 : i32
    %c0_i32_0 = arith.constant 0 : i32
    %c0_i32_1 = arith.constant 0 : i32
    return %arg0, %c0_i32, %c0_i32_0 : i32, i32, i32
  }
}

</mosaic_0001>

<llo_original>
// kernel: basic_block_forward.5
$region0: #{basic_block_forward.5}
  #allocation0 [shape = 'u32[]', space=smem, size = 0x4, offset = 0x4, fixed_abs, tag = 'smem constant byte address 0x4 - core index']
  #allocation1 [shape = 'u32[144,128]{1,0:T(1,128)}', space=vmem, size = 0x12000, scoped, tag = 'internal scratch']
  %s0 = inlined_call_operand.vmem [shape: bf16[2,64,128], index: 0, kind: input, shape index: {}]
  %s1 = inlined_call_operand.vmem [shape: bf16[2,64,128], index: 1, kind: input, shape index: {}]
  %s2 = inlined_call_operand.vmem [shape: f32[1,128], index: 2, kind: input, shape index: {}]
  %s3 = inlined_call_operand.vmem [shape: f32[1,128], index: 3, kind: input, shape index: {}]
  %s4 = inlined_call_operand.vmem [shape: f32[1,128], index: 4, kind: input, shape index: {}]
  %s5 = inlined_call_operand.vmem [shape: f32[1,128], index: 5, kind: input, shape index: {}]
  %s6 = inlined_call_operand.vmem [shape: bf16[2,64,128], index: 6, kind: output, shape index: {}]
  %s7 = sld [smem:[#allocation0]]
  $region57: #{basic_block_forward.5} parent=0
    _
  %s9 = ssub.s32 1, %s7
  %s10 = scalar_select 0, %s9, %s7
  loop: start=0, step=1, limit=4
  $region2: #{basic_block_forward.5} parent=0 // loop_pre_header
    _
  $region3: #{basic_block_forward.5} parent=0 // loop_header
    %s12 = sphi 0, %s16
    %p13 = scmp.ge.s32.totalorder %s12, 4
    %s22 = sphi 0, %s24
    %s25 = sphi 0, %s22
    %s26 = sphi 0, %s25
    %s42 = sphi 0, %s26
    %s48 = sphi 0, %s50
    %s51 = sphi 0, %s48
    %s52 = sphi 0, %s51
    %s68 = sphi 0, %s52
    %s72 = sphi 0, %s72
    %s74 = sphi 0, %s72
    %s75 = sphi 0, %s74
    %s89 = sphi 0, %s75
    %s93 = sphi 0, %s93
    %s95 = sphi 0, %s93
    %s96 = sphi 0, %s95
    %s110 = sphi 0, %s96
    %s114 = sphi 0, %s114
    %s116 = sphi 0, %s114
    %s117 = sphi 0, %s116
    %s131 = sphi 0, %s117
    %s135 = sphi 0, %s135
    %s137 = sphi 0, %s135
    %s138 = sphi 0, %s137
    %s152 = sphi 0, %s138
    %s158 = sphi 0, %s160
    %s161 = sphi 0, %s158
    %s162 = sphi 0, %s161
    %s178 = sphi 0, %s162
  $region4: #{basic_block_forward.5} parent=0 // loop_header_branch
    %15 = sbr.rel (%p13) target = $region8
  $region5: #{basic_block_forward.5} parent=0 // loop_body
    %s17 = ssub.s32 %s12, 1
    %s18 = ssub.s32 %s12, 2
    %s19 = sadd.s32 %s12, 1
    %s20 = ssub.s32 %s12, %s19
    %p21 = scmp.eq.s32.totalorder %s20, 0
    %s23 = sadd.s32 %s22, 1
    %s24 = scalar_select %p21, %s22, %s23
    %p27 = pneg %p21
    %p28 = scmp.eq.s32.totalorder %s12, 1
    %p29 = por %p27, %p28
    %p30 = scmp.ne.s32.totalorder %s22, %s25
    %p31 = scmp.eq.s32.totalorder %s12, 0
    %p32 = por %p30, %p31
    %p33 = scmp.ne.s32.totalorder %s22, %s25
    %p34 = scmp.eq.s32.totalorder %s17, 1
    %p35 = por %p33, %p34
    %p36 = scmp.ne.s32.totalorder %s25, %s26
    %p37 = scmp.eq.s32.totalorder %s17, 0
    %p38 = por %p36, %p37
    %p39 = scmp.ne.s32.totalorder %s25, %s26
    %p40 = scmp.eq.s32.totalorder %s18, 1
    %p41 = por %p39, %p40
    %p43 = scmp.ne.s32.totalorder %s26, %s42
    %p44 = scmp.eq.s32.totalorder %s18, 0
    %p45 = por %p43, %p44
    %s46 = ssub.s32 %s12, %s19
    %p47 = scmp.eq.s32.totalorder %s46, 0
    %s49 = sadd.s32 %s48, 1
    %s50 = scalar_select %p47, %s48, %s49
    %p53 = pneg %p47
    %p54 = scmp.eq.s32.totalorder %s12, 1
    %p55 = por %p53, %p54
    %p56 = scmp.ne.s32.totalorder %s48, %s51
    %p57 = scmp.eq.s32.totalorder %s12, 0
    %p58 = por %p56, %p57
    %p59 = scmp.ne.s32.totalorder %s48, %s51
    %p60 = scmp.eq.s32.totalorder %s17, 1
    %p61 = por %p59, %p60
    %p62 = scmp.ne.s32.totalorder %s51, %s52
    %p63 = scmp.eq.s32.totalorder %s17, 0
    %p64 = por %p62, %p63
    %p65 = scmp.ne.s32.totalorder %s51, %s52
    %p66 = scmp.eq.s32.totalorder %s18, 1
    %p67 = por %p65, %p66
    %p69 = scmp.ne.s32.totalorder %s52, %s68
    %p70 = scmp.eq.s32.totalorder %s18, 0
    %p71 = por %p69, %p70
    %s73 = sadd.s32 %s72, 1
    %p76 = scmp.eq.s32.totalorder %s12, 1
    %p77 = scmp.ne.s32.totalorder %s72, %s74
    %p78 = scmp.eq.s32.totalorder %s12, 0
    %p79 = por %p77, %p78
    %p80 = scmp.ne.s32.totalorder %s72, %s74
    %p81 = scmp.eq.s32.totalorder %s17, 1
    %p82 = por %p80, %p81
    %p83 = scmp.ne.s32.totalorder %s74, %s75
    %p84 = scmp.eq.s32.totalorder %s17, 0
    %p85 = por %p83, %p84
    %p86 = scmp.ne.s32.totalorder %s74, %s75
    %p87 = scmp.eq.s32.totalorder %s18, 1
    %p88 = por %p86, %p87
    %p90 = scmp.ne.s32.totalorder %s75, %s89
    %p91 = scmp.eq.s32.totalorder %s18, 0
    %p92 = por %p90, %p91
    %s94 = sadd.s32 %s93, 1
    %p97 = scmp.eq.s32.totalorder %s12, 1
    %p98 = scmp.ne.s32.totalorder %s93, %s95
    %p99 = scmp.eq.s32.totalorder %s12, 0
    %p100 = por %p98, %p99
    %p101 = scmp.ne.s32.totalorder %s93, %s95
    %p102 = scmp.eq.s32.totalorder %s17, 1
    %p103 = por %p101, %p102
    %p104 = scmp.ne.s32.totalorder %s95, %s96
    %p105 = scmp.eq.s32.totalorder %s17, 0
    %p106 = por %p104, %p105
    %p107 = scmp.ne.s32.totalorder %s95, %s96
    %p108 = scmp.eq.s32.totalorder %s18, 1
    %p109 = por %p107, %p108
    %p111 = scmp.ne.s32.totalorder %s96, %s110
    %p112 = scmp.eq.s32.totalorder %s18, 0
    %p113 = por %p111, %p112
    %s115 = sadd.s32 %s114, 1
    %p118 = scmp.eq.s32.totalorder %s12, 1
    %p119 = scmp.ne.s32.totalorder %s114, %s116
    %p120 = scmp.eq.s32.totalorder %s12, 0
    %p121 = por %p119, %p120
    %p122 = scmp.ne.s32.totalorder %s114, %s116
    %p123 = scmp.eq.s32.totalorder %s17, 1
    %p124 = por %p122, %p123
    %p125 = scmp.ne.s32.totalorder %s116, %s117
    %p126 = scmp.eq.s32.totalorder %s17, 0
    %p127 = por %p125, %p126
    %p128 = scmp.ne.s32.totalorder %s116, %s117
    %p129 = scmp.eq.s32.totalorder %s18, 1
    %p130 = por %p128, %p129
    %p132 = scmp.ne.s32.totalorder %s117, %s131
    %p133 = scmp.eq.s32.totalorder %s18, 0
    %p134 = por %p132, %p133
    %s136 = sadd.s32 %s135, 1
    %p139 = scmp.eq.s32.totalorder %s12, 1
    %p140 = scmp.ne.s32.totalorder %s135, %s137
    %p141 = scmp.eq.s32.totalorder %s12, 0
    %p142 = por %p140, %p141
    %p143 = scmp.ne.s32.totalorder %s135, %s137
    %p144 = scmp.eq.s32.totalorder %s17, 1
    %p145 = por %p143, %p144
    %p146 = scmp.ne.s32.totalorder %s137, %s138
    %p147 = scmp.eq.s32.totalorder %s17, 0
    %p148 = por %p146, %p147
    %p149 = scmp.ne.s32.totalorder %s137, %s138
    %p150 = scmp.eq.s32.totalorder %s18, 1
    %p151 = por %p149, %p150
    %p153 = scmp.ne.s32.totalorder %s138, %s152
    %p154 = scmp.eq.s32.totalorder %s18, 0
    %p155 = por %p153, %p154
    %s156 = ssub.s32 %s12, %s19
    %p157 = scmp.eq.s32.totalorder %s156, 0
    %s159 = sadd.s32 %s158, 1
    %s160 = scalar_select %p157, %s158, %s159
    %p163 = pneg %p157
    %p164 = scmp.eq.s32.totalorder %s12, 1
    %p165 = por %p163, %p164
    %p166 = scmp.ne.s32.totalorder %s158, %s161
    %p167 = scmp.eq.s32.totalorder %s12, 0
    %p168 = por %p166, %p167
    %p169 = scmp.ne.s32.totalorder %s158, %s161
    %p170 = scmp.eq.s32.totalorder %s17, 1
    %p171 = por %p169, %p170
    %p172 = scmp.ne.s32.totalorder %s161, %s162
    %p173 = scmp.eq.s32.totalorder %s17, 0
    %p174 = por %p172, %p173
    %p175 = scmp.ne.s32.totalorder %s161, %s162
    %p176 = scmp.eq.s32.totalorder %s18, 1
    %p177 = por %p175, %p176
    %p179 = scmp.ne.s32.totalorder %s162, %s178
    %p180 = scmp.eq.s32.totalorder %s18, 0
    %p181 = por %p179, %p180
    %p182 = scmp.le.s32.totalorder 1, %s12
    %p183 = scmp.lt.s32.totalorder %s12, 3
    %p184 = pnand %p182, %p183
    %p185 = pneg %p184
    // Predicated region
    $region9: #{basic_block_forward.5} parent=5 // pred_check
      _
    $region10: #{basic_block_forward.5} parent=5 // pred_check_branch
      %187 = sbr.rel (%p184) target = $region12
    $region11: #{basic_block_forward.5} parent=5 // pred_region
      %s188 = ssub.s32 %s12, 1
      // Predicated region
      $region13: #{basic_block_forward.5} parent=11 // pred_check
        %p189 = pneg %p85
      $region14: #{basic_block_forward.5} parent=11 // pred_check_branch
        %191 = sbr.rel (%p189) target = $region16
      $region15: #{basic_block_forward.5} parent=11 // pred_region
        _
      $region16: #{basic_block_forward.5} parent=11 // pred_fallthru
        _
      // Predicated region
      $region17: #{basic_block_forward.5} parent=11 // pred_check
        %p192 = pneg %p106
      $region18: #{basic_block_forward.5} parent=11 // pred_check_branch
        %194 = sbr.rel (%p192) target = $region20
      $region19: #{basic_block_forward.5} parent=11 // pred_region
        _
      $region20: #{basic_block_forward.5} parent=11 // pred_fallthru
        _
      // Predicated region
      $region21: #{basic_block_forward.5} parent=11 // pred_check
        %p195 = pneg %p127
      $region22: #{basic_block_forward.5} parent=11 // pred_check_branch
        %197 = sbr.rel (%p195) target = $region24
      $region23: #{basic_block_forward.5} parent=11 // pred_region
        _
      $region24: #{basic_block_forward.5} parent=11 // pred_fallthru
        _
      // Predicated region
      $region25: #{basic_block_forward.5} parent=11 // pred_check
        %p198 = pneg %p148
      $region26: #{basic_block_forward.5} parent=11 // pred_check_branch
        %200 = sbr.rel (%p198) target = $region28
      $region27: #{basic_block_forward.5} parent=11 // pred_region
        _
      $region28: #{basic_block_forward.5} parent=11 // pred_fallthru
        _
    $region12: #{basic_block_forward.5} parent=5 // pred_fallthru
      _
    %p201 = scmp.lt.s32.totalorder %s12, 2
    // Predicated region
    $region29: #{basic_block_forward.5} parent=5 // pred_check
      %p202 = pneg %p201
    $region30: #{basic_block_forward.5} parent=5 // pred_check_branch
      %204 = sbr.rel (%p202) target = $region32
    $region31: #{basic_block_forward.5} parent=5 // pred_region
      // Predicated region
      $region33: #{basic_block_forward.5} parent=31 // pred_check
        %p205 = pneg %p32
      $region34: #{basic_block_forward.5} parent=31 // pred_check_branch
        %207 = sbr.rel (%p205) target = $region36
      $region35: #{basic_block_forward.5} parent=31 // pred_region
        %p208 = scmp.lt.s32.totalorder %s12, 1
        %s209 = scalar_select %p208, %s12, 1
        %s210 = smul.addr %s209, 8
        %s211 = smul.addr %s210, 4
        %s212 = scalar_lea.vmem %s0, %s211
      $region36: #{basic_block_forward.5} parent=31 // pred_fallthru
        _
      // Predicated region
      $region37: #{basic_block_forward.5} parent=31 // pred_check
        %p213 = pneg %p58
      $region38: #{basic_block_forward.5} parent=31 // pred_check_branch
        %215 = sbr.rel (%p213) target = $region40
      $region39: #{basic_block_forward.5} parent=31 // pred_region
        %p216 = scmp.lt.s32.totalorder %s12, 1
        %s217 = scalar_select %p216, %s12, 1
        %s218 = smul.addr %s217, 8
        %s219 = smul.addr %s218, 4
        %s220 = scalar_lea.vmem %s1, %s219
      $region40: #{basic_block_forward.5} parent=31 // pred_fallthru
        _
    $region32: #{basic_block_forward.5} parent=5 // pred_fallthru
      _
    %p221 = scmp.le.s32.totalorder 1, %s12
    %p222 = scmp.lt.s32.totalorder %s12, 3
    %p223 = pnand %p221, %p222
    %p224 = pneg %p223
    // Predicated region
    $region41: #{basic_block_forward.5} parent=5 // pred_check
      _
    $region42: #{basic_block_forward.5} parent=5 // pred_check_branch
      %226 = sbr.rel (%p223) target = $region44
    $region43: #{basic_block_forward.5} parent=5 // pred_region
      %s227 = ssub.s32 %s12, 1
      %p228 = scmp.lt.s32.totalorder %s17, 1
      %s229 = scalar_select %p228, %s17, 1
      %s230 = smul.addr %s229, 8
      %s231 = smul.addr %s230, 4
      %s232 = scalar_lea.vmem %s0, %s231
      %p233 = pneg %p38
      %p234 = pneg %p35
      %p235 = scmp.lt.s32.totalorder %s17, 1
      %s236 = scalar_select %p235, %s17, 1
      %s237 = smul.addr %s236, 8
      %s238 = smul.addr %s237, 4
      %s239 = scalar_lea.vmem %s1, %s238
      %p240 = pneg %p64
      %p241 = pneg %p61
      %p242 = pneg %p85
      %p243 = pneg %p82
      %p244 = pneg %p106
      %p245 = pneg %p103
      %p246 = pneg %p127
      %p247 = pneg %p124
      %p248 = pneg %p148
      %p249 = pneg %p145
      %p250 = pneg %p174
      %p251 = pneg %p171
      %p252 = scmp.lt.s32.totalorder %s17, 1
      %s253 = scalar_select %p252, %s17, 1
      %s254 = smul.addr %s253, 8
      %s255 = smul.addr %s254, 4
      %s256 = scalar_lea.vmem %s6, %s255
      %p257 = scmp.lt.s32.totalorder %s17, 1
      %s258 = scalar_select %p257, %s17, 1
      %s259 = smul.addr %s258, 8
      %s260 = smul.addr %s259, 4
      %s261 = scalar_lea.vmem %s0, %s260
      %p262 = scmp.lt.s32.totalorder %s17, 1
      %s263 = scalar_select %p262, %s17, 1
      %s264 = smul.addr %s263, 8
      %s265 = smul.addr %s264, 4
      %s266 = scalar_lea.vmem %s1, %s265
      %p267 = scmp.lt.s32.totalorder %s17, 1
      %s268 = scalar_select %p267, %s17, 1
      %s269 = smul.addr %s268, 8
      %s270 = smul.addr %s269, 4
      %s271 = scalar_lea.vmem %s6, %s270
      %v272 = vld [vmem:[%s261] sm:$0xf]
      %v273 = vld [vmem:[%s261 + $0x4] sm:$0xf]
      %v274 = vld [vmem:[%s261 + $0x8] sm:$0xf]
      %v275 = vld [vmem:[%s261 + $0xc] sm:$0xf]
      %v276 = vld [vmem:[%s261 + $0x10] sm:$0xf]
      %v277 = vld [vmem:[%s261 + $0x14] sm:$0xf]
      %v278 = vld [vmem:[%s261 + $0x18] sm:$0xf]
      %v279 = vld [vmem:[%s261 + $0x1c] sm:$0xf]
      %v280 = vunpack.c.l.bf16 %v272
      %v281 = vunpack.c.l.bf16 %v273
      %v282 = vunpack.c.l.bf16 %v274
      %v283 = vunpack.c.l.bf16 %v275
      %v284 = vunpack.c.l.bf16 %v276
      %v285 = vunpack.c.l.bf16 %v277
      %v286 = vunpack.c.l.bf16 %v278
      %v287 = vunpack.c.l.bf16 %v279
      %v288 = vld [vmem:[%s2] sm:$0x1]
      %v290 = vlaneseq
      %v291 = vshrl.u32 %v290, 7
      %v292 = vsub.s32 0, %v291
      %v293 = vrot.slane %v288, %v292
      %v295 = vmul.f32 %v280, %v293
      %v296 = vmul.f32 %v281, %v293
      %v297 = vmul.f32 %v282, %v293
      %v298 = vmul.f32 %v283, %v293
      %v299 = vmul.f32 %v284, %v293
      %v300 = vmul.f32 %v285, %v293
      %v301 = vmul.f32 %v286, %v293
      %v302 = vmul.f32 %v287, %v293
      %v303 = vld [vmem:[%s3] sm:$0x1]
      %v305 = vlaneseq
      %v306 = vshrl.u32 %v305, 7
      %v307 = vsub.s32 0, %v306
      %v308 = vrot.slane %v303, %v307
      %v310 = vadd.f32 %v295, %v308
      %v311 = vadd.f32 %v296, %v308
      %v312 = vadd.f32 %v297, %v308
      %v313 = vadd.f32 %v298, %v308
      %v314 = vadd.f32 %v299, %v308
      %v315 = vadd.f32 %v300, %v308
      %v316 = vadd.f32 %v301, %v308
      %v317 = vadd.f32 %v302, %v308
      %v318 = vld [vmem:[%s266] sm:$0xf]
      %v319 = vld [vmem:[%s266 + $0x4] sm:$0xf]
      %v320 = vld [vmem:[%s266 + $0x8] sm:$0xf]
      %v321 = vld [vmem:[%s266 + $0xc] sm:$0xf]
      %v322 = vld [vmem:[%s266 + $0x10] sm:$0xf]
      %v323 = vld [vmem:[%s266 + $0x14] sm:$0xf]
      %v324 = vld [vmem:[%s266 + $0x18] sm:$0xf]
      %v325 = vld [vmem:[%s266 + $0x1c] sm:$0xf]
      %v326 = vunpack.c.l.bf16 %v318
      %v327 = vunpack.c.l.bf16 %v319
      %v328 = vunpack.c.l.bf16 %v320
      %v329 = vunpack.c.l.bf16 %v321
      %v330 = vunpack.c.l.bf16 %v322
      %v331 = vunpack.c.l.bf16 %v323
      %v332 = vunpack.c.l.bf16 %v324
      %v333 = vunpack.c.l.bf16 %v325
      %v334 = vld [vmem:[%s4] sm:$0x1]
      %v336 = vlaneseq
      %v337 = vshrl.u32 %v336, 7
      %v338 = vsub.s32 0, %v337
      %v339 = vrot.slane %v334, %v338
      %v341 = vmul.f32 %v326, %v339
      %v342 = vmul.f32 %v327, %v339
      %v343 = vmul.f32 %v328, %v339
      %v344 = vmul.f32 %v329, %v339
      %v345 = vmul.f32 %v330, %v339
      %v346 = vmul.f32 %v331, %v339
      %v347 = vmul.f32 %v332, %v339
      %v348 = vmul.f32 %v333, %v339
      %v349 = vld [vmem:[%s5] sm:$0x1]
      %v351 = vlaneseq
      %v352 = vshrl.u32 %v351, 7
      %v353 = vsub.s32 0, %v352
      %v354 = vrot.slane %v349, %v353
      %v356 = vadd.f32 %v341, %v354
      %v357 = vadd.f32 %v342, %v354
      %v358 = vadd.f32 %v343, %v354
      %v359 = vadd.f32 %v344, %v354
      %v360 = vadd.f32 %v345, %v354
      %v361 = vadd.f32 %v346, %v354
      %v362 = vadd.f32 %v347, %v354
      %v363 = vadd.f32 %v348, %v354
      %v364 = vadd.f32 %v310, %v356
      %v365 = vadd.f32 %v311, %v357
      %v366 = vadd.f32 %v312, %v358
      %v367 = vadd.f32 %v313, %v359
      %v368 = vadd.f32 %v314, %v360
      %v369 = vadd.f32 %v315, %v361
      %v370 = vadd.f32 %v316, %v362
      %v371 = vadd.f32 %v317, %v363
      %v372 = vmax.f32 %v364, 0.0
      %v373 = vmax.f32 %v365, 0.0
      %v374 = vmax.f32 %v366, 0.0
      %v375 = vmax.f32 %v367, 0.0
      %v376 = vmax.f32 %v368, 0.0
      %v377 = vmax.f32 %v369, 0.0
      %v378 = vmax.f32 %v370, 0.0
      %v379 = vmax.f32 %v371, 0.0
      %v380 = vpack.c.bf16 %v373, %v372
      %v381 = vpack.c.bf16 %v375, %v374
      %v382 = vpack.c.bf16 %v377, %v376
      %v383 = vpack.c.bf16 %v379, %v378
      %v388 = vunpack.c.l.b16 %v380
      %v389 = vunpack.c.h.b16 %v380
      %v390 = vunpack.c.l.b16 %v381
      %v391 = vunpack.c.h.b16 %v381
      %v392 = vunpack.c.l.b16 %v382
      %v393 = vunpack.c.h.b16 %v382
      %v394 = vunpack.c.l.b16 %v383
      %v395 = vunpack.c.h.b16 %v383
      %v396 = vpack.c.b16 %v388, %v388
      %v397 = vpack.c.b16 %v389, %v389
      %v398 = vpack.c.b16 %v390, %v390
      %v399 = vpack.c.b16 %v391, %v391
      %v400 = vpack.c.b16 %v392, %v392
      %v401 = vpack.c.b16 %v393, %v393
      %v402 = vpack.c.b16 %v394, %v394
      %v403 = vpack.c.b16 %v395, %v395
      %412 = vst [vmem:[%s271] sm:$0xf] %v396
      %413 = vst [vmem:[%s271 + $0x4] sm:$0xf] %v397
      %414 = vst [vmem:[%s271 + $0x8] sm:$0xf] %v398
      %415 = vst [vmem:[%s271 + $0xc] sm:$0xf] %v399
      %416 = vst [vmem:[%s271 + $0x10] sm:$0xf] %v400
      %417 = vst [vmem:[%s271 + $0x14] sm:$0xf] %v401
      %418 = vst [vmem:[%s271 + $0x18] sm:$0xf] %v402
      %419 = vst [vmem:[%s271 + $0x1c] sm:$0xf] %v403
      %p420 = scmp.lt.s32.totalorder %s17, 1
      %s421 = scalar_select %p420, %s17, 1
      %s422 = smul.addr %s421, 8
      %s423 = smul.addr %s422, 4
      %s424 = scalar_lea.vmem %s6, %s423
      // Predicated region
      $region45: #{basic_block_forward.5} parent=43 // pred_check
        %p425 = pneg %p171
      $region46: #{basic_block_forward.5} parent=43 // pred_check_branch
        %427 = sbr.rel (%p425) target = $region48
      $region47: #{basic_block_forward.5} parent=43 // pred_region
        _
      $region48: #{basic_block_forward.5} parent=43 // pred_fallthru
        _
    $region44: #{basic_block_forward.5} parent=5 // pred_fallthru
      _
    %p428 = scmp.le.s32.totalorder 2, %s12
    // Predicated region
    $region49: #{basic_block_forward.5} parent=5 // pred_check
      %p429 = pneg %p428
    $region50: #{basic_block_forward.5} parent=5 // pred_check_branch
      %431 = sbr.rel (%p429) target = $region52
    $region51: #{basic_block_forward.5} parent=5 // pred_region
      %s432 = ssub.s32 %s12, 2
      // Predicated region
      $region53: #{basic_block_forward.5} parent=51 // pred_check
        %p433 = pneg %p177
      $region54: #{basic_block_forward.5} parent=51 // pred_check_branch
        %435 = sbr.rel (%p433) target = $region56
      $region55: #{basic_block_forward.5} parent=51 // pred_region
        %p436 = scmp.lt.s32.totalorder %s18, 1
        %s437 = scalar_select %p436, %s18, 1
        %s438 = smul.addr %s437, 8
        %s439 = smul.addr %s438, 4
        %s440 = scalar_lea.vmem %s6, %s439
      $region56: #{basic_block_forward.5} parent=51 // pred_fallthru
        _
    $region52: #{basic_block_forward.5} parent=5 // pred_fallthru
      _
  $region6: #{basic_block_forward.5} parent=0 // loop_footer
    %s16 = sadd.s32 1, %s12
  $region7: #{basic_block_forward.5} parent=0 // loop_footer_branch
    %11 = sbr.rel target = $region3
  $region8: #{basic_block_forward.5} parent=0 // loop_exit
    _

// kernel: basic_block_forward.3
$region0: #{basic_block_forward.3}
  #allocation0 [shape = 'u32[]', space=smem, size = 0x4, offset = 0x4, fixed_abs, tag = 'smem constant byte address 0x4 - core index']
  #allocation1 [shape = 'u32[144,128]{1,0:T(1,128)}', space=vmem, size = 0x12000, scoped, tag = 'internal scratch']
  %s0 = inlined_call_operand.vmem [shape: bf16[2,36,9,128], index: 0, kind: input, shape index: {}]
  %s1 = inlined_call_operand.vmem [shape: bf16[3,384,256], index: 1, kind: input, shape index: {}]
  %s2 = inlined_call_operand.vmem [shape: bf16[2,64,128], index: 2, kind: output, shape index: {0}]
  %s3 = inlined_call_operand.vmem [shape: bf16[2,64,128], index: 3, kind: output, shape index: {1}]
  %s4 = inlined_call_operand.vmem [shape: f32[2,2,256], index: 4, kind: output, shape index: {2}]
  %5 = xla_tuple %s2, %s3, %s4
  %s6 = sld [smem:[#allocation0]]
  $region57: #{basic_block_forward.3} parent=0
    _
  %s8 = ssub.s32 1, %s6
  %s9 = scalar_select 0, %s8, %s6
  loop: start=0, step=1, limit=4
  $region2: #{basic_block_forward.3} parent=0 // loop_pre_header
    _
  $region3: #{basic_block_forward.3} parent=0 // loop_header
    %s11 = sphi 0, %s15
    %p12 = scmp.ge.s32.totalorder %s11, 4
    %s21 = sphi 0, %s23
    %s24 = sphi 0, %s21
    %s25 = sphi 0, %s24
    %s41 = sphi 0, %s25
    %s45 = sphi 0, %s45
    %s47 = sphi 0, %s45
    %s48 = sphi 0, %s47
    %s62 = sphi 0, %s48
    %s68 = sphi 0, %s70
    %s71 = sphi 0, %s68
    %s72 = sphi 0, %s71
    %s88 = sphi 0, %s72
    %s94 = sphi 0, %s96
    %s97 = sphi 0, %s94
    %s98 = sphi 0, %s97
    %s114 = sphi 0, %s98
    %s120 = sphi 0, %s122
    %s123 = sphi 0, %s120
    %s124 = sphi 0, %s123
    %s140 = sphi 0, %s124
  $region4: #{basic_block_forward.3} parent=0 // loop_header_branch
    %14 = sbr.rel (%p12) target = $region8
  $region5: #{basic_block_forward.3} parent=0 // loop_body
    %s16 = ssub.s32 %s11, 1
    %s17 = ssub.s32 %s11, 2
    %s18 = sadd.s32 %s11, 1
    %s19 = ssub.s32 %s11, %s18
    %p20 = scmp.eq.s32.totalorder %s19, 0
    %s22 = sadd.s32 %s21, 1
    %s23 = scalar_select %p20, %s21, %s22
    %p26 = pneg %p20
    %p27 = scmp.eq.s32.totalorder %s11, 1
    %p28 = por %p26, %p27
    %p29 = scmp.ne.s32.totalorder %s21, %s24
    %p30 = scmp.eq.s32.totalorder %s11, 0
    %p31 = por %p29, %p30
    %p32 = scmp.ne.s32.totalorder %s21, %s24
    %p33 = scmp.eq.s32.totalorder %s16, 1
    %p34 = por %p32, %p33
    %p35 = scmp.ne.s32.totalorder %s24, %s25
    %p36 = scmp.eq.s32.totalorder %s16, 0
    %p37 = por %p35, %p36
    %p38 = scmp.ne.s32.totalorder %s24, %s25
    %p39 = scmp.eq.s32.totalorder %s17, 1
    %p40 = por %p38, %p39
    %p42 = scmp.ne.s32.totalorder %s25, %s41
    %p43 = scmp.eq.s32.totalorder %s17, 0
    %p44 = por %p42, %p43
    %s46 = sadd.s32 %s45, 1
    %p49 = scmp.eq.s32.totalorder %s11, 1
    %p50 = scmp.ne.s32.totalorder %s45, %s47
    %p51 = scmp.eq.s32.totalorder %s11, 0
    %p52 = por %p50, %p51
    %p53 = scmp.ne.s32.totalorder %s45, %s47
    %p54 = scmp.eq.s32.totalorder %s16, 1
    %p55 = por %p53, %p54
    %p56 = scmp.ne.s32.totalorder %s47, %s48
    %p57 = scmp.eq.s32.totalorder %s16, 0
    %p58 = por %p56, %p57
    %p59 = scmp.ne.s32.totalorder %s47, %s48
    %p60 = scmp.eq.s32.totalorder %s17, 1
    %p61 = por %p59, %p60
    %p63 = scmp.ne.s32.totalorder %s48, %s62
    %p64 = scmp.eq.s32.totalorder %s17, 0
    %p65 = por %p63, %p64
    %s66 = ssub.s32 %s11, %s18
    %p67 = scmp.eq.s32.totalorder %s66, 0
    %s69 = sadd.s32 %s68, 1
    %s70 = scalar_select %p67, %s68, %s69
    %p73 = pneg %p67
    %p74 = scmp.eq.s32.totalorder %s11, 1
    %p75 = por %p73, %p74
    %p76 = scmp.ne.s32.totalorder %s68, %s71
    %p77 = scmp.eq.s32.totalorder %s11, 0
    %p78 = por %p76, %p77
    %p79 = scmp.ne.s32.totalorder %s68, %s71
    %p80 = scmp.eq.s32.totalorder %s16, 1
    %p81 = por %p79, %p80
    %p82 = scmp.ne.s32.totalorder %s71, %s72
    %p83 = scmp.eq.s32.totalorder %s16, 0
    %p84 = por %p82, %p83
    %p85 = scmp.ne.s32.totalorder %s71, %s72
    %p86 = scmp.eq.s32.totalorder %s17, 1
    %p87 = por %p85, %p86
    %p89 = scmp.ne.s32.totalorder %s72, %s88
    %p90 = scmp.eq.s32.totalorder %s17, 0
    %p91 = por %p89, %p90
    %s92 = ssub.s32 %s11, %s18
    %p93 = scmp.eq.s32.totalorder %s92, 0
    %s95 = sadd.s32 %s94, 1
    %s96 = scalar_select %p93, %s94, %s95
    %p99 = pneg %p93
    %p100 = scmp.eq.s32.totalorder %s11, 1
    %p101 = por %p99, %p100
    %p102 = scmp.ne.s32.totalorder %s94, %s97
    %p103 = scmp.eq.s32.totalorder %s11, 0
    %p104 = por %p102, %p103
    %p105 = scmp.ne.s32.totalorder %s94, %s97
    %p106 = scmp.eq.s32.totalorder %s16, 1
    %p107 = por %p105, %p106
    %p108 = scmp.ne.s32.totalorder %s97, %s98
    %p109 = scmp.eq.s32.totalorder %s16, 0
    %p110 = por %p108, %p109
    %p111 = scmp.ne.s32.totalorder %s97, %s98
    %p112 = scmp.eq.s32.totalorder %s17, 1
    %p113 = por %p111, %p112
    %p115 = scmp.ne.s32.totalorder %s98, %s114
    %p116 = scmp.eq.s32.totalorder %s17, 0
    %p117 = por %p115, %p116
    %s118 = ssub.s32 %s11, %s18
    %p119 = scmp.eq.s32.totalorder %s118, 0
    %s121 = sadd.s32 %s120, 1
    %s122 = scalar_select %p119, %s120, %s121
    %p125 = pneg %p119
    %p126 = scmp.eq.s32.totalorder %s11, 1
    %p127 = por %p125, %p126
    %p128 = scmp.ne.s32.totalorder %s120, %s123
    %p129 = scmp.eq.s32.totalorder %s11, 0
    %p130 = por %p128, %p129
    %p131 = scmp.ne.s32.totalorder %s120, %s123
    %p132 = scmp.eq.s32.totalorder %s16, 1
    %p133 = por %p131, %p132
    %p134 = scmp.ne.s32.totalorder %s123, %s124
    %p135 = scmp.eq.s32.totalorder %s16, 0
    %p136 = por %p134, %p135
    %p137 = scmp.ne.s32.totalorder %s123, %s124
    %p138 = scmp.eq.s32.totalorder %s17, 1
    %p139 = por %p137, %p138
    %p141 = scmp.ne.s32.totalorder %s124, %s140
    %p142 = scmp.eq.s32.totalorder %s17, 0
    %p143 = por %p141, %p142
    %p144 = scmp.le.s32.totalorder 1, %s11
    %p145 = scmp.lt.s32.totalorder %s11, 3
    %p146 = pnand %p144, %p145
    %p147 = pneg %p146
    // Predicated region
    $region9: #{basic_block_forward.3} parent=5 // pred_check
      _
    $region10: #{basic_block_forward.3} parent=5 // pred_check_branch
      %149 = sbr.rel (%p146) target = $region12
    $region11: #{basic_block_forward.3} parent=5 // pred_region
      %s150 = ssub.s32 %s11, 1
      // Predicated region
      $region13: #{basic_block_forward.3} parent=11 // pred_check
        %p151 = pneg %p58
      $region14: #{basic_block_forward.3} parent=11 // pred_check_branch
        %153 = sbr.rel (%p151) target = $region16
      $region15: #{basic_block_forward.3} parent=11 // pred_region
        _
      $region16: #{basic_block_forward.3} parent=11 // pred_fallthru
        _
    $region12: #{basic_block_forward.3} parent=5 // pred_fallthru
      _
    %p154 = scmp.lt.s32.totalorder %s11, 2
    // Predicated region
    $region17: #{basic_block_forward.3} parent=5 // pred_check
      %p155 = pneg %p154
    $region18: #{basic_block_forward.3} parent=5 // pred_check_branch
      %157 = sbr.rel (%p155) target = $region20
    $region19: #{basic_block_forward.3} parent=5 // pred_region
      // Predicated region
      $region21: #{basic_block_forward.3} parent=19 // pred_check
        %p158 = pneg %p31
      $region22: #{basic_block_forward.3} parent=19 // pred_check_branch
        %160 = sbr.rel (%p158) target = $region24
      $region23: #{basic_block_forward.3} parent=19 // pred_region
        %p161 = scmp.lt.s32.totalorder %s11, 1
        %s162 = scalar_select %p161, %s11, 1
        %s163 = smul.addr %s162, 72
        %s164 = smul.addr %s163, 4
        %s165 = scalar_lea.vmem %s0, %s164
      $region24: #{basic_block_forward.3} parent=19 // pred_fallthru
        _
    $region20: #{basic_block_forward.3} parent=5 // pred_fallthru
      _
    %p166 = scmp.le.s32.totalorder 1, %s11
    %p167 = scmp.lt.s32.totalorder %s11, 3
    %p168 = pnand %p166, %p167
    %p169 = pneg %p168
    // Predicated region
    $region25: #{basic_block_forward.3} parent=5 // pred_check
      _
    $region26: #{basic_block_forward.3} parent=5 // pred_check_branch
      %171 = sbr.rel (%p168) target = $region28
    $region27: #{basic_block_forward.3} parent=5 // pred_region
      %s172 = ssub.s32 %s11, 1
      %p173 = scmp.lt.s32.totalorder %s16, 1
      %s174 = scalar_select %p173, %s16, 1
      %s175 = smul.addr %s174, 72
      %s176 = smul.addr %s175, 4
      %s177 = scalar_lea.vmem %s0, %s176
      %p178 = pneg %p37
      %p179 = pneg %p34
      %p180 = pneg %p58
      %p181 = pneg %p55
      %p182 = pneg %p84
      %p183 = pneg %p81
      %p184 = scmp.lt.s32.totalorder %s16, 1
      %s185 = scalar_select %p184, %s16, 1
      %s186 = smul.addr %s185, 8
      %s187 = smul.addr %s186, 4
      %s188 = scalar_lea.vmem %s2, %s187
      %p189 = pneg %p110
      %p190 = pneg %p107
      %p191 = scmp.lt.s32.totalorder %s16, 1
      %s192 = scalar_select %p191, %s16, 1
      %s193 = smul.addr %s192, 8
      %s194 = smul.addr %s193, 4
      %s195 = scalar_lea.vmem %s3, %s194
      %p196 = pneg %p136
      %p197 = pneg %p133
      %p198 = scmp.lt.s32.totalorder %s16, 1
      %s199 = scalar_select %p198, %s16, 1
      %s200 = smul.addr %s199, 2
      %s201 = smul.addr %s200, 2
      %s202 = scalar_lea.vmem %s4, %s201
      %p203 = scmp.lt.s32.totalorder %s16, 1
      %s204 = scalar_select %p203, %s16, 1
      %s205 = smul.addr %s204, 72
      %s206 = smul.addr %s205, 4
      %s207 = scalar_lea.vmem %s0, %s206
      %p208 = scmp.lt.s32.totalorder %s16, 1
      %s209 = scalar_select %p208, %s16, 1
      %s210 = smul.addr %s209, 8
      %s211 = smul.addr %s210, 4
      %s212 = scalar_lea.vmem %s2, %s211
      %p213 = scmp.lt.s32.totalorder %s16, 1
      %s214 = scalar_select %p213, %s16, 1
      %s215 = smul.addr %s214, 8
      %s216 = smul.addr %s215, 4
      %s217 = scalar_lea.vmem %s3, %s216
      %p218 = scmp.lt.s32.totalorder %s16, 1
      %s219 = scalar_select %p218, %s16, 1
      %s220 = smul.addr %s219, 2
      %s221 = smul.addr %s220, 2
      %s222 = scalar_lea.vmem %s4, %s221
      %v224 = vld [vmem:[%s207] sm:$0xf]
      %v225 = vld [vmem:[%s207 + $0x4] sm:$0x1]
      %v226 = vld [vmem:[%s207 + $0x8] sm:$0xf]
      %v227 = vld [vmem:[%s207 + $0xc] sm:$0x1]
      %v228 = vld [vmem:[%s207 + $0x10] sm:$0xf]
      %v229 = vld [vmem:[%s207 + $0x14] sm:$0x1]
      %v230 = vld [vmem:[%s207 + $0x18] sm:$0xf]
      %v231 = vld [vmem:[%s207 + $0x1c] sm:$0x1]
      %v232 = vld [vmem:[%s207 + $0x20] sm:$0xf]
      %v233 = vld [vmem:[%s207 + $0x24] sm:$0x1]
      %v234 = vld [vmem:[%s207 + $0x28] sm:$0xf]
      %v235 = vld [vmem:[%s207 + $0x2c] sm:$0x1]
      %v236 = vld [vmem:[%s207 + $0x30] sm:$0xf]
      %v237 = vld [vmem:[%s207 + $0x34] sm:$0x1]
      %v238 = vld [vmem:[%s207 + $0x38] sm:$0xf]
      %v239 = vld [vmem:[%s207 + $0x3c] sm:$0x1]
      %v240 = vld [vmem:[%s207 + $0x40] sm:$0xf]
      %v241 = vld [vmem:[%s207 + $0x44] sm:$0x1]
      %v242 = vld [vmem:[%s207 + $0x48] sm:$0xf]
      %v243 = vld [vmem:[%s207 + $0x50] sm:$0xf]
      %v244 = vld [vmem:[%s207 + $0x58] sm:$0xf]
      %v245 = vld [vmem:[%s207 + $0x60] sm:$0xf]
      %v246 = vld [vmem:[%s207 + $0x68] sm:$0xf]
      %v247 = vld [vmem:[%s207 + $0x70] sm:$0xf]
      %v248 = vld [vmem:[%s207 + $0x78] sm:$0xf]
      %v249 = vld [vmem:[%s207 + $0x80] sm:$0xf]
      %v250 = vld [vmem:[%s207 + $0x88] sm:$0xf]
      %v251 = vld [vmem:[%s207 + $0x90] sm:$0xf]
      %v252 = vld [vmem:[%s207 + $0x94] sm:$0x1]
      %v253 = vld [vmem:[%s207 + $0x98] sm:$0xf]
      %v254 = vld [vmem:[%s207 + $0x9c] sm:$0x1]
      %v255 = vld [vmem:[%s207 + $0xa0] sm:$0xf]
      %v256 = vld [vmem:[%s207 + $0xa4] sm:$0x1]
      %v257 = vld [vmem:[%s207 + $0xa8] sm:$0xf]
      %v258 = vld [vmem:[%s207 + $0xac] sm:$0x1]
      %v259 = vld [vmem:[%s207 + $0xb0] sm:$0xf]
      %v260 = vld [vmem:[%s207 + $0xb4] sm:$0x1]
      %v261 = vld [vmem:[%s207 + $0xb8] sm:$0xf]
      %v262 = vld [vmem:[%s207 + $0xbc] sm:$0x1]
      %v263 = vld [vmem:[%s207 + $0xc0] sm:$0xf]
      %v264 = vld [vmem:[%s207 + $0xc4] sm:$0x1]
      %v265 = vld [vmem:[%s207 + $0xc8] sm:$0xf]
      %v266 = vld [vmem:[%s207 + $0xcc] sm:$0x1]
      %v267 = vld [vmem:[%s207 + $0xd8] sm:$0xf]
      %v268 = vld [vmem:[%s207 + $0xe0] sm:$0xf]
      %v269 = vld [vmem:[%s207 + $0xe8] sm:$0xf]
      %v270 = vld [vmem:[%s207 + $0xf0] sm:$0xf]
      %v271 = vld [vmem:[%s207 + $0xf8] sm:$0xf]
      %v272 = vld [vmem:[%s207 + $0x100] sm:$0xf]
      %v273 = vld [vmem:[%s207 + $0x108] sm:$0xf]
      %v274 = vld [vmem:[%s207 + $0x110] sm:$0xf]
      %v291 = vunpack.c.l.b16 %v224
      %v292 = vunpack.c.l.b16 %v225
      %v293 = vunpack.c.l.b16 %v226
      %v294 = vunpack.c.l.b16 %v227
      %v295 = vunpack.c.l.b16 %v228
      %v296 = vunpack.c.l.b16 %v229
      %v297 = vunpack.c.l.b16 %v230
      %v298 = vunpack.c.l.b16 %v231
      %v299 = vunpack.c.l.b16 %v232
      %v300 = vunpack.c.l.b16 %v233
      %v301 = vunpack.c.l.b16 %v234
      %v302 = vunpack.c.l.b16 %v235
      %v303 = vunpack.c.l.b16 %v236
      %v304 = vunpack.c.l.b16 %v237
      %v305 = vunpack.c.l.b16 %v238
      %v306 = vunpack.c.l.b16 %v239
      %v307 = vpack.c.b16 %v292, %v291
      %v308 = vpack.c.b16 %v294, %v293
      %v309 = vpack.c.b16 %v296, %v295
      %v310 = vpack.c.b16 %v298, %v297
      %v311 = vpack.c.b16 %v300, %v299
      %v312 = vpack.c.b16 %v302, %v301
      %v313 = vpack.c.b16 %v304, %v303
      %v314 = vpack.c.b16 %v306, %v305
      %v316 = vshrl.u32 %v307, 16
      %v318 = vshll.u32 %v307, 16
      %v320 = vrot.slane %v318, 1
      %v321 = vor.u32 %v316, %v320
      %v323 = vshrl.u32 %v308, 16
      %v325 = vshll.u32 %v308, 16
      %v327 = vrot.slane %v325, 1
      %v328 = vor.u32 %v323, %v327
      %v330 = vshrl.u32 %v309, 16
      %v332 = vshll.u32 %v309, 16
      %v334 = vrot.slane %v332, 1
      %v335 = vor.u32 %v330, %v334
      %v337 = vshrl.u32 %v310, 16
      %v339 = vshll.u32 %v310, 16
      %v341 = vrot.slane %v339, 1
      %v342 = vor.u32 %v337, %v341
      %v344 = vshrl.u32 %v311, 16
      %v346 = vshll.u32 %v311, 16
      %v348 = vrot.slane %v346, 1
      %v349 = vor.u32 %v344, %v348
      %v351 = vshrl.u32 %v312, 16
      %v353 = vshll.u32 %v312, 16
      %v355 = vrot.slane %v353, 1
      %v356 = vor.u32 %v351, %v355
      %v358 = vshrl.u32 %v313, 16
      %v360 = vshll.u32 %v313, 16
      %v362 = vrot.slane %v360, 1
      %v363 = vor.u32 %v358, %v362
      %v365 = vshrl.u32 %v314, 16
      %v367 = vshll.u32 %v314, 16
      %v369 = vrot.slane %v367, 1
      %v370 = vor.u32 %v365, %v369
      %v379 = vunpack.c.l.b16 %v242
      %v380 = vunpack.c.l.b16 %v321
      %v381 = vunpack.c.l.b16 %v243
      %v382 = vunpack.c.l.b16 %v328
      %v383 = vunpack.c.l.b16 %v244
      %v384 = vunpack.c.l.b16 %v335
      %v385 = vunpack.c.l.b16 %v245
      %v386 = vunpack.c.l.b16 %v342
      %v387 = vunpack.c.l.b16 %v246
      %v388 = vunpack.c.l.b16 %v349
      %v389 = vunpack.c.l.b16 %v247
      %v390 = vunpack.c.l.b16 %v356
      %v391 = vunpack.c.l.b16 %v248
      %v392 = vunpack.c.l.b16 %v363
      %v393 = vunpack.c.l.b16 %v249
      %v394 = vunpack.c.l.b16 %v370
      %v395 = vld [vmem:[%s1] sm:$0xff]
      %v396 = vld [vmem:[%s1 + $0x8] sm:$0xff]
      %v397 = vld [vmem:[%s1 + $0x10] sm:$0xff]
      %v398 = vld [vmem:[%s1 + $0x18] sm:$0xff]
      %v399 = vld [vmem:[%s1 + $0x20] sm:$0xff]
      %v400 = vld [vmem:[%s1 + $0x28] sm:$0xff]
      %v401 = vld [vmem:[%s1 + $0x30] sm:$0xff]
      %v402 = vld [vmem:[%s1 + $0x38] sm:$0xff]
      %v403 = vld [vmem:[%s1 + $0x40] sm:$0xff]
      %v404 = vld [vmem:[%s1 + $0x48] sm:$0xff]
      %v405 = vld [vmem:[%s1 + $0x50] sm:$0xff]
      %v406 = vld [vmem:[%s1 + $0x58] sm:$0xff]
      %v407 = vld [vmem:[%s1 + $0x60] sm:$0xff]
      %v408 = vld [vmem:[%s1 + $0x68] sm:$0xff]
      %v409 = vld [vmem:[%s1 + $0x70] sm:$0xff]
      %v410 = vld [vmem:[%s1 + $0x78] sm:$0xff]
      %v411 = vld [vmem:[%s1 + $0x80] sm:$0xff]
      %v412 = vld [vmem:[%s1 + $0x88] sm:$0xff]
      %v413 = vld [vmem:[%s1 + $0x90] sm:$0xff]
      %v414 = vld [vmem:[%s1 + $0x98] sm:$0xff]
      %v415 = vld [vmem:[%s1 + $0xa0] sm:$0xff]
      %v416 = vld [vmem:[%s1 + $0xa8] sm:$0xff]
      %v417 = vld [vmem:[%s1 + $0xb0] sm:$0xff]
      %v418 = vld [vmem:[%s1 + $0xb8] sm:$0xff]
      %v419 = vld [vmem:[%s1 + $0xc0] sm:$0xff]
      %v420 = vld [vmem:[%s1 + $0xc8] sm:$0xff]
      %v421 = vld [vmem:[%s1 + $0xd0] sm:$0xff]
      %v422 = vld [vmem:[%s1 + $0xd8] sm:$0xff]
      %v423 = vld [vmem:[%s1 + $0xe0] sm:$0xff]
      %v424 = vld [vmem:[%s1 + $0xe8] sm:$0xff]
      %v425 = vld [vmem:[%s1 + $0xf0] sm:$0xff]
      %v426 = vld [vmem:[%s1 + $0xf8] sm:$0xff]
      %v427 = vld [vmem:[%s1 + $0x100] sm:$0xff]
      %v428 = vld [vmem:[%s1 + $0x108] sm:$0xff]
      %v429 = vld [vmem:[%s1 + $0x110] sm:$0xff]
      %v430 = vld [vmem:[%s1 + $0x118] sm:$0xff]
      %v431 = vld [vmem:[%s1 + $0x120] sm:$0xff]
      %v432 = vld [vmem:[%s1 + $0x128] sm:$0xff]
      %v433 = vld [vmem:[%s1 + $0x130] sm:$0xff]
      %v434 = vld [vmem:[%s1 + $0x138] sm:$0xff]
      %v435 = vld [vmem:[%s1 + $0x140] sm:$0xff]
      %v436 = vld [vmem:[%s1 + $0x148] sm:$0xff]
      %v437 = vld [vmem:[%s1 + $0x150] sm:$0xff]
      %v438 = vld [vmem:[%s1 + $0x158] sm:$0xff]
      %v439 = vld [vmem:[%s1 + $0x160] sm:$0xff]
      %v440 = vld [vmem:[%s1 + $0x168] sm:$0xff]
      %v441 = vld [vmem:[%s1 + $0x170] sm:$0xff]
      %v442 = vld [vmem:[%s1 + $0x178] sm:$0xff]
      %v459 = vunpack.c.l.b16 %v251
      %v460 = vunpack.c.l.b16 %v252
      %v461 = vunpack.c.l.b16 %v253
      %v462 = vunpack.c.l.b16 %v254
      %v463 = vunpack.c.l.b16 %v255
      %v464 = vunpack.c.l.b16 %v256
      %v465 = vunpack.c.l.b16 %v257
      %v466 = vunpack.c.l.b16 %v258
      %v467 = vunpack.c.l.b16 %v259
      %v468 = vunpack.c.l.b16 %v260
      %v469 = vunpack.c.l.b16 %v261
      %v470 = vunpack.c.l.b16 %v262
      %v471 = vunpack.c.l.b16 %v263
      %v472 = vunpack.c.l.b16 %v264
      %v473 = vunpack.c.l.b16 %v265
      %v474 = vunpack.c.l.b16 %v266
      %v475 = vpack.c.b16 %v460, %v459
      %v476 = vpack.c.b16 %v462, %v461
      %v477 = vpack.c.b16 %v464, %v463
      %v478 = vpack.c.b16 %v466, %v465
      %v479 = vpack.c.b16 %v468, %v467
      %v480 = vpack.c.b16 %v470, %v469
      %v481 = vpack.c.b16 %v472, %v471
      %v482 = vpack.c.b16 %v474, %v473
      %v484 = vshrl.u32 %v475, 16
      %v486 = vshll.u32 %v475, 16
      %v488 = vrot.slane %v486, 1
      %v489 = vor.u32 %v484, %v488
      %v491 = vshrl.u32 %v476, 16
      %v493 = vshll.u32 %v476, 16
      %v495 = vrot.slane %v493, 1
      %v496 = vor.u32 %v491, %v495
      %v498 = vshrl.u32 %v477, 16
      %v500 = vshll.u32 %v477, 16
      %v502 = vrot.slane %v500, 1
      %v503 = vor.u32 %v498, %v502
      %v505 = vshrl.u32 %v478, 16
      %v507 = vshll.u32 %v478, 16
      %v509 = vrot.slane %v507, 1
      %v510 = vor.u32 %v505, %v509
      %v512 = vshrl.u32 %v479, 16
      %v514 = vshll.u32 %v479, 16
      %v516 = vrot.slane %v514, 1
      %v517 = vor.u32 %v512, %v516
      %v519 = vshrl.u32 %v480, 16
      %v521 = vshll.u32 %v480, 16
      %v523 = vrot.slane %v521, 1
      %v524 = vor.u32 %v519, %v523
      %v526 = vshrl.u32 %v481, 16
      %v528 = vshll.u32 %v481, 16
      %v530 = vrot.slane %v528, 1
      %v531 = vor.u32 %v526, %v530
      %v533 = vshrl.u32 %v482, 16
      %v535 = vshll.u32 %v482, 16
      %v537 = vrot.slane %v535, 1
      %v538 = vor.u32 %v533, %v537
      %v547 = vunpack.c.l.b16 %v267
      %v548 = vunpack.c.l.b16 %v489
      %v549 = vunpack.c.l.b16 %v268
      %v550 = vunpack.c.l.b16 %v496
      %v551 = vunpack.c.l.b16 %v269
      %v552 = vunpack.c.l.b16 %v503
      %v553 = vunpack.c.l.b16 %v270
      %v554 = vunpack.c.l.b16 %v510
      %v555 = vunpack.c.l.b16 %v271
      %v556 = vunpack.c.l.b16 %v517
      %v557 = vunpack.c.l.b16 %v272
      %v558 = vunpack.c.l.b16 %v524
      %v559 = vunpack.c.l.b16 %v273
      %v560 = vunpack.c.l.b16 %v531
      %v561 = vunpack.c.l.b16 %v274
      %v562 = vunpack.c.l.b16 %v538
      %s563 = scalar_lea.vmem %s1, 384
      %v564 = vld [vmem:[%s563] sm:$0xff]
      %v565 = vld [vmem:[%s563 + $0x8] sm:$0xff]
      %v566 = vld [vmem:[%s563 + $0x10] sm:$0xff]
      %v567 = vld [vmem:[%s563 + $0x18] sm:$0xff]
      %v568 = vld [vmem:[%s563 + $0x20] sm:$0xff]
      %v569 = vld [vmem:[%s563 + $0x28] sm:$0xff]
      %v570 = vld [vmem:[%s563 + $0x30] sm:$0xff]
      %v571 = vld [vmem:[%s563 + $0x38] sm:$0xff]
      %v572 = vld [vmem:[%s563 + $0x40] sm:$0xff]
      %v573 = vld [vmem:[%s563 + $0x48] sm:$0xff]
      %v574 = vld [vmem:[%s563 + $0x50] sm:$0xff]
      %v575 = vld [vmem:[%s563 + $0x58] sm:$0xff]
      %v576 = vld [vmem:[%s563 + $0x60] sm:$0xff]
      %v577 = vld [vmem:[%s563 + $0x68] sm:$0xff]
      %v578 = vld [vmem:[%s563 + $0x70] sm:$0xff]
      %v579 = vld [vmem:[%s563 + $0x78] sm:$0xff]
      %v580 = vld [vmem:[%s563 + $0x80] sm:$0xff]
      %v581 = vld [vmem:[%s563 + $0x88] sm:$0xff]
      %v582 = vld [vmem:[%s563 + $0x90] sm:$0xff]
      %v583 = vld [vmem:[%s563 + $0x98] sm:$0xff]
      %v584 = vld [vmem:[%s563 + $0xa0] sm:$0xff]
      %v585 = vld [vmem:[%s563 + $0xa8] sm:$0xff]
      %v586 = vld [vmem:[%s563 + $0xb0] sm:$0xff]
      %v587 = vld [vmem:[%s563 + $0xb8] sm:$0xff]
      %v588 = vld [vmem:[%s563 + $0xc0] sm:$0xff]
      %v589 = vld [vmem:[%s563 + $0xc8] sm:$0xff]
      %v590 = vld [vmem:[%s563 + $0xd0] sm:$0xff]
      %v591 = vld [vmem:[%s563 + $0xd8] sm:$0xff]
      %v592 = vld [vmem:[%s563 + $0xe0] sm:$0xff]
      %v593 = vld [vmem:[%s563 + $0xe8] sm:$0xff]
      %v594 = vld [vmem:[%s563 + $0xf0] sm:$0xff]
      %v595 = vld [vmem:[%s563 + $0xf8] sm:$0xff]
      %v596 = vld [vmem:[%s563 + $0x100] sm:$0xff]
      %v597 = vld [vmem:[%s563 + $0x108] sm:$0xff]
      %v598 = vld [vmem:[%s563 + $0x110] sm:$0xff]
      %v599 = vld [vmem:[%s563 + $0x118] sm:$0xff]
      %v600 = vld [vmem:[%s563 + $0x120] sm:$0xff]
      %v601 = vld [vmem:[%s563 + $0x128] sm:$0xff]
      %v602 = vld [vmem:[%s563 + $0x130] sm:$0xff]
      %v603 = vld [vmem:[%s563 + $0x138] sm:$0xff]
      %v604 = vld [vmem:[%s563 + $0x140] sm:$0xff]
      %v605 = vld [vmem:[%s563 + $0x148] sm:$0xff]
      %v606 = vld [vmem:[%s563 + $0x150] sm:$0xff]
      %v607 = vld [vmem:[%s563 + $0x158] sm:$0xff]
      %v608 = vld [vmem:[%s563 + $0x160] sm:$0xff]
      %v609 = vld [vmem:[%s563 + $0x168] sm:$0xff]
      %v610 = vld [vmem:[%s563 + $0x170] sm:$0xff]
      %v611 = vld [vmem:[%s563 + $0x178] sm:$0xff]
      %v612 = vpack.c.b16 %v461, %v459
      %v613 = vpack.c.b16 %v549, %v547
      %v614 = vpack.c.b16 %v550, %v548
      %v615 = vpack.c.b16 %v465, %v463
      %v616 = vpack.c.b16 %v553, %v551
      %v617 = vpack.c.b16 %v554, %v552
      %v618 = vpack.c.b16 %v469, %v467
      %v619 = vpack.c.b16 %v557, %v555
      %v620 = vpack.c.b16 %v558, %v556
      %v621 = vpack.c.b16 %v473, %v471
      %v622 = vpack.c.b16 %v561, %v559
      %v623 = vpack.c.b16 %v562, %v560
      %v684 = vunpack.c.l.b16 %v564
      %v685 = vunpack.c.h.b16 %v564
      %v686 = vunpack.c.l.b16 %v565
      %v687 = vunpack.c.h.b16 %v565
      %v688 = vunpack.c.l.b16 %v566
      %v689 = vunpack.c.h.b16 %v566
      %v690 = vunpack.c.l.b16 %v567
      %v691 = vunpack.c.h.b16 %v567
      %v692 = vunpack.c.l.b16 %v568
      %v693 = vunpack.c.h.b16 %v568
      %v694 = vunpack.c.l.b16 %v569
      %v695 = vunpack.c.h.b16 %v569
      %v696 = vunpack.c.l.b16 %v570
      %v697 = vunpack.c.h.b16 %v570
      %v698 = vunpack.c.l.b16 %v571
      %v699 = vunpack.c.h.b16 %v571
      %v700 = vunpack.c.l.b16 %v572
      %v701 = vunpack.c.h.b16 %v572
      %v702 = vunpack.c.l.b16 %v573
      %v703 = vunpack.c.h.b16 %v573
      %v704 = vunpack.c.l.b16 %v574
      %v705 = vunpack.c.h.b16 %v574
      %v706 = vunpack.c.l.b16 %v575
      %v707 = vunpack.c.h.b16 %v575
      %v708 = vunpack.c.l.b16 %v576
      %v709 = vunpack.c.h.b16 %v576
      %v710 = vunpack.c.l.b16 %v577
      %v711 = vunpack.c.h.b16 %v577
      %v712 = vunpack.c.l.b16 %v578
      %v713 = vunpack.c.h.b16 %v578
      %v714 = vunpack.c.l.b16 %v579
      %v715 = vunpack.c.h.b16 %v579
      %v716 = vunpack.c.l.b16 %v580
      %v717 = vunpack.c.h.b16 %v580
      %v718 = vunpack.c.l.b16 %v581
      %v719 = vunpack.c.h.b16 %v581
      %v720 = vunpack.c.l.b16 %v582
      %v721 = vunpack.c.h.b16 %v582
      %v722 = vunpack.c.l.b16 %v583
      %v723 = vunpack.c.h.b16 %v583
      %v724 = vunpack.c.l.b16 %v584
      %v725 = vunpack.c.h.b16 %v584
      %v726 = vunpack.c.l.b16 %v585
      %v727 = vunpack.c.h.b16 %v585
      %v728 = vunpack.c.l.b16 %v586
      %v729 = vunpack.c.h.b16 %v586
      %v730 = vunpack.c.l.b16 %v587
      %v731 = vunpack.c.h.b16 %v587
      %v732 = vunpack.c.l.b16 %v588
      %v733 = vunpack.c.h.b16 %v588
      %v734 = vunpack.c.l.b16 %v589
      %v735 = vunpack.c.h.b16 %v589
      %v736 = vunpack.c.l.b16 %v590
      %v737 = vunpack.c.h.b16 %v590
      %v738 = vunpack.c.l.b16 %v591
      %v739 = vunpack.c.h.b16 %v591
      %v740 = vunpack.c.l.b16 %v592
      %v741 = vunpack.c.h.b16 %v592
      %v742 = vunpack.c.l.b16 %v593
      %v743 = vunpack.c.h.b16 %v593
      %v744 = vunpack.c.l.b16 %v594
      %v745 = vunpack.c.h.b16 %v594
      %v746 = vunpack.c.l.b16 %v595
      %v747 = vunpack.c.h.b16 %v595
      %v748 = vunpack.c.l.b16 %v596
      %v749 = vunpack.c.h.b16 %v596
      %v750 = vunpack.c.l.b16 %v597
      %v751 = vunpack.c.h.b16 %v597
      %v752 = vunpack.c.l.b16 %v598
      %v753 = vunpack.c.h.b16 %v598
      %v754 = vunpack.c.l.b16 %v599
      %v755 = vunpack.c.h.b16 %v599
      %v756 = vunpack.c.l.b16 %v600
      %v757 = vunpack.c.h.b16 %v600
      %v758 = vunpack.c.l.b16 %v601
      %v759 = vunpack.c.h.b16 %v601
      %v760 = vunpack.c.l.b16 %v602
      %v761 = vunpack.c.h.b16 %v602
      %v762 = vunpack.c.l.b16 %v603
      %v763 = vunpack.c.h.b16 %v603
      %v764 = vunpack.c.l.b16 %v604
      %v765 = vunpack.c.h.b16 %v604
      %v766 = vunpack.c.l.b16 %v605
      %v767 = vunpack.c.h.b16 %v605
      %v768 = vunpack.c.l.b16 %v606
      %v769 = vunpack.c.h.b16 %v606
      %v770 = vunpack.c.l.b16 %v607
      %v771 = vunpack.c.h.b16 %v607
      %v772 = vunpack.c.l.b16 %v608
      %v773 = vunpack.c.h.b16 %v608
      %v774 = vunpack.c.l.b16 %v609
      %v775 = vunpack.c.h.b16 %v609
      %v776 = vunpack.c.l.b16 %v610
      %v777 = vunpack.c.h.b16 %v610
      %v778 = vunpack.c.l.b16 %v611
      %v779 = vunpack.c.h.b16 %v611
      %v780 = vpack.c.b16 %v686, %v684
      %v781 = vpack.c.b16 %v687, %v685
      %v782 = vpack.c.b16 %v690, %v688
      %v783 = vpack.c.b16 %v691, %v689
      %v784 = vpack.c.b16 %v694, %v692
      %v785 = vpack.c.b16 %v695, %v693
      %v786 = vpack.c.b16 %v698, %v696
      %v787 = vpack.c.b16 %v699, %v697
      %v788 = vpack.c.b16 %v702, %v700
      %v789 = vpack.c.b16 %v703, %v701
      %v790 = vpack.c.b16 %v706, %v704
      %v791 = vpack.c.b16 %v707, %v705
      %v792 = vpack.c.b16 %v710, %v708
      %v793 = vpack.c.b16 %v711, %v709
      %v794 = vpack.c.b16 %v714, %v712
      %v795 = vpack.c.b16 %v715, %v713
      %v796 = vpack.c.b16 %v718, %v716
      %v797 = vpack.c.b16 %v719, %v717
      %v798 = vpack.c.b16 %v722, %v720
      %v799 = vpack.c.b16 %v723, %v721
      %v800 = vpack.c.b16 %v726, %v724
      %v801 = vpack.c.b16 %v727, %v725
      %v802 = vpack.c.b16 %v730, %v728
      %v803 = vpack.c.b16 %v731, %v729
      %v804 = vpack.c.b16 %v734, %v732
      %v805 = vpack.c.b16 %v735, %v733
      %v806 = vpack.c.b16 %v738, %v736
      %v807 = vpack.c.b16 %v739, %v737
      %v808 = vpack.c.b16 %v742, %v740
      %v809 = vpack.c.b16 %v743, %v741
      %v810 = vpack.c.b16 %v746, %v744
      %v811 = vpack.c.b16 %v747, %v745
      %v812 = vpack.c.b16 %v750, %v748
      %v813 = vpack.c.b16 %v751, %v749
      %v814 = vpack.c.b16 %v754, %v752
      %v815 = vpack.c.b16 %v755, %v753
      %v816 = vpack.c.b16 %v758, %v756
      %v817 = vpack.c.b16 %v759, %v757
      %v818 = vpack.c.b16 %v762, %v760
      %v819 = vpack.c.b16 %v763, %v761
      %v820 = vpack.c.b16 %v766, %v764
      %v821 = vpack.c.b16 %v767, %v765
      %v822 = vpack.c.b16 %v770, %v768
      %v823 = vpack.c.b16 %v771, %v769
      %v824 = vpack.c.b16 %v774, %v772
      %v825 = vpack.c.b16 %v775, %v773
      %v826 = vpack.c.b16 %v778, %v776
      %v827 = vpack.c.b16 %v779, %v777
      %876 = vmatprep.subr.bf16.mxu0 %v781
      %877 = vmatpush1.bf16.msra.mxu0 %v780
      %878 = vmatprep.subr.bf16.mxu0 %v783
      %879 = vmatpush1.bf16.msra.mxu0 %v782
      %880 = vmatprep.subr.bf16.mxu0 %v785
      %881 = vmatpush1.bf16.msra.mxu0 %v784
      %882 = vmatprep.subr.bf16.mxu0 %v787
      %883 = vmatpush1.bf16.msra.mxu0 %v786
      %884 = vmatprep.subr.bf16.mxu0 %v789
      %885 = vmatpush1.bf16.msra.mxu0 %v788
      %886 = vmatprep.subr.bf16.mxu0 %v791
      %887 = vmatpush1.bf16.msra.mxu0 %v790
      %888 = vmatprep.subr.bf16.mxu0 %v793
      %889 = vmatpush1.bf16.msra.mxu0 %v792
      %890 = vmatprep.subr.bf16.mxu0 %v795
      %891 = vmatpush1.bf16.msra.mxu0 %v794
      %892 = vmatprep.subr.bf16.mxu0 %v797
      %893 = vmatpush1.bf16.msra.mxu0 %v796
      %894 = vmatprep.subr.bf16.mxu0 %v799
      %895 = vmatpush1.bf16.msra.mxu0 %v798
      %896 = vmatprep.subr.bf16.mxu0 %v801
      %897 = vmatpush1.bf16.msra.mxu0 %v800
      %898 = vmatprep.subr.bf16.mxu0 %v803
      %899 = vmatpush1.bf16.msra.mxu0 %v802
      %900 = vmatprep.subr.bf16.mxu0 %v805
      %901 = vmatpush1.bf16.msra.mxu0 %v804
      %902 = vmatprep.subr.bf16.mxu0 %v807
      %903 = vmatpush1.bf16.msra.mxu0 %v806
      %904 = vmatprep.subr.bf16.mxu0 %v809
      %905 = vmatpush1.bf16.msra.mxu0 %v808
      %906 = vmatprep.subr.bf16.mxu0 %v811
      %907 = vmatpush1.bf16.msra.mxu0 %v810
      %908 = vmatprep.mubr.bf16.mxu0 %v613
      %909 = vmatmul.mubr.bf16.gmra.mrb[0].mxu0 %v612
      %v910 = vpop.f32.mrb[0].mxu0
      %v911 = vadd.f32 0.0, %v910
      %v912 = vpop.f32.mrb[0].mxu0
      %v913 = vadd.f32 0.0, %v912
      %v914 = vpop.f32.mrb[0].mxu0
      %v915 = vadd.f32 0.0, %v914
      %v916 = vpop.f32.mrb[0].mxu0
      %v917 = vadd.f32 0.0, %v916
      %918 = vmatprep.mubr.bf16.mxu0 %v616
      %919 = vmatmul.mubr.bf16.gmra.mrb[0].mxu0 %v615
      %v920 = vpop.f32.mrb[0].mxu0
      %v921 = vadd.f32 0.0, %v920
      %v922 = vpop.f32.mrb[0].mxu0
      %v923 = vadd.f32 0.0, %v922
      %v924 = vpop.f32.mrb[0].mxu0
      %v925 = vadd.f32 0.0, %v924
      %v926 = vpop.f32.mrb[0].mxu0
      %v927 = vadd.f32 0.0, %v926
      %928 = vmatprep.mubr.bf16.mxu0 %v619
      %929 = vmatmul.mubr.bf16.gmra.mrb[0].mxu0 %v618
      %v930 = vpop.f32.mrb[0].mxu0
      %v931 = vadd.f32 0.0, %v930
      %v932 = vpop.f32.mrb[0].mxu0
      %v933 = vadd.f32 0.0, %v932
      %v934 = vpop.f32.mrb[0].mxu0
      %v935 = vadd.f32 0.0, %v934
      %v936 = vpop.f32.mrb[0].mxu0
      %v937 = vadd.f32 0.0, %v936
      %938 = vmatprep.mubr.bf16.mxu0 %v622
      %939 = vmatmul.mubr.bf16.gmra.mrb[0].mxu0 %v621
      %v940 = vpop.f32.mrb[0].mxu0
      %v941 = vadd.f32 0.0, %v940
      %v942 = vpop.f32.mrb[0].mxu0
      %v943 = vadd.f32 0.0, %v942
      %v944 = vpop.f32.mrb[0].mxu0
      %v945 = vadd.f32 0.0, %v944
      %v946 = vpop.f32.mrb[0].mxu0
      %v947 = vadd.f32 0.0, %v946
      %948 = vdwg.mxu0
      %949 = vmatprep.subr.bf16.mxu0 %v813
      %950 = vmatpush1.bf16.msra.mxu0 %v812
      %951 = vmatprep.subr.bf16.mxu0 %v815
      %952 = vmatpush1.bf16.msra.mxu0 %v814
      %953 = vmatprep.subr.bf16.mxu0 %v817
      %954 = vmatpush1.bf16.msra.mxu0 %v816
      %955 = vmatprep.subr.bf16.mxu0 %v819
      %956 = vmatpush1.bf16.msra.mxu0 %v818
      %957 = vmatprep.subr.bf16.mxu0 %v821
      %958 = vmatpush1.bf16.msra.mxu0 %v820
      %959 = vmatprep.subr.bf16.mxu0 %v823
      %960 = vmatpush1.bf16.msra.mxu0 %v822
      %961 = vmatprep.subr.bf16.mxu0 %v825
      %962 = vmatpush1.bf16.msra.mxu0 %v824
      %963 = vmatprep.subr.bf16.mxu0 %v827
      %964 = vmatpush1.bf16.msra.mxu0 %v826
      %965 = vmatprep.subr.bf16.mxu0 0
      %966 = vmatpush1.bf16.msra.mxu0 0
      %967 = vmatprep.subr.bf16.mxu0 0
      %968 = vmatpush1.bf16.msra.mxu0 0
      %969 = vmatprep.subr.bf16.mxu0 0
      %970 = vmatpush1.bf16.msra.mxu0 0
      %971 = vmatprep.subr.bf16.mxu0 0
      %972 = vmatpush1.bf16.msra.mxu0 0
      %973 = vmatprep.subr.bf16.mxu0 0
      %974 = vmatpush1.bf16.msra.mxu0 0
      %975 = vmatprep.subr.bf16.mxu0 0
      %976 = vmatpush1.bf16.msra.mxu0 0
      %977 = vmatprep.subr.bf16.mxu0 0
      %978 = vmatpush1.bf16.msra.mxu0 0
      %979 = vmatprep.subr.bf16.mxu0 0
      %980 = vmatpush1.bf16.msra.mxu0 0
      %981 = vmatprep.mubr.bf16.mxu0 0
      %982 = vmatmul.mubr.bf16.gmra.mrb[0].mxu0 %v614
      %v983 = vpop.f32.mrb[0].mxu0
      %v984 = vadd.f32 %v911, %v983
      %v985 = vpop.f32.mrb[0].mxu0
      %v986 = vadd.f32 %v913, %v985
      %v987 = vpop.f32.mrb[0].mxu0
      %v988 = vadd.f32 %v915, %v987
      %v989 = vpop.f32.mrb[0].mxu0
      %v990 = vadd.f32 %v917, %v989
      %991 = vmatprep.mubr.bf16.mxu0 0
      %992 = vmatmul.mubr.bf16.gmra.mrb[0].mxu0 %v617
      %v993 = vpop.f32.mrb[0].mxu0
      %v994 = vadd.f32 %v921, %v993
      %v995 = vpop.f32.mrb[0].mxu0
      %v996 = vadd.f32 %v923, %v995
      %v997 = vpop.f32.mrb[0].mxu0
      %v998 = vadd.f32 %v925, %v997
      %v999 = vpop.f32.mrb[0].mxu0
      %v1000 = vadd.f32 %v927, %v999
      %1001 = vmatprep.mubr.bf16.mxu0 0
      %1002 = vmatmul.mubr.bf16.gmra.mrb[0].mxu0 %v620
      %v1003 = vpop.f32.mrb[0].mxu0
      %v1004 = vadd.f32 %v931, %v1003
      %v1005 = vpop.f32.mrb[0].mxu0
      %v1006 = vadd.f32 %v933, %v1005
      %v1007 = vpop.f32.mrb[0].mxu0
      %v1008 = vadd.f32 %v935, %v1007
      %v1009 = vpop.f32.mrb[0].mxu0
      %v1010 = vadd.f32 %v937, %v1009
      %1011 = vmatprep.mubr.bf16.mxu0 0
      %1012 = vmatmul.mubr.bf16.gmra.mrb[0].mxu0 %v623
      %v1013 = vpop.f32.mrb[0].mxu0
      %v1014 = vadd.f32 %v941, %v1013
      %v1015 = vpop.f32.mrb[0].mxu0
      %v1016 = vadd.f32 %v943, %v1015
      %v1017 = vpop.f32.mrb[0].mxu0
      %v1018 = vadd.f32 %v945, %v1017
      %v1019 = vpop.f32.mrb[0].mxu0
      %v1020 = vadd.f32 %v947, %v1019
      %1021 = vdwg.mxu0
      %v1022 = vpack.c.b16 %v293, %v291
      %v1023 = vpack.c.b16 %v381, %v379
      %v1024 = vpack.c.b16 %v382, %v380
      %v1025 = vpack.c.b16 %v297, %v295
      %v1026 = vpack.c.b16 %v385, %v383
      %v1027 = vpack.c.b16 %v386, %v384
      %v1028 = vpack.c.b16 %v301, %v299
      %v1029 = vpack.c.b16 %v389, %v387
      %v1030 = vpack.c.b16 %v390, %v388
      %v1031 = vpack.c.b16 %v305, %v303
      %v1032 = vpack.c.b16 %v393, %v391
      %v1033 = vpack.c.b16 %v394, %v392
      %v1094 = vunpack.c.l.b16 %v395
      %v1095 = vunpack.c.h.b16 %v395
      %v1096 = vunpack.c.l.b16 %v396
      %v1097 = vunpack.c.h.b16 %v396
      %v1098 = vunpack.c.l.b16 %v397
      %v1099 = vunpack.c.h.b16 %v397
      %v1100 = vunpack.c.l.b16 %v398
      %v1101 = vunpack.c.h.b16 %v398
      %v1102 = vunpack.c.l.b16 %v399
      %v1103 = vunpack.c.h.b16 %v399
      %v1104 = vunpack.c.l.b16 %v400
      %v1105 = vunpack.c.h.b16 %v400
      %v1106 = vunpack.c.l.b16 %v401
      %v1107 = vunpack.c.h.b16 %v401
      %v1108 = vunpack.c.l.b16 %v402
      %v1109 = vunpack.c.h.b16 %v402
      %v1110 = vunpack.c.l.b16 %v403
      %v1111 = vunpack.c.h.b16 %v403
      %v1112 = vunpack.c.l.b16 %v404
      %v1113 = vunpack.c.h.b16 %v404
      %v1114 = vunpack.c.l.b16 %v405
      %v1115 = vunpack.c.h.b16 %v405
      %v1116 = vunpack.c.l.b16 %v406
      %v1117 = vunpack.c.h.b16 %v406
      %v1118 = vunpack.c.l.b16 %v407
      %v1119 = vunpack.c.h.b16 %v407
      %v1120 = vunpack.c.l.b16 %v408
      %v1121 = vunpack.c.h.b16 %v408
      %v1122 = vunpack.c.l.b16 %v409
      %v1123 = vunpack.c.h.b16 %v409
      %v1124 = vunpack.c.l.b16 %v410
      %v1125 = vunpack.c.h.b16 %v410
      %v1126 = vunpack.c.l.b16 %v411
      %v1127 = vunpack.c.h.b16 %v411
      %v1128 = vunpack.c.l.b16 %v412
      %v1129 = vunpack.c.h.b16 %v412
      %v1130 = vunpack.c.l.b16 %v413
      %v1131 = vunpack.c.h.b16 %v413
      %v1132 = vunpack.c.l.b16 %v414
      %v1133 = vunpack.c.h.b16 %v414
      %v1134 = vunpack.c.l.b16 %v415
      %v1135 = vunpack.c.h.b16 %v415
      %v1136 = vunpack.c.l.b16 %v416
      %v1137 = vunpack.c.h.b16 %v416
      %v1138 = vunpack.c.l.b16 %v417
      %v1139 = vunpack.c.h.b16 %v417
      %v1140 = vunpack.c.l.b16 %v418
      %v1141 = vunpack.c.h.b16 %v418
      %v1142 = vunpack.c.l.b16 %v419
      %v1143 = vunpack.c.h.b16 %v419
      %v1144 = vunpack.c.l.b16 %v420
      %v1145 = vunpack.c.h.b16 %v420
      %v1146 = vunpack.c.l.b16 %v421
      %v1147 = vunpack.c.h.b16 %v421
      %v1148 = vunpack.c.l.b16 %v422
      %v1149 = vunpack.c.h.b16 %v422
      %v1150 = vunpack.c.l.b16 %v423
      %v1151 = vunpack.c.h.b16 %v423
      %v1152 = vunpack.c.l.b16 %v424
      %v1153 = vunpack.c.h.b16 %v424
      %v1154 = vunpack.c.l.b16 %v425
      %v1155 = vunpack.c.h.b16 %v425
      %v1156 = vunpack.c.l.b16 %v426
      %v1157 = vunpack.c.h.b16 %v426
      %v1158 = vunpack.c.l.b16 %v427
      %v1159 = vunpack.c.h.b16 %v427
      %v1160 = vunpack.c.l.b16 %v428
      %v1161 = vunpack.c.h.b16 %v428
      %v1162 = vunpack.c.l.b16 %v429
      %v1163 = vunpack.c.h.b16 %v429
      %v1164 = vunpack.c.l.b16 %v430
      %v1165 = vunpack.c.h.b16 %v430
      %v1166 = vunpack.c.l.b16 %v431
      %v1167 = vunpack.c.h.b16 %v431
      %v1168 = vunpack.c.l.b16 %v432
      %v1169 = vunpack.c.h.b16 %v432
      %v1170 = vunpack.c.l.b16 %v433
      %v1171 = vunpack.c.h.b16 %v433
      %v1172 = vunpack.c.l.b16 %v434
      %v1173 = vunpack.c.h.b16 %v434
      %v1174 = vunpack.c.l.b16 %v435
      %v1175 = vunpack.c.h.b16 %v435
      %v1176 = vunpack.c.l.b16 %v436
      %v1177 = vunpack.c.h.b16 %v436
      %v1178 = vunpack.c.l.b16 %v437
      %v1179 = vunpack.c.h.b16 %v437
      %v1180 = vunpack.c.l.b16 %v438
      %v1181 = vunpack.c.h.b16 %v438
      %v1182 = vunpack.c.l.b16 %v439
      %v1183 = vunpack.c.h.b16 %v439
      %v1184 = vunpack.c.l.b16 %v440
      %v1185 = vunpack.c.h.b16 %v440
      %v1186 = vunpack.c.l.b16 %v441
      %v1187 = vunpack.c.h.b16 %v441
      %v1188 = vunpack.c.l.b16 %v442
      %v1189 = vunpack.c.h.b16 %v442
      %v1190 = vpack.c.b16 %v1096, %v1094
      %v1191 = vpack.c.b16 %v1097, %v1095
      %v1192 = vpack.c.b16 %v1100, %v1098
      %v1193 = vpack.c.b16 %v1101, %v1099
      %v1194 = vpack.c.b16 %v1104, %v1102
      %v1195 = vpack.c.b16 %v1105, %v1103
      %v1196 = vpack.c.b16 %v1108, %v1106
      %v1197 = vpack.c.b16 %v1109, %v1107
      %v1198 = vpack.c.b16 %v1112, %v1110
      %v1199 = vpack.c.b16 %v1113, %v1111
      %v1200 = vpack.c.b16 %v1116, %v1114
      %v1201 = vpack.c.b16 %v1117, %v1115
      %v1202 = vpack.c.b16 %v1120, %v1118
      %v1203 = vpack.c.b16 %v1121, %v1119
      %v1204 = vpack.c.b16 %v1124, %v1122
      %v1205 = vpack.c.b16 %v1125, %v1123
      %v1206 = vpack.c.b16 %v1128, %v1126
      %v1207 = vpack.c.b16 %v1129, %v1127
      %v1208 = vpack.c.b16 %v1132, %v1130
      %v1209 = vpack.c.b16 %v1133, %v1131
      %v1210 = vpack.c.b16 %v1136, %v1134
      %v1211 = vpack.c.b16 %v1137, %v1135
      %v1212 = vpack.c.b16 %v1140, %v1138
      %v1213 = vpack.c.b16 %v1141, %v1139
      %v1214 = vpack.c.b16 %v1144, %v1142
      %v1215 = vpack.c.b16 %v1145, %v1143
      %v1216 = vpack.c.b16 %v1148, %v1146
      %v1217 = vpack.c.b16 %v1149, %v1147
      %v1218 = vpack.c.b16 %v1152, %v1150
      %v1219 = vpack.c.b16 %v1153, %v1151
      %v1220 = vpack.c.b16 %v1156, %v1154
      %v1221 = vpack.c.b16 %v1157, %v1155
      %v1222 = vpack.c.b16 %v1160, %v1158
      %v1223 = vpack.c.b16 %v1161, %v1159
      %v1224 = vpack.c.b16 %v1164, %v1162
      %v1225 = vpack.c.b16 %v1165, %v1163
      %v1226 = vpack.c.b16 %v1168, %v1166
      %v1227 = vpack.c.b16 %v1169, %v1167
      %v1228 = vpack.c.b16 %v1172, %v1170
      %v1229 = vpack.c.b16 %v1173, %v1171
      %v1230 = vpack.c.b16 %v1176, %v1174
      %v1231 = vpack.c.b16 %v1177, %v1175
      %v1232 = vpack.c.b16 %v1180, %v1178
      %v1233 = vpack.c.b16 %v1181, %v1179
      %v1234 = vpack.c.b16 %v1184, %v1182
      %v1235 = vpack.c.b16 %v1185, %v1183
      %v1236 = vpack.c.b16 %v1188, %v1186
      %v1237 = vpack.c.b16 %v1189, %v1187
      %1286 = vmatprep.subr.bf16.mxu0 %v1191
      %1287 = vmatpush1.bf16.msra.mxu0 %v1190
      %1288 = vmatprep.subr.bf16.mxu0 %v1193
      %1289 = vmatpush1.bf16.msra.mxu0 %v1192
      %1290 = vmatprep.subr.bf16.mxu0 %v1195
      %1291 = vmatpush1.bf16.msra.mxu0 %v1194
      %1292 = vmatprep.subr.bf16.mxu0 %v1197
      %1293 = vmatpush1.bf16.msra.mxu0 %v1196
      %1294 = vmatprep.subr.bf16.mxu0 %v1199
      %1295 = vmatpush1.bf16.msra.mxu0 %v1198
      %1296 = vmatprep.subr.bf16.mxu0 %v1201
      %1297 = vmatpush1.bf16.msra.mxu0 %v1200
      %1298 = vmatprep.subr.bf16.mxu0 %v1203
      %1299 = vmatpush1.bf16.msra.mxu0 %v1202
      %1300 = vmatprep.subr.bf16.mxu0 %v1205
      %1301 = vmatpush1.bf16.msra.mxu0 %v1204
      %1302 = vmatprep.subr.bf16.mxu0 %v1207
      %1303 = vmatpush1.bf16.msra.mxu0 %v1206
      %1304 = vmatprep.subr.bf16.mxu0 %v1209
      %1305 = vmatpush1.bf16.msra.mxu0 %v1208
      %1306 = vmatprep.subr.bf16.mxu0 %v1211
      %1307 = vmatpush1.bf16.msra.mxu0 %v1210
      %1308 = vmatprep.subr.bf16.mxu0 %v1213
      %1309 = vmatpush1.bf16.msra.mxu0 %v1212
      %1310 = vmatprep.subr.bf16.mxu0 %v1215
      %1311 = vmatpush1.bf16.msra.mxu0 %v1214
      %1312 = vmatprep.subr.bf16.mxu0 %v1217
      %1313 = vmatpush1.bf16.msra.mxu0 %v1216
      %1314 = vmatprep.subr.bf16.mxu0 %v1219
      %1315 = vmatpush1.bf16.msra.mxu0 %v1218
      %1316 = vmatprep.subr.bf16.mxu0 %v1221
      %1317 = vmatpush1.bf16.msra.mxu0 %v1220
      %1318 = vmatprep.mubr.bf16.mxu0 %v1023
      %1319 = vmatmul.mubr.bf16.gmra.mrb[0].mxu0 %v1022
      %v1320 = vpop.f32.mrb[0].mxu0
      %v1321 = vadd.f32 %v984, %v1320
      %v1322 = vpop.f32.mrb[0].mxu0
      %v1323 = vadd.f32 %v986, %v1322
      %v1324 = vpop.f32.mrb[0].mxu0
      %v1325 = vadd.f32 %v988, %v1324
      %v1326 = vpop.f32.mrb[0].mxu0
      %v1327 = vadd.f32 %v990, %v1326
      %1328 = vmatprep.mubr.bf16.mxu0 %v1026
      %1329 = vmatmul.mubr.bf16.gmra.mrb[0].mxu0 %v1025
      %v1330 = vpop.f32.mrb[0].mxu0
      %v1331 = vadd.f32 %v994, %v1330
      %v1332 = vpop.f32.mrb[0].mxu0
      %v1333 = vadd.f32 %v996, %v1332
      %v1334 = vpop.f32.mrb[0].mxu0
      %v1335 = vadd.f32 %v998, %v1334
      %v1336 = vpop.f32.mrb[0].mxu0
      %v1337 = vadd.f32 %v1000, %v1336
      %1338 = vmatprep.mubr.bf16.mxu0 %v1029
      %1339 = vmatmul.mubr.bf16.gmra.mrb[0].mxu0 %v1028
      %v1340 = vpop.f32.mrb[0].mxu0
      %v1341 = vadd.f32 %v1004, %v1340
      %v1342 = vpop.f32.mrb[0].mxu0
      %v1343 = vadd.f32 %v1006, %v1342
      %v1344 = vpop.f32.mrb[0].mxu0
      %v1345 = vadd.f32 %v1008, %v1344
      %v1346 = vpop.f32.mrb[0].mxu0
      %v1347 = vadd.f32 %v1010, %v1346
      %1348 = vmatprep.mubr.bf16.mxu0 %v1032
      %1349 = vmatmul.mubr.bf16.gmra.mrb[0].mxu0 %v1031
      %v1350 = vpop.f32.mrb[0].mxu0
      %v1351 = vadd.f32 %v1014, %v1350
      %v1352 = vpop.f32.mrb[0].mxu0
      %v1353 = vadd.f32 %v1016, %v1352
      %v1354 = vpop.f32.mrb[0].mxu0
      %v1355 = vadd.f32 %v1018, %v1354
      %v1356 = vpop.f32.mrb[0].mxu0
      %v1357 = vadd.f32 %v1020, %v1356
      %1358 = vdwg.mxu0
      %1359 = vmatprep.subr.bf16.mxu0 %v1223
      %1360 = vmatpush1.bf16.msra.mxu0 %v1222
      %1361 = vmatprep.subr.bf16.mxu0 %v1225
      %1362 = vmatpush1.bf16.msra.mxu0 %v1224
      %1363 = vmatprep.subr.bf16.mxu0 %v1227
      %1364 = vmatpush1.bf16.msra.mxu0 %v1226
      %1365 = vmatprep.subr.bf16.mxu0 %v1229
      %1366 = vmatpush1.bf16.msra.mxu0 %v1228
      %1367 = vmatprep.subr.bf16.mxu0 %v1231
      %1368 = vmatpush1.bf16.msra.mxu0 %v1230
      %1369 = vmatprep.subr.bf16.mxu0 %v1233
      %1370 = vmatpush1.bf16.msra.mxu0 %v1232
      %1371 = vmatprep.subr.bf16.mxu0 %v1235
      %1372 = vmatpush1.bf16.msra.mxu0 %v1234
      %1373 = vmatprep.subr.bf16.mxu0 %v1237
      %1374 = vmatpush1.bf16.msra.mxu0 %v1236
      %1375 = vmatprep.subr.bf16.mxu0 0
      %1376 = vmatpush1.bf16.msra.mxu0 0
      %1377 = vmatprep.subr.bf16.mxu0 0
      %1378 = vmatpush1.bf16.msra.mxu0 0
      %1379 = vmatprep.subr.bf16.mxu0 0
      %1380 = vmatpush1.bf16.msra.mxu0 0
      %1381 = vmatprep.subr.bf16.mxu0 0
      %1382 = vmatpush1.bf16.msra.mxu0 0
      %1383 = vmatprep.subr.bf16.mxu0 0
      %1384 = vmatpush1.bf16.msra.mxu0 0
      %1385 = vmatprep.subr.bf16.mxu0 0
      %1386 = vmatpush1.bf16.msra.mxu0 0
      %1387 = vmatprep.subr.bf16.mxu0 0
      %1388 = vmatpush1.bf16.msra.mxu0 0
      %1389 = vmatprep.subr.bf16.mxu0 0
      %1390 = vmatpush1.bf16.msra.mxu0 0
      %1391 = vmatprep.mubr.bf16.mxu0 0
      %1392 = vmatmul.mubr.bf16.gmra.mrb[0].mxu0 %v1024
      %v1393 = vpop.f32.mrb[0].mxu0
      %v1394 = vadd.f32 %v1321, %v1393
      %v1395 = vpop.f32.mrb[0].mxu0
      %v1396 = vadd.f32 %v1323, %v1395
      %v1397 = vpop.f32.mrb[0].mxu0
      %v1398 = vadd.f32 %v1325, %v1397
      %v1399 = vpop.f32.mrb[0].mxu0
      %v1400 = vadd.f32 %v1327, %v1399
      %1401 = vmatprep.mubr.bf16.mxu0 0
      %1402 = vmatmul.mubr.bf16.gmra.mrb[0].mxu0 %v1027
      %v1403 = vpop.f32.mrb[0].mxu0
      %v1404 = vadd.f32 %v1331, %v1403
      %v1405 = vpop.f32.mrb[0].mxu0
      %v1406 = vadd.f32 %v1333, %v1405
      %v1407 = vpop.f32.mrb[0].mxu0
      %v1408 = vadd.f32 %v1335, %v1407
      %v1409 = vpop.f32.mrb[0].mxu0
      %v1410 = vadd.f32 %v1337, %v1409
      %1411 = vmatprep.mubr.bf16.mxu0 0
      %1412 = vmatmul.mubr.bf16.gmra.mrb[0].mxu0 %v1030
      %v1413 = vpop.f32.mrb[0].mxu0
      %v1414 = vadd.f32 %v1341, %v1413
      %v1415 = vpop.f32.mrb[0].mxu0
      %v1416 = vadd.f32 %v1343, %v1415
      %v1417 = vpop.f32.mrb[0].mxu0
      %v1418 = vadd.f32 %v1345, %v1417
      %v1419 = vpop.f32.mrb[0].mxu0
      %v1420 = vadd.f32 %v1347, %v1419
      %1421 = vmatprep.mubr.bf16.mxu0 0
      %1422 = vmatmul.mubr.bf16.gmra.mrb[0].mxu0 %v1033
      %v1423 = vpop.f32.mrb[0].mxu0
      %v1424 = vadd.f32 %v1351, %v1423
      %v1425 = vpop.f32.mrb[0].mxu0
      %v1426 = vadd.f32 %v1353, %v1425
      %v1427 = vpop.f32.mrb[0].mxu0
      %v1428 = vadd.f32 %v1355, %v1427
      %v1429 = vpop.f32.mrb[0].mxu0
      %v1430 = vadd.f32 %v1357, %v1429
      %1431 = vdwg.mxu0
      %v1434 = vunpack.c.l.b16 %v240
      %v1435 = vunpack.c.l.b16 %v241
      %v1436 = vpack.c.b16 %v1435, %v1434
      %v1438 = vshrl.u32 %v1436, 16
      %v1440 = vshll.u32 %v1436, 16
      %v1442 = vrot.slane %v1440, 1
      %v1443 = vor.u32 %v1438, %v1442
      %v1445 = vunpack.c.l.b16 %v250
      %v1446 = vunpack.c.l.b16 %v1443
      %s1447 = scalar_lea.vmem %s1, 768
      %v1448 = vld [vmem:[%s1447] sm:$0xff]
      %v1449 = vld [vmem:[%s1447 + $0x8] sm:$0xff]
      %v1450 = vld [vmem:[%s1447 + $0x10] sm:$0xff]
      %v1451 = vld [vmem:[%s1447 + $0x18] sm:$0xff]
      %v1452 = vld [vmem:[%s1447 + $0x20] sm:$0xff]
      %v1453 = vld [vmem:[%s1447 + $0x28] sm:$0xff]
      %v1454 = vld [vmem:[%s1447 + $0x30] sm:$0xff]
      %v1455 = vld [vmem:[%s1447 + $0x38] sm:$0xff]
      %v1456 = vld [vmem:[%s1447 + $0x40] sm:$0xff]
      %v1457 = vld [vmem:[%s1447 + $0x48] sm:$0xff]
      %v1458 = vld [vmem:[%s1447 + $0x50] sm:$0xff]
      %v1459 = vld [vmem:[%s1447 + $0x58] sm:$0xff]
      %v1460 = vld [vmem:[%s1447 + $0x60] sm:$0xff]
      %v1461 = vld [vmem:[%s1447 + $0x68] sm:$0xff]
      %v1462 = vld [vmem:[%s1447 + $0x70] sm:$0xff]
      %v1463 = vld [vmem:[%s1447 + $0x78] sm:$0xff]
      %v1464 = vld [vmem:[%s1447 + $0x80] sm:$0xff]
      %v1465 = vld [vmem:[%s1447 + $0x88] sm:$0xff]
      %v1466 = vld [vmem:[%s1447 + $0x90] sm:$0xff]
      %v1467 = vld [vmem:[%s1447 + $0x98] sm:$0xff]
      %v1468 = vld [vmem:[%s1447 + $0xa0] sm:$0xff]
      %v1469 = vld [vmem:[%s1447 + $0xa8] sm:$0xff]
      %v1470 = vld [vmem:[%s1447 + $0xb0] sm:$0xff]
      %v1471 = vld [vmem:[%s1447 + $0xb8] sm:$0xff]
      %v1472 = vld [vmem:[%s1447 + $0xc0] sm:$0xff]
      %v1473 = vld [vmem:[%s1447 + $0xc8] sm:$0xff]
      %v1474 = vld [vmem:[%s1447 + $0xd0] sm:$0xff]
      %v1475 = vld [vmem:[%s1447 + $0xd8] sm:$0xff]
      %v1476 = vld [vmem:[%s1447 + $0xe0] sm:$0xff]
      %v1477 = vld [vmem:[%s1447 + $0xe8] sm:$0xff]
      %v1478 = vld [vmem:[%s1447 + $0xf0] sm:$0xff]
      %v1479 = vld [vmem:[%s1447 + $0xf8] sm:$0xff]
      %v1480 = vld [vmem:[%s1447 + $0x100] sm:$0xff]
      %v1481 = vld [vmem:[%s1447 + $0x108] sm:$0xff]
      %v1482 = vld [vmem:[%s1447 + $0x110] sm:$0xff]
      %v1483 = vld [vmem:[%s1447 + $0x118] sm:$0xff]
      %v1484 = vld [vmem:[%s1447 + $0x120] sm:$0xff]
      %v1485 = vld [vmem:[%s1447 + $0x128] sm:$0xff]
      %v1486 = vld [vmem:[%s1447 + $0x130] sm:$0xff]
      %v1487 = vld [vmem:[%s1447 + $0x138] sm:$0xff]
      %v1488 = vld [vmem:[%s1447 + $0x140] sm:$0xff]
      %v1489 = vld [vmem:[%s1447 + $0x148] sm:$0xff]
      %v1490 = vld [vmem:[%s1447 + $0x150] sm:$0xff]
      %v1491 = vld [vmem:[%s1447 + $0x158] sm:$0xff]
      %v1492 = vld [vmem:[%s1447 + $0x160] sm:$0xff]
      %v1493 = vld [vmem:[%s1447 + $0x168] sm:$0xff]
      %v1494 = vld [vmem:[%s1447 + $0x170] sm:$0xff]
      %v1495 = vld [vmem:[%s1447 + $0x178] sm:$0xff]
      %v1496 = vpack.c.b16 %v295, %v293
      %v1497 = vpack.c.b16 %v383, %v381
      %v1498 = vpack.c.b16 %v384, %v382
      %v1499 = vpack.c.b16 %v299, %v297
      %v1500 = vpack.c.b16 %v387, %v385
      %v1501 = vpack.c.b16 %v388, %v386
      %v1502 = vpack.c.b16 %v303, %v301
      %v1503 = vpack.c.b16 %v391, %v389
      %v1504 = vpack.c.b16 %v392, %v390
      %v1505 = vpack.c.b16 %v1434, %v305
      %v1506 = vpack.c.b16 %v1445, %v393
      %v1507 = vpack.c.b16 %v1446, %v394
      %v1568 = vunpack.c.l.b16 %v1448
      %v1569 = vunpack.c.h.b16 %v1448
      %v1570 = vunpack.c.l.b16 %v1449
      %v1571 = vunpack.c.h.b16 %v1449
      %v1572 = vunpack.c.l.b16 %v1450
      %v1573 = vunpack.c.h.b16 %v1450
      %v1574 = vunpack.c.l.b16 %v1451
      %v1575 = vunpack.c.h.b16 %v1451
      %v1576 = vunpack.c.l.b16 %v1452
      %v1577 = vunpack.c.h.b16 %v1452
      %v1578 = vunpack.c.l.b16 %v1453
      %v1579 = vunpack.c.h.b16 %v1453
      %v1580 = vunpack.c.l.b16 %v1454
      %v1581 = vunpack.c.h.b16 %v1454
      %v1582 = vunpack.c.l.b16 %v1455
      %v1583 = vunpack.c.h.b16 %v1455
      %v1584 = vunpack.c.l.b16 %v1456
      %v1585 = vunpack.c.h.b16 %v1456
      %v1586 = vunpack.c.l.b16 %v1457
      %v1587 = vunpack.c.h.b16 %v1457
      %v1588 = vunpack.c.l.b16 %v1458
      %v1589 = vunpack.c.h.b16 %v1458
      %v1590 = vunpack.c.l.b16 %v1459
      %v1591 = vunpack.c.h.b16 %v1459
      %v1592 = vunpack.c.l.b16 %v1460
      %v1593 = vunpack.c.h.b16 %v1460
      %v1594 = vunpack.c.l.b16 %v1461
      %v1595 = vunpack.c.h.b16 %v1461
      %v1596 = vunpack.c.l.b16 %v1462
      %v1597 = vunpack.c.h.b16 %v1462
      %v1598 = vunpack.c.l.b16 %v1463
      %v1599 = vunpack.c.h.b16 %v1463
      %v1600 = vunpack.c.l.b16 %v1464
      %v1601 = vunpack.c.h.b16 %v1464
      %v1602 = vunpack.c.l.b16 %v1465
      %v1603 = vunpack.c.h.b16 %v1465
      %v1604 = vunpack.c.l.b16 %v1466
      %v1605 = vunpack.c.h.b16 %v1466
      %v1606 = vunpack.c.l.b16 %v1467
      %v1607 = vunpack.c.h.b16 %v1467
      %v1608 = vunpack.c.l.b16 %v1468
      %v1609 = vunpack.c.h.b16 %v1468
      %v1610 = vunpack.c.l.b16 %v1469
      %v1611 = vunpack.c.h.b16 %v1469
      %v1612 = vunpack.c.l.b16 %v1470
      %v1613 = vunpack.c.h.b16 %v1470
      %v1614 = vunpack.c.l.b16 %v1471
      %v1615 = vunpack.c.h.b16 %v1471
      %v1616 = vunpack.c.l.b16 %v1472
      %v1617 = vunpack.c.h.b16 %v1472
      %v1618 = vunpack.c.l.b16 %v1473
      %v1619 = vunpack.c.h.b16 %v1473
      %v1620 = vunpack.c.l.b16 %v1474
      %v1621 = vunpack.c.h.b16 %v1474
      %v1622 = vunpack.c.l.b16 %v1475
      %v1623 = vunpack.c.h.b16 %v1475
      %v1624 = vunpack.c.l.b16 %v1476
      %v1625 = vunpack.c.h.b16 %v1476
      %v1626 = vunpack.c.l.b16 %v1477
      %v1627 = vunpack.c.h.b16 %v1477
      %v1628 = vunpack.c.l.b16 %v1478
      %v1629 = vunpack.c.h.b16 %v1478
      %v1630 = vunpack.c.l.b16 %v1479
      %v1631 = vunpack.c.h.b16 %v1479
      %v1632 = vunpack.c.l.b16 %v1480
      %v1633 = vunpack.c.h.b16 %v1480
      %v1634 = vunpack.c.l.b16 %v1481
      %v1635 = vunpack.c.h.b16 %v1481
      %v1636 = vunpack.c.l.b16 %v1482
      %v1637 = vunpack.c.h.b16 %v1482
      %v1638 = vunpack.c.l.b16 %v1483
      %v1639 = vunpack.c.h.b16 %v1483
      %v1640 = vunpack.c.l.b16 %v1484
      %v1641 = vunpack.c.h.b16 %v1484
      %v1642 = vunpack.c.l.b16 %v1485
      %v1643 = vunpack.c.h.b16 %v1485
      %v1644 = vunpack.c.l.b16 %v1486
      %v1645 = vunpack.c.h.b16 %v1486
      %v1646 = vunpack.c.l.b16 %v1487
      %v1647 = vunpack.c.h.b16 %v1487
      %v1648 = vunpack.c.l.b16 %v1488
      %v1649 = vunpack.c.h.b16 %v1488
      %v1650 = vunpack.c.l.b16 %v1489
      %v1651 = vunpack.c.h.b16 %v1489
      %v1652 = vunpack.c.l.b16 %v1490
      %v1653 = vunpack.c.h.b16 %v1490
      %v1654 = vunpack.c.l.b16 %v1491
      %v1655 = vunpack.c.h.b16 %v1491
      %v1656 = vunpack.c.l.b16 %v1492
      %v1657 = vunpack.c.h.b16 %v1492
      %v1658 = vunpack.c.l.b16 %v1493
      %v1659 = vunpack.c.h.b16 %v1493
      %v1660 = vunpack.c.l.b16 %v1494
      %v1661 = vunpack.c.h.b16 %v1494
      %v1662 = vunpack.c.l.b16 %v1495
      %v1663 = vunpack.c.h.b16 %v1495
      %v1664 = vpack.c.b16 %v1570, %v1568
      %v1665 = vpack.c.b16 %v1571, %v1569
      %v1666 = vpack.c.b16 %v1574, %v1572
      %v1667 = vpack.c.b16 %v1575, %v1573
      %v1668 = vpack.c.b16 %v1578, %v1576
      %v1669 = vpack.c.b16 %v1579, %v1577
      %v1670 = vpack.c.b16 %v1582, %v1580
      %v1671 = vpack.c.b16 %v1583, %v1581
      %v1672 = vpack.c.b16 %v1586, %v1584
      %v1673 = vpack.c.b16 %v1587, %v1585
      %v1674 = vpack.c.b16 %v1590, %v1588
      %v1675 = vpack.c.b16 %v1591, %v1589
      %v1676 = vpack.c.b16 %v1594, %v1592
      %v1677 = vpack.c.b16 %v1595, %v1593
      %v1678 = vpack.c.b16 %v1598, %v1596
      %v1679 = vpack.c.b16 %v1599, %v1597
      %v1680 = vpack.c.b16 %v1602, %v1600
      %v1681 = vpack.c.b16 %v1603, %v1601
      %v1682 = vpack.c.b16 %v1606, %v1604
      %v1683 = vpack.c.b16 %v1607, %v1605
      %v1684 = vpack.c.b16 %v1610, %v1608
      %v1685 = vpack.c.b16 %v1611, %v1609
      %v1686 = vpack.c.b16 %v1614, %v1612
      %v1687 = vpack.c.b16 %v1615, %v1613
      %v1688 = vpack.c.b16 %v1618, %v1616
      %v1689 = vpack.c.b16 %v1619, %v1617
      %v1690 = vpack.c.b16 %v1622, %v1620
      %v1691 = vpack.c.b16 %v1623, %v1621
      %v1692 = vpack.c.b16 %v1626, %v1624
      %v1693 = vpack.c.b16 %v1627, %v1625
      %v1694 = vpack.c.b16 %v1630, %v1628
      %v1695 = vpack.c.b16 %v1631, %v1629
      %v1696 = vpack.c.b16 %v1634, %v1632
      %v1697 = vpack.c.b16 %v1635, %v1633
      %v1698 = vpack.c.b16 %v1638, %v1636
      %v1699 = vpack.c.b16 %v1639, %v1637
      %v1700 = vpack.c.b16 %v1642, %v1640
      %v1701 = vpack.c.b16 %v1643, %v1641
      %v1702 = vpack.c.b16 %v1646, %v1644
      %v1703 = vpack.c.b16 %v1647, %v1645
      %v1704 = vpack.c.b16 %v1650, %v1648
      %v1705 = vpack.c.b16 %v1651, %v1649
      %v1706 = vpack.c.b16 %v1654, %v1652
      %v1707 = vpack.c.b16 %v1655, %v1653
      %v1708 = vpack.c.b16 %v1658, %v1656
      %v1709 = vpack.c.b16 %v1659, %v1657
      %v1710 = vpack.c.b16 %v1662, %v1660
      %v1711 = vpack.c.b16 %v1663, %v1661
      %1760 = vmatprep.subr.bf16.mxu0 %v1665
      %1761 = vmatpush1.bf16.msra.mxu0 %v1664
      %1762 = vmatprep.subr.bf16.mxu0 %v1667
      %1763 = vmatpush1.bf16.msra.mxu0 %v1666
      %1764 = vmatprep.subr.bf16.mxu0 %v1669
      %1765 = vmatpush1.bf16.msra.mxu0 %v1668
      %1766 = vmatprep.subr.bf16.mxu0 %v1671
      %1767 = vmatpush1.bf16.msra.mxu0 %v1670
      %1768 = vmatprep.subr.bf16.mxu0 %v1673
      %1769 = vmatpush1.bf16.msra.mxu0 %v1672
      %1770 = vmatprep.subr.bf16.mxu0 %v1675
      %1771 = vmatpush1.bf16.msra.mxu0 %v1674
      %1772 = vmatprep.subr.bf16.mxu0 %v1677
      %1773 = vmatpush1.bf16.msra.mxu0 %v1676
      %1774 = vmatprep.subr.bf16.mxu0 %v1679
      %1775 = vmatpush1.bf16.msra.mxu0 %v1678
      %1776 = vmatprep.subr.bf16.mxu0 %v1681
      %1777 = vmatpush1.bf16.msra.mxu0 %v1680
      %1778 = vmatprep.subr.bf16.mxu0 %v1683
      %1779 = vmatpush1.bf16.msra.mxu0 %v1682
      %1780 = vmatprep.subr.bf16.mxu0 %v1685
      %1781 = vmatpush1.bf16.msra.mxu0 %v1684
      %1782 = vmatprep.subr.bf16.mxu0 %v1687
      %1783 = vmatpush1.bf16.msra.mxu0 %v1686
      %1784 = vmatprep.subr.bf16.mxu0 %v1689
      %1785 = vmatpush1.bf16.msra.mxu0 %v1688
      %1786 = vmatprep.subr.bf16.mxu0 %v1691
      %1787 = vmatpush1.bf16.msra.mxu0 %v1690
      %1788 = vmatprep.subr.bf16.mxu0 %v1693
      %1789 = vmatpush1.bf16.msra.mxu0 %v1692
      %1790 = vmatprep.subr.bf16.mxu0 %v1695
      %1791 = vmatpush1.bf16.msra.mxu0 %v1694
      %1792 = vmatprep.mubr.bf16.mxu0 %v1497
      %1793 = vmatmul.mubr.bf16.gmra.mrb[0].mxu0 %v1496
      %v1794 = vpop.f32.mrb[0].mxu0
      %v1795 = vadd.f32 0.0, %v1794
      %v1796 = vpop.f32.mrb[0].mxu0
      %v1797 = vadd.f32 0.0, %v1796
      %v1798 = vpop.f32.mrb[0].mxu0
      %v1799 = vadd.f32 0.0, %v1798
      %v1800 = vpop.f32.mrb[0].mxu0
      %v1801 = vadd.f32 0.0, %v1800
      %1802 = vmatprep.mubr.bf16.mxu0 %v1500
      %1803 = vmatmul.mubr.bf16.gmra.mrb[0].mxu0 %v1499
      %v1804 = vpop.f32.mrb[0].mxu0
      %v1805 = vadd.f32 0.0, %v1804
      %v1806 = vpop.f32.mrb[0].mxu0
      %v1807 = vadd.f32 0.0, %v1806
      %v1808 = vpop.f32.mrb[0].mxu0
      %v1809 = vadd.f32 0.0, %v1808
      %v1810 = vpop.f32.mrb[0].mxu0
      %v1811 = vadd.f32 0.0, %v1810
      %1812 = vmatprep.mubr.bf16.mxu0 %v1503
      %1813 = vmatmul.mubr.bf16.gmra.mrb[0].mxu0 %v1502
      %v1814 = vpop.f32.mrb[0].mxu0
      %v1815 = vadd.f32 0.0, %v1814
      %v1816 = vpop.f32.mrb[0].mxu0
      %v1817 = vadd.f32 0.0, %v1816
      %v1818 = vpop.f32.mrb[0].mxu0
      %v1819 = vadd.f32 0.0, %v1818
      %v1820 = vpop.f32.mrb[0].mxu0
      %v1821 = vadd.f32 0.0, %v1820
      %1822 = vmatprep.mubr.bf16.mxu0 %v1506
      %1823 = vmatmul.mubr.bf16.gmra.mrb[0].mxu0 %v1505
      %v1824 = vpop.f32.mrb[0].mxu0
      %v1825 = vadd.f32 0.0, %v1824
      %v1826 = vpop.f32.mrb[0].mxu0
      %v1827 = vadd.f32 0.0, %v1826
      %v1828 = vpop.f32.mrb[0].mxu0
      %v1829 = vadd.f32 0.0, %v1828
      %v1830 = vpop.f32.mrb[0].mxu0
      %v1831 = vadd.f32 0.0, %v1830
      %1832 = vdwg.mxu0
      %1833 = vmatprep.subr.bf16.mxu0 %v1697
      %1834 = vmatpush1.bf16.msra.mxu0 %v1696
      %1835 = vmatprep.subr.bf16.mxu0 %v1699
      %1836 = vmatpush1.bf16.msra.mxu0 %v1698
      %1837 = vmatprep.subr.bf16.mxu0 %v1701
      %1838 = vmatpush1.bf16.msra.mxu0 %v1700
      %1839 = vmatprep.subr.bf16.mxu0 %v1703
      %1840 = vmatpush1.bf16.msra.mxu0 %v1702
      %1841 = vmatprep.subr.bf16.mxu0 %v1705
      %1842 = vmatpush1.bf16.msra.mxu0 %v1704
      %1843 = vmatprep.subr.bf16.mxu0 %v1707
      %1844 = vmatpush1.bf16.msra.mxu0 %v1706
      %1845 = vmatprep.subr.bf16.mxu0 %v1709
      %1846 = vmatpush1.bf16.msra.mxu0 %v1708
      %1847 = vmatprep.subr.bf16.mxu0 %v1711
      %1848 = vmatpush1.bf16.msra.mxu0 %v1710
      %1849 = vmatprep.subr.bf16.mxu0 0
      %1850 = vmatpush1.bf16.msra.mxu0 0
      %1851 = vmatprep.subr.bf16.mxu0 0
      %1852 = vmatpush1.bf16.msra.mxu0 0
      %1853 = vmatprep.subr.bf16.mxu0 0
      %1854 = vmatpush1.bf16.msra.mxu0 0
      %1855 = vmatprep.subr.bf16.mxu0 0
      %1856 = vmatpush1.bf16.msra.mxu0 0
      %1857 = vmatprep.subr.bf16.mxu0 0
      %1858 = vmatpush1.bf16.msra.mxu0 0
      %1859 = vmatprep.subr.bf16.mxu0 0
      %1860 = vmatpush1.bf16.msra.mxu0 0
      %1861 = vmatprep.subr.bf16.mxu0 0
      %1862 = vmatpush1.bf16.msra.mxu0 0
      %1863 = vmatprep.subr.bf16.mxu0 0
      %1864 = vmatpush1.bf16.msra.mxu0 0
      %1865 = vmatprep.mubr.bf16.mxu0 0
      %1866 = vmatmul.mubr.bf16.gmra.mrb[0].mxu0 %v1498
      %v1867 = vpop.f32.mrb[0].mxu0
      %v1868 = vadd.f32 %v1795, %v1867
      %v1869 = vpop.f32.mrb[0].mxu0
      %v1870 = vadd.f32 %v1797, %v1869
      %v1871 = vpop.f32.mrb[0].mxu0
      %v1872 = vadd.f32 %v1799, %v1871
      %v1873 = vpop.f32.mrb[0].mxu0
      %v1874 = vadd.f32 %v1801, %v1873
      %1875 = vmatprep.mubr.bf16.mxu0 0
      %1876 = vmatmul.mubr.bf16.gmra.mrb[0].mxu0 %v1501
      %v1877 = vpop.f32.mrb[0].mxu0
      %v1878 = vadd.f32 %v1805, %v1877
      %v1879 = vpop.f32.mrb[0].mxu0
      %v1880 = vadd.f32 %v1807, %v1879
      %v1881 = vpop.f32.mrb[0].mxu0
      %v1882 = vadd.f32 %v1809, %v1881
      %v1883 = vpop.f32.mrb[0].mxu0
      %v1884 = vadd.f32 %v1811, %v1883
      %1885 = vmatprep.mubr.bf16.mxu0 0
      %1886 = vmatmul.mubr.bf16.gmra.mrb[0].mxu0 %v1504
      %v1887 = vpop.f32.mrb[0].mxu0
      %v1888 = vadd.f32 %v1815, %v1887
      %v1889 = vpop.f32.mrb[0].mxu0
      %v1890 = vadd.f32 %v1817, %v1889
      %v1891 = vpop.f32.mrb[0].mxu0
      %v1892 = vadd.f32 %v1819, %v1891
      %v1893 = vpop.f32.mrb[0].mxu0
      %v1894 = vadd.f32 %v1821, %v1893
      %1895 = vmatprep.mubr.bf16.mxu0 0
      %1896 = vmatmul.mubr.bf16.gmra.mrb[0].mxu0 %v1507
      %v1897 = vpop.f32.mrb[0].mxu0
      %v1898 = vadd.f32 %v1825, %v1897
      %v1899 = vpop.f32.mrb[0].mxu0
      %v1900 = vadd.f32 %v1827, %v1899
      %v1901 = vpop.f32.mrb[0].mxu0
      %v1902 = vadd.f32 %v1829, %v1901
      %v1903 = vpop.f32.mrb[0].mxu0
      %v1904 = vadd.f32 %v1831, %v1903
      %1905 = vdwg.mxu0
      %v1906 = vadd.f32 %v1394, %v1868
      %v1907 = vadd.f32 %v1396, %v1870
      %v1908 = vadd.f32 %v1398, %v1872
      %v1909 = vadd.f32 %v1400, %v1874
      %v1910 = vadd.f32 %v1404, %v1878
      %v1911 = vadd.f32 %v1406, %v1880
      %v1912 = vadd.f32 %v1408, %v1882
      %v1913 = vadd.f32 %v1410, %v1884
      %v1914 = vadd.f32 %v1414, %v1888
      %v1915 = vadd.f32 %v1416, %v1890
      %v1916 = vadd.f32 %v1418, %v1892
      %v1917 = vadd.f32 %v1420, %v1894
      %v1918 = vadd.f32 %v1424, %v1898
      %v1919 = vadd.f32 %v1426, %v1900
      %v1920 = vadd.f32 %v1428, %v1902
      %v1921 = vadd.f32 %v1430, %v1904
      %v1922 = vadd.f32 %v1906, %v1908
      %v1923 = vadd.f32 %v1922, %v1910
      %v1924 = vadd.f32 %v1923, %v1912
      %v1925 = vadd.f32 %v1924, %v1914
      %v1926 = vadd.f32 %v1925, %v1916
      %v1927 = vadd.f32 %v1926, %v1918
      %v1928 = vadd.f32 %v1927, %v1920
      %v1929 = vrot.slane %v1928, 4
      %v1930 = vadd.f32 %v1928, %v1929
      %v1931 = vrot.slane %v1930, 2
      %v1932 = vadd.f32 %v1930, %v1931
      %v1933 = vrot.slane %v1932, 1
      %v1934 = vadd.f32 %v1932, %v1933
      %v1935 = vadd.f32 %v1907, %v1909
      %v1936 = vadd.f32 %v1935, %v1911
      %v1937 = vadd.f32 %v1936, %v1913
      %v1938 = vadd.f32 %v1937, %v1915
      %v1939 = vadd.f32 %v1938, %v1917
      %v1940 = vadd.f32 %v1939, %v1919
      %v1941 = vadd.f32 %v1940, %v1921
      %v1942 = vrot.slane %v1941, 4
      %v1943 = vadd.f32 %v1941, %v1942
      %v1944 = vrot.slane %v1943, 2
      %v1945 = vadd.f32 %v1943, %v1944
      %v1946 = vrot.slane %v1945, 1
      %v1947 = vadd.f32 %v1945, %v1946
      %v1948 = vmul.f32 %v1906, %v1906
      %v1949 = vmul.f32 %v1907, %v1907
      %v1950 = vmul.f32 %v1908, %v1908
      %v1951 = vmul.f32 %v1909, %v1909
      %v1952 = vmul.f32 %v1910, %v1910
      %v1953 = vmul.f32 %v1911, %v1911
      %v1954 = vmul.f32 %v1912, %v1912
      %v1955 = vmul.f32 %v1913, %v1913
      %v1956 = vmul.f32 %v1914, %v1914
      %v1957 = vmul.f32 %v1915, %v1915
      %v1958 = vmul.f32 %v1916, %v1916
      %v1959 = vmul.f32 %v1917, %v1917
      %v1960 = vmul.f32 %v1918, %v1918
      %v1961 = vmul.f32 %v1919, %v1919
      %v1962 = vmul.f32 %v1920, %v1920
      %v1963 = vmul.f32 %v1921, %v1921
      %v1964 = vadd.f32 %v1948, %v1950
      %v1965 = vadd.f32 %v1964, %v1952
      %v1966 = vadd.f32 %v1965, %v1954
      %v1967 = vadd.f32 %v1966, %v1956
      %v1968 = vadd.f32 %v1967, %v1958
      %v1969 = vadd.f32 %v1968, %v1960
      %v1970 = vadd.f32 %v1969, %v1962
      %v1971 = vrot.slane %v1970, 4
      %v1972 = vadd.f32 %v1970, %v1971
      %v1973 = vrot.slane %v1972, 2
      %v1974 = vadd.f32 %v1972, %v1973
      %v1975 = vrot.slane %v1974, 1
      %v1976 = vadd.f32 %v1974, %v1975
      %v1977 = vadd.f32 %v1949, %v1951
      %v1978 = vadd.f32 %v1977, %v1953
      %v1979 = vadd.f32 %v1978, %v1955
      %v1980 = vadd.f32 %v1979, %v1957
      %v1981 = vadd.f32 %v1980, %v1959
      %v1982 = vadd.f32 %v1981, %v1961
      %v1983 = vadd.f32 %v1982, %v1963
      %v1984 = vrot.slane %v1983, 4
      %v1985 = vadd.f32 %v1983, %v1984
      %v1986 = vrot.slane %v1985, 2
      %v1987 = vadd.f32 %v1985, %v1986
      %v1988 = vrot.slane %v1987, 1
      %v1989 = vadd.f32 %v1987, %v1988
      %vm1990 = vcmask 1040384
      %v1991 = vsel %vm1990, %v1934, %v1976
      %v1992 = vsel %vm1990, %v1947, %v1989
      %v1995 = vcombine.low %v1991, %v1992
      %v1997 = vunpack.c.l.s4 1983009808
      %v1998 = vunpack.c.0.s8 %v1997
      %v1999 = vlaneseq
      %v2000 = vshrl.u32 %v1999, 7
      %v2001 = vsub.s32 %v1998, %v2000
      %v2002 = vrot.slane %v1995, %v2001
      %2004 = vst [vmem:[%s222] sm:$0xf] %v2002
      %v2005 = vpack.c.bf16 %v1908, %v1906
      %v2006 = vpack.c.bf16 %v1912, %v1910
      %v2007 = vpack.c.bf16 %v1916, %v1914
      %v2008 = vpack.c.bf16 %v1920, %v1918
      %v2013 = vunpack.c.l.b16 %v2005
      %v2014 = vunpack.c.h.b16 %v2005
      %v2015 = vunpack.c.l.b16 %v2006
      %v2016 = vunpack.c.h.b16 %v2006
      %v2017 = vunpack.c.l.b16 %v2007
      %v2018 = vunpack.c.h.b16 %v2007
      %v2019 = vunpack.c.l.b16 %v2008
      %v2020 = vunpack.c.h.b16 %v2008
      %v2021 = vpack.c.b16 %v2013, %v2013
      %v2022 = vpack.c.b16 %v2014, %v2014
      %v2023 = vpack.c.b16 %v2015, %v2015
      %v2024 = vpack.c.b16 %v2016, %v2016
      %v2025 = vpack.c.b16 %v2017, %v2017
      %v2026 = vpack.c.b16 %v2018, %v2018
      %v2027 = vpack.c.b16 %v2019, %v2019
      %v2028 = vpack.c.b16 %v2020, %v2020
      %2037 = vst [vmem:[%s212] sm:$0xf] %v2021
      %2038 = vst [vmem:[%s212 + $0x4] sm:$0xf] %v2022
      %2039 = vst [vmem:[%s212 + $0x8] sm:$0xf] %v2023
      %2040 = vst [vmem:[%s212 + $0xc] sm:$0xf] %v2024
      %2041 = vst [vmem:[%s212 + $0x10] sm:$0xf] %v2025
      %2042 = vst [vmem:[%s212 + $0x14] sm:$0xf] %v2026
      %2043 = vst [vmem:[%s212 + $0x18] sm:$0xf] %v2027
      %2044 = vst [vmem:[%s212 + $0x1c] sm:$0xf] %v2028
      %v2045 = vpack.c.bf16 %v1909, %v1907
      %v2046 = vpack.c.bf16 %v1913, %v1911
      %v2047 = vpack.c.bf16 %v1917, %v1915
      %v2048 = vpack.c.bf16 %v1921, %v1919
      %v2053 = vunpack.c.l.b16 %v2045
      %v2054 = vunpack.c.h.b16 %v2045
      %v2055 = vunpack.c.l.b16 %v2046
      %v2056 = vunpack.c.h.b16 %v2046
      %v2057 = vunpack.c.l.b16 %v2047
      %v2058 = vunpack.c.h.b16 %v2047
      %v2059 = vunpack.c.l.b16 %v2048
      %v2060 = vunpack.c.h.b16 %v2048
      %v2061 = vpack.c.b16 %v2053, %v2053
      %v2062 = vpack.c.b16 %v2054, %v2054
      %v2063 = vpack.c.b16 %v2055, %v2055
      %v2064 = vpack.c.b16 %v2056, %v2056
      %v2065 = vpack.c.b16 %v2057, %v2057
      %v2066 = vpack.c.b16 %v2058, %v2058
      %v2067 = vpack.c.b16 %v2059, %v2059
      %v2068 = vpack.c.b16 %v2060, %v2060
      %2077 = vst [vmem:[%s217] sm:$0xf] %v2061
      %2078 = vst [vmem:[%s217 + $0x4] sm:$0xf] %v2062
      %2079 = vst [vmem:[%s217 + $0x8] sm:$0xf] %v2063
      %2080 = vst [vmem:[%s217 + $0xc] sm:$0xf] %v2064
      %2081 = vst [vmem:[%s217 + $0x10] sm:$0xf] %v2065
      %2082 = vst [vmem:[%s217 + $0x14] sm:$0xf] %v2066
      %2083 = vst [vmem:[%s217 + $0x18] sm:$0xf] %v2067
      %2084 = vst [vmem:[%s217 + $0x1c] sm:$0xf] %v2068
      %p2085 = scmp.lt.s32.totalorder %s16, 1
      %s2086 = scalar_select %p2085, %s16, 1
      %s2087 = smul.addr %s2086, 8
      %s2088 = smul.addr %s2087, 4
      %s2089 = scalar_lea.vmem %s2, %s2088
      %p2090 = scmp.lt.s32.totalorder %s16, 1
      %s2091 = scalar_select %p2090, %s16, 1
      %s2092 = smul.addr %s2091, 8
      %s2093 = smul.addr %s2092, 4
      %s2094 = scalar_lea.vmem %s3, %s2093
      %p2095 = scmp.lt.s32.totalorder %s16, 1
      %s2096 = scalar_select %p2095, %s16, 1
      %s2097 = smul.addr %s2096, 2
      %s2098 = smul.addr %s2097, 2
      %s2099 = scalar_lea.vmem %s4, %s2098
      // Predicated region
      $region29: #{basic_block_forward.3} parent=27 // pred_check
        %p2100 = pneg %p81
      $region30: #{basic_block_forward.3} parent=27 // pred_check_branch
        %2102 = sbr.rel (%p2100) target = $region32
      $region31: #{basic_block_forward.3} parent=27 // pred_region
        _
      $region32: #{basic_block_forward.3} parent=27 // pred_fallthru
        _
      // Predicated region
      $region33: #{basic_block_forward.3} parent=27 // pred_check
        %p2103 = pneg %p107
      $region34: #{basic_block_forward.3} parent=27 // pred_check_branch
        %2105 = sbr.rel (%p2103) target = $region36
      $region35: #{basic_block_forward.3} parent=27 // pred_region
        _
      $region36: #{basic_block_forward.3} parent=27 // pred_fallthru
        _
      // Predicated region
      $region37: #{basic_block_forward.3} parent=27 // pred_check
        %p2106 = pneg %p133
      $region38: #{basic_block_forward.3} parent=27 // pred_check_branch
        %2108 = sbr.rel (%p2106) target = $region40
      $region39: #{basic_block_forward.3} parent=27 // pred_region
        _
      $region40: #{basic_block_forward.3} parent=27 // pred_fallthru
        _
    $region28: #{basic_block_forward.3} parent=5 // pred_fallthru
      _
    %p2109 = scmp.le.s32.totalorder 2, %s11
    // Predicated region
    $region41: #{basic_block_forward.3} parent=5 // pred_check
      %p2110 = pneg %p2109
    $region42: #{basic_block_forward.3} parent=5 // pred_check_branch
      %2112 = sbr.rel (%p2110) target = $region44
    $region43: #{basic_block_forward.3} parent=5 // pred_region
      %s2113 = ssub.s32 %s11, 2
      // Predicated region
      $region45: #{basic_block_forward.3} parent=43 // pred_check
        %p2114 = pneg %p87
      $region46: #{basic_block_forward.3} parent=43 // pred_check_branch
        %2116 = sbr.rel (%p2114) target = $region48
      $region47: #{basic_block_forward.3} parent=43 // pred_region
        %p2117 = scmp.lt.s32.totalorder %s17, 1
        %s2118 = scalar_select %p2117, %s17, 1
        %s2119 = smul.addr %s2118, 8
        %s2120 = smul.addr %s2119, 4
        %s2121 = scalar_lea.vmem %s2, %s2120
      $region48: #{basic_block_forward.3} parent=43 // pred_fallthru
        _
      // Predicated region
      $region49: #{basic_block_forward.3} parent=43 // pred_check
        %p2122 = pneg %p113
      $region50: #{basic_block_forward.3} parent=43 // pred_check_branch
        %2124 = sbr.rel (%p2122) target = $region52
      $region51: #{basic_block_forward.3} parent=43 // pred_region
        %p2125 = scmp.lt.s32.totalorder %s17, 1
        %s2126 = scalar_select %p2125, %s17, 1
        %s2127 = smul.addr %s2126, 8
        %s2128 = smul.addr %s2127, 4
        %s2129 = scalar_lea.vmem %s3, %s2128
      $region52: #{basic_block_forward.3} parent=43 // pred_fallthru
        _
      // Predicated region
      $region53: #{basic_block_forward.3} parent=43 // pred_check
        %p2130 = pneg %p139
      $region54: #{basic_block_forward.3} parent=43 // pred_check_branch
        %2132 = sbr.rel (%p2130) target = $region56
      $region55: #{basic_block_forward.3} parent=43 // pred_region
        %p2133 = scmp.lt.s32.totalorder %s17, 1
        %s2134 = scalar_select %p2133, %s17, 1
        %s2135 = smul.addr %s2134, 2
        %s2136 = smul.addr %s2135, 2
        %s2137 = scalar_lea.vmem %s4, %s2136
      $region56: #{basic_block_forward.3} parent=43 // pred_fallthru
        _
    $region44: #{basic_block_forward.3} parent=5 // pred_fallthru
      _
  $region6: #{basic_block_forward.3} parent=0 // loop_footer
    %s15 = sadd.s32 1, %s11
  $region7: #{basic_block_forward.3} parent=0 // loop_footer_branch
    %10 = sbr.rel target = $region3
  $region8: #{basic_block_forward.3} parent=0 // loop_exit
    _

// kernel: basic_block_forward.4
$region0: #{basic_block_forward.4}
  #allocation0 [shape = 'u32[]', space=smem, size = 0x4, offset = 0x4, fixed_abs, tag = 'smem constant byte address 0x4 - core index']
  #allocation1 [shape = 'u32[144,128]{1,0:T(1,128)}', space=vmem, size = 0x12000, scoped, tag = 'internal scratch']
  #allocation2 [shape = 'bf16[10,10,128]{2,1,0:T(8,128)(2,1)}', space=vmem, size = 0xa000, scoped, tag = 'scratch operand']
  %s0 = inlined_call_operand.vmem [shape: bf16[2,64,128], index: 0, kind: input, shape index: {}]
  %s1 = inlined_call_operand.vmem [shape: f32[1,128], index: 1, kind: input, shape index: {}]
  %s2 = inlined_call_operand.vmem [shape: f32[1,128], index: 2, kind: input, shape index: {}]
  %s3 = inlined_call_operand.vmem [shape: bf16[3,384,128], index: 3, kind: input, shape index: {}]
  %s4 = inlined_call_operand.vmem [shape: bf16[2,64,128], index: 4, kind: output, shape index: {0}]
  %s5 = inlined_call_operand.vmem [shape: f32[2,2,128], index: 5, kind: output, shape index: {1}]
  %6 = xla_tuple %s4, %s5
  %s7 = sld [smem:[#allocation0]]
  $region57: #{basic_block_forward.4} parent=0
    _
  %s9 = ssub.s32 1, %s7
  %s10 = scalar_select 0, %s9, %s7
  loop: start=0, step=1, limit=4
  $region2: #{basic_block_forward.4} parent=0 // loop_pre_header
    _
  $region3: #{basic_block_forward.4} parent=0 // loop_header
    %s12 = sphi 0, %s16
    %p13 = scmp.ge.s32.totalorder %s12, 4
    %s22 = sphi 0, %s24
    %s25 = sphi 0, %s22
    %s26 = sphi 0, %s25
    %s42 = sphi 0, %s26
    %s46 = sphi 0, %s46
    %s48 = sphi 0, %s46
    %s49 = sphi 0, %s48
    %s63 = sphi 0, %s49
    %s67 = sphi 0, %s67
    %s69 = sphi 0, %s67
    %s70 = sphi 0, %s69
    %s84 = sphi 0, %s70
    %s88 = sphi 0, %s88
    %s90 = sphi 0, %s88
    %s91 = sphi 0, %s90
    %s105 = sphi 0, %s91
    %s111 = sphi 0, %s113
    %s114 = sphi 0, %s111
    %s115 = sphi 0, %s114
    %s131 = sphi 0, %s115
    %s137 = sphi 0, %s139
    %s140 = sphi 0, %s137
    %s141 = sphi 0, %s140
    %s157 = sphi 0, %s141
  $region4: #{basic_block_forward.4} parent=0 // loop_header_branch
    %15 = sbr.rel (%p13) target = $region8
  $region5: #{basic_block_forward.4} parent=0 // loop_body
    %s17 = ssub.s32 %s12, 1
    %s18 = ssub.s32 %s12, 2
    %s19 = sadd.s32 %s12, 1
    %s20 = ssub.s32 %s12, %s19
    %p21 = scmp.eq.s32.totalorder %s20, 0
    %s23 = sadd.s32 %s22, 1
    %s24 = scalar_select %p21, %s22, %s23
    %p27 = pneg %p21
    %p28 = scmp.eq.s32.totalorder %s12, 1
    %p29 = por %p27, %p28
    %p30 = scmp.ne.s32.totalorder %s22, %s25
    %p31 = scmp.eq.s32.totalorder %s12, 0
    %p32 = por %p30, %p31
    %p33 = scmp.ne.s32.totalorder %s22, %s25
    %p34 = scmp.eq.s32.totalorder %s17, 1
    %p35 = por %p33, %p34
    %p36 = scmp.ne.s32.totalorder %s25, %s26
    %p37 = scmp.eq.s32.totalorder %s17, 0
    %p38 = por %p36, %p37
    %p39 = scmp.ne.s32.totalorder %s25, %s26
    %p40 = scmp.eq.s32.totalorder %s18, 1
    %p41 = por %p39, %p40
    %p43 = scmp.ne.s32.totalorder %s26, %s42
    %p44 = scmp.eq.s32.totalorder %s18, 0
    %p45 = por %p43, %p44
    %s47 = sadd.s32 %s46, 1
    %p50 = scmp.eq.s32.totalorder %s12, 1
    %p51 = scmp.ne.s32.totalorder %s46, %s48
    %p52 = scmp.eq.s32.totalorder %s12, 0
    %p53 = por %p51, %p52
    %p54 = scmp.ne.s32.totalorder %s46, %s48
    %p55 = scmp.eq.s32.totalorder %s17, 1
    %p56 = por %p54, %p55
    %p57 = scmp.ne.s32.totalorder %s48, %s49
    %p58 = scmp.eq.s32.totalorder %s17, 0
    %p59 = por %p57, %p58
    %p60 = scmp.ne.s32.totalorder %s48, %s49
    %p61 = scmp.eq.s32.totalorder %s18, 1
    %p62 = por %p60, %p61
    %p64 = scmp.ne.s32.totalorder %s49, %s63
    %p65 = scmp.eq.s32.totalorder %s18, 0
    %p66 = por %p64, %p65
    %s68 = sadd.s32 %s67, 1
    %p71 = scmp.eq.s32.totalorder %s12, 1
    %p72 = scmp.ne.s32.totalorder %s67, %s69
    %p73 = scmp.eq.s32.totalorder %s12, 0
    %p74 = por %p72, %p73
    %p75 = scmp.ne.s32.totalorder %s67, %s69
    %p76 = scmp.eq.s32.totalorder %s17, 1
    %p77 = por %p75, %p76
    %p78 = scmp.ne.s32.totalorder %s69, %s70
    %p79 = scmp.eq.s32.totalorder %s17, 0
    %p80 = por %p78, %p79
    %p81 = scmp.ne.s32.totalorder %s69, %s70
    %p82 = scmp.eq.s32.totalorder %s18, 1
    %p83 = por %p81, %p82
    %p85 = scmp.ne.s32.totalorder %s70, %s84
    %p86 = scmp.eq.s32.totalorder %s18, 0
    %p87 = por %p85, %p86
    %s89 = sadd.s32 %s88, 1
    %p92 = scmp.eq.s32.totalorder %s12, 1
    %p93 = scmp.ne.s32.totalorder %s88, %s90
    %p94 = scmp.eq.s32.totalorder %s12, 0
    %p95 = por %p93, %p94
    %p96 = scmp.ne.s32.totalorder %s88, %s90
    %p97 = scmp.eq.s32.totalorder %s17, 1
    %p98 = por %p96, %p97
    %p99 = scmp.ne.s32.totalorder %s90, %s91
    %p100 = scmp.eq.s32.totalorder %s17, 0
    %p101 = por %p99, %p100
    %p102 = scmp.ne.s32.totalorder %s90, %s91
    %p103 = scmp.eq.s32.totalorder %s18, 1
    %p104 = por %p102, %p103
    %p106 = scmp.ne.s32.totalorder %s91, %s105
    %p107 = scmp.eq.s32.totalorder %s18, 0
    %p108 = por %p106, %p107
    %s109 = ssub.s32 %s12, %s19
    %p110 = scmp.eq.s32.totalorder %s109, 0
    %s112 = sadd.s32 %s111, 1
    %s113 = scalar_select %p110, %s111, %s112
    %p116 = pneg %p110
    %p117 = scmp.eq.s32.totalorder %s12, 1
    %p118 = por %p116, %p117
    %p119 = scmp.ne.s32.totalorder %s111, %s114
    %p120 = scmp.eq.s32.totalorder %s12, 0
    %p121 = por %p119, %p120
    %p122 = scmp.ne.s32.totalorder %s111, %s114
    %p123 = scmp.eq.s32.totalorder %s17, 1
    %p124 = por %p122, %p123
    %p125 = scmp.ne.s32.totalorder %s114, %s115
    %p126 = scmp.eq.s32.totalorder %s17, 0
    %p127 = por %p125, %p126
    %p128 = scmp.ne.s32.totalorder %s114, %s115
    %p129 = scmp.eq.s32.totalorder %s18, 1
    %p130 = por %p128, %p129
    %p132 = scmp.ne.s32.totalorder %s115, %s131
    %p133 = scmp.eq.s32.totalorder %s18, 0
    %p134 = por %p132, %p133
    %s135 = ssub.s32 %s12, %s19
    %p136 = scmp.eq.s32.totalorder %s135, 0
    %s138 = sadd.s32 %s137, 1
    %s139 = scalar_select %p136, %s137, %s138
    %p142 = pneg %p136
    %p143 = scmp.eq.s32.totalorder %s12, 1
    %p144 = por %p142, %p143
    %p145 = scmp.ne.s32.totalorder %s137, %s140
    %p146 = scmp.eq.s32.totalorder %s12, 0
    %p147 = por %p145, %p146
    %p148 = scmp.ne.s32.totalorder %s137, %s140
    %p149 = scmp.eq.s32.totalorder %s17, 1
    %p150 = por %p148, %p149
    %p151 = scmp.ne.s32.totalorder %s140, %s141
    %p152 = scmp.eq.s32.totalorder %s17, 0
    %p153 = por %p151, %p152
    %p154 = scmp.ne.s32.totalorder %s140, %s141
    %p155 = scmp.eq.s32.totalorder %s18, 1
    %p156 = por %p154, %p155
    %p158 = scmp.ne.s32.totalorder %s141, %s157
    %p159 = scmp.eq.s32.totalorder %s18, 0
    %p160 = por %p158, %p159
    %p161 = scmp.le.s32.totalorder 1, %s12
    %p162 = scmp.lt.s32.totalorder %s12, 3
    %p163 = pnand %p161, %p162
    %p164 = pneg %p163
    // Predicated region
    $region9: #{basic_block_forward.4} parent=5 // pred_check
      _
    $region10: #{basic_block_forward.4} parent=5 // pred_check_branch
      %166 = sbr.rel (%p163) target = $region12
    $region11: #{basic_block_forward.4} parent=5 // pred_region
      %s167 = ssub.s32 %s12, 1
      // Predicated region
      $region13: #{basic_block_forward.4} parent=11 // pred_check
        %p168 = pneg %p59
      $region14: #{basic_block_forward.4} parent=11 // pred_check_branch
        %170 = sbr.rel (%p168) target = $region16
      $region15: #{basic_block_forward.4} parent=11 // pred_region
        _
      $region16: #{basic_block_forward.4} parent=11 // pred_fallthru
        _
      // Predicated region
      $region17: #{basic_block_forward.4} parent=11 // pred_check
        %p171 = pneg %p80
      $region18: #{basic_block_forward.4} parent=11 // pred_check_branch
        %173 = sbr.rel (%p171) target = $region20
      $region19: #{basic_block_forward.4} parent=11 // pred_region
        _
      $region20: #{basic_block_forward.4} parent=11 // pred_fallthru
        _
      // Predicated region
      $region21: #{basic_block_forward.4} parent=11 // pred_check
        %p174 = pneg %p101
      $region22: #{basic_block_forward.4} parent=11 // pred_check_branch
        %176 = sbr.rel (%p174) target = $region24
      $region23: #{basic_block_forward.4} parent=11 // pred_region
        _
      $region24: #{basic_block_forward.4} parent=11 // pred_fallthru
        _
    $region12: #{basic_block_forward.4} parent=5 // pred_fallthru
      _
    %p177 = scmp.lt.s32.totalorder %s12, 2
    // Predicated region
    $region25: #{basic_block_forward.4} parent=5 // pred_check
      %p178 = pneg %p177
    $region26: #{basic_block_forward.4} parent=5 // pred_check_branch
      %180 = sbr.rel (%p178) target = $region28
    $region27: #{basic_block_forward.4} parent=5 // pred_region
      // Predicated region
      $region29: #{basic_block_forward.4} parent=27 // pred_check
        %p181 = pneg %p32
      $region30: #{basic_block_forward.4} parent=27 // pred_check_branch
        %183 = sbr.rel (%p181) target = $region32
      $region31: #{basic_block_forward.4} parent=27 // pred_region
        %p184 = scmp.lt.s32.totalorder %s12, 1
        %s185 = scalar_select %p184, %s12, 1
        %s186 = smul.addr %s185, 8
        %s187 = smul.addr %s186, 4
        %s188 = scalar_lea.vmem %s0, %s187
      $region32: #{basic_block_forward.4} parent=27 // pred_fallthru
        _
    $region28: #{basic_block_forward.4} parent=5 // pred_fallthru
      _
    %p189 = scmp.le.s32.totalorder 1, %s12
    %p190 = scmp.lt.s32.totalorder %s12, 3
    %p191 = pnand %p189, %p190
    %p192 = pneg %p191
    // Predicated region
    $region33: #{basic_block_forward.4} parent=5 // pred_check
      _
    $region34: #{basic_block_forward.4} parent=5 // pred_check_branch
      %194 = sbr.rel (%p191) target = $region36
    $region35: #{basic_block_forward.4} parent=5 // pred_region
      %s195 = ssub.s32 %s12, 1
      %p196 = scmp.lt.s32.totalorder %s17, 1
      %s197 = scalar_select %p196, %s17, 1
      %s198 = smul.addr %s197, 8
      %s199 = smul.addr %s198, 4
      %s200 = scalar_lea.vmem %s0, %s199
      %p201 = pneg %p38
      %p202 = pneg %p35
      %p203 = pneg %p59
      %p204 = pneg %p56
      %p205 = pneg %p80
      %p206 = pneg %p77
      %p207 = pneg %p101
      %p208 = pneg %p98
      %p209 = pneg %p127
      %p210 = pneg %p124
      %p211 = scmp.lt.s32.totalorder %s17, 1
      %s212 = scalar_select %p211, %s17, 1
      %s213 = smul.addr %s212, 8
      %s214 = smul.addr %s213, 4
      %s215 = scalar_lea.vmem %s4, %s214
      %p216 = pneg %p153
      %p217 = pneg %p150
      %p218 = scmp.lt.s32.totalorder %s17, 1
      %s219 = scalar_select %p218, %s17, 1
      %s220 = smul.addr %s219, 2
      %s221 = scalar_lea.vmem %s5, %s220
      %p222 = scmp.lt.s32.totalorder %s17, 1
      %s223 = scalar_select %p222, %s17, 1
      %s224 = smul.addr %s223, 8
      %s225 = smul.addr %s224, 4
      %s226 = scalar_lea.vmem %s0, %s225
      %p227 = scmp.lt.s32.totalorder %s17, 1
      %s228 = scalar_select %p227, %s17, 1
      %s229 = smul.addr %s228, 8
      %s230 = smul.addr %s229, 4
      %s231 = scalar_lea.vmem %s4, %s230
      %p232 = scmp.lt.s32.totalorder %s17, 1
      %s233 = scalar_select %p232, %s17, 1
      %s234 = smul.addr %s233, 2
      %s235 = scalar_lea.vmem %s5, %s234
      %v237 = vld [vmem:[%s226] sm:$0xf]
      %v238 = vld [vmem:[%s226 + $0x4] sm:$0xf]
      %v239 = vld [vmem:[%s226 + $0x8] sm:$0xf]
      %v240 = vld [vmem:[%s226 + $0xc] sm:$0xf]
      %v241 = vld [vmem:[%s226 + $0x10] sm:$0xf]
      %v242 = vld [vmem:[%s226 + $0x14] sm:$0xf]
      %v243 = vld [vmem:[%s226 + $0x18] sm:$0xf]
      %v244 = vld [vmem:[%s226 + $0x1c] sm:$0xf]
      %v245 = vunpack.c.l.bf16 %v237
      %v246 = vunpack.c.l.bf16 %v238
      %v247 = vunpack.c.l.bf16 %v239
      %v248 = vunpack.c.l.bf16 %v240
      %v249 = vunpack.c.l.bf16 %v241
      %v250 = vunpack.c.l.bf16 %v242
      %v251 = vunpack.c.l.bf16 %v243
      %v252 = vunpack.c.l.bf16 %v244
      %v253 = vld [vmem:[%s1] sm:$0x1]
      %v255 = vlaneseq
      %v256 = vshrl.u32 %v255, 7
      %v257 = vsub.s32 0, %v256
      %v258 = vrot.slane %v253, %v257
      %v260 = vmul.f32 %v245, %v258
      %v261 = vmul.f32 %v246, %v258
      %v262 = vmul.f32 %v247, %v258
      %v263 = vmul.f32 %v248, %v258
      %v264 = vmul.f32 %v249, %v258
      %v265 = vmul.f32 %v250, %v258
      %v266 = vmul.f32 %v251, %v258
      %v267 = vmul.f32 %v252, %v258
      %v268 = vld [vmem:[%s2] sm:$0x1]
      %v270 = vlaneseq
      %v271 = vshrl.u32 %v270, 7
      %v272 = vsub.s32 0, %v271
      %v273 = vrot.slane %v268, %v272
      %v275 = vadd.f32 %v260, %v273
      %v276 = vadd.f32 %v261, %v273
      %v277 = vadd.f32 %v262, %v273
      %v278 = vadd.f32 %v263, %v273
      %v279 = vadd.f32 %v264, %v273
      %v280 = vadd.f32 %v265, %v273
      %v281 = vadd.f32 %v266, %v273
      %v282 = vadd.f32 %v267, %v273
      %v283 = vmax.f32 %v275, 0.0
      %v284 = vmax.f32 %v276, 0.0
      %v285 = vmax.f32 %v277, 0.0
      %v286 = vmax.f32 %v278, 0.0
      %v287 = vmax.f32 %v279, 0.0
      %v288 = vmax.f32 %v280, 0.0
      %v289 = vmax.f32 %v281, 0.0
      %v290 = vmax.f32 %v282, 0.0
      %291 = vst [vmem:[#allocation2] sm:$0xf] 0
      %292 = vst [vmem:[#allocation2 + $0x4] sm:$0x1] 0
      %293 = vst [vmem:[#allocation2 + $0x8] sm:$0xf] 0
      %294 = vst [vmem:[#allocation2 + $0xc] sm:$0x1] 0
      %295 = vst [vmem:[#allocation2 + $0x10] sm:$0xf] 0
      %296 = vst [vmem:[#allocation2 + $0x14] sm:$0x1] 0
      %297 = vst [vmem:[#allocation2 + $0x18] sm:$0xf] 0
      %298 = vst [vmem:[#allocation2 + $0x1c] sm:$0x1] 0
      %299 = vst [vmem:[#allocation2 + $0x20] sm:$0xf] 0
      %300 = vst [vmem:[#allocation2 + $0x24] sm:$0x1] 0
      %301 = vst [vmem:[#allocation2 + $0x28] sm:$0xf] 0
      %302 = vst [vmem:[#allocation2 + $0x2c] sm:$0x1] 0
      %303 = vst [vmem:[#allocation2 + $0x30] sm:$0xf] 0
      %304 = vst [vmem:[#allocation2 + $0x34] sm:$0x1] 0
      %305 = vst [vmem:[#allocation2 + $0x38] sm:$0xf] 0
      %306 = vst [vmem:[#allocation2 + $0x3c] sm:$0x1] 0
      %307 = vst [vmem:[#allocation2 + $0x40] sm:$0xf] 0
      %308 = vst [vmem:[#allocation2 + $0x44] sm:$0x1] 0
      %309 = vst [vmem:[#allocation2 + $0x48] sm:$0xf] 0
      %310 = vst [vmem:[#allocation2 + $0x4c] sm:$0x1] 0
      %v311 = vpack.c.bf16 %v284, %v283
      %v312 = vpack.c.bf16 %v286, %v285
      %v313 = vpack.c.bf16 %v288, %v287
      %v314 = vpack.c.bf16 %v290, %v289
      %v319 = vunpack.c.l.b16 %v311
      %v320 = vunpack.c.h.b16 %v311
      %v321 = vunpack.c.l.b16 %v312
      %v322 = vunpack.c.h.b16 %v312
      %v323 = vunpack.c.l.b16 %v313
      %v324 = vunpack.c.h.b16 %v313
      %v325 = vunpack.c.l.b16 %v314
      %v326 = vunpack.c.h.b16 %v314
      %v327 = vpack.c.b16 %v319, %v319
      %v328 = vpack.c.b16 %v320, %v320
      %v329 = vpack.c.b16 %v321, %v321
      %v330 = vpack.c.b16 %v322, %v322
      %v331 = vpack.c.b16 %v323, %v323
      %v332 = vpack.c.b16 %v324, %v324
      %v333 = vpack.c.b16 %v325, %v325
      %v334 = vpack.c.b16 %v326, %v326
      %v336 = vshrl.u32 %v327, 16
      %v338 = vrot.slane %v336, 7
      %v339 = vshll.u32 %v327, 16
      %v341 = vor.u32 %v338, %v339
      %v342 = vrot.slane %v338, 4
      %v344 = vshrl.u32 %v328, 16
      %v346 = vrot.slane %v344, 7
      %v347 = vshll.u32 %v328, 16
      %v349 = vor.u32 %v346, %v347
      %v350 = vrot.slane %v346, 4
      %v352 = vshrl.u32 %v329, 16
      %v354 = vrot.slane %v352, 7
      %v355 = vshll.u32 %v329, 16
      %v357 = vor.u32 %v354, %v355
      %v358 = vrot.slane %v354, 4
      %v360 = vshrl.u32 %v330, 16
      %v362 = vrot.slane %v360, 7
      %v363 = vshll.u32 %v330, 16
      %v365 = vor.u32 %v362, %v363
      %v366 = vrot.slane %v362, 4
      %v368 = vshrl.u32 %v331, 16
      %v370 = vrot.slane %v368, 7
      %v371 = vshll.u32 %v331, 16
      %v373 = vor.u32 %v370, %v371
      %v374 = vrot.slane %v370, 4
      %v376 = vshrl.u32 %v332, 16
      %v378 = vrot.slane %v376, 7
      %v379 = vshll.u32 %v332, 16
      %v381 = vor.u32 %v378, %v379
      %v382 = vrot.slane %v378, 4
      %v384 = vshrl.u32 %v333, 16
      %v386 = vrot.slane %v384, 7
      %v387 = vshll.u32 %v333, 16
      %v389 = vor.u32 %v386, %v387
      %v390 = vrot.slane %v386, 4
      %v392 = vshrl.u32 %v334, 16
      %v394 = vrot.slane %v392, 7
      %v395 = vshll.u32 %v334, 16
      %v397 = vor.u32 %v394, %v395
      %v398 = vrot.slane %v394, 4
      %s415 = scalar_lea.vmem [#allocation2], 8
      %vm416 = vcmask 1043456
      %vm417 = vsmask.f32 7938
      %vm418 = vmand %vm416, %vm417
      %v419 = vld [vmem:[%s415] sm:$0xf]
      %v420 = vsel %vm418, %v341, %v419
      %421 = vst [vmem:[%s415] sm:$0xf] %v420
      %vm422 = vcmask 1040384
      %vm423 = vsmask.f32 256
      %vm424 = vmand %vm422, %vm423
      %v425 = vld [vmem:[%s415 + $0x4] sm:$0x1]
      %v426 = vsel %vm424, %v342, %v425
      %427 = vst [vmem:[%s415 + $0x4] sm:$0x1] %v426
      %v428 = vld [vmem:[%s415 + $0x8] sm:$0xf]
      %v429 = vsel %vm418, %v349, %v428
      %430 = vst [vmem:[%s415 + $0x8] sm:$0xf] %v429
      %v431 = vld [vmem:[%s415 + $0xc] sm:$0x1]
      %v432 = vsel %vm424, %v350, %v431
      %433 = vst [vmem:[%s415 + $0xc] sm:$0x1] %v432
      %v434 = vld [vmem:[%s415 + $0x10] sm:$0xf]
      %v435 = vsel %vm418, %v357, %v434
      %436 = vst [vmem:[%s415 + $0x10] sm:$0xf] %v435
      %v437 = vld [vmem:[%s415 + $0x14] sm:$0x1]
      %v438 = vsel %vm424, %v358, %v437
      %439 = vst [vmem:[%s415 + $0x14] sm:$0x1] %v438
      %v440 = vld [vmem:[%s415 + $0x18] sm:$0xf]
      %v441 = vsel %vm418, %v365, %v440
      %442 = vst [vmem:[%s415 + $0x18] sm:$0xf] %v441
      %v443 = vld [vmem:[%s415 + $0x1c] sm:$0x1]
      %v444 = vsel %vm424, %v366, %v443
      %445 = vst [vmem:[%s415 + $0x1c] sm:$0x1] %v444
      %v446 = vld [vmem:[%s415 + $0x20] sm:$0xf]
      %v447 = vsel %vm418, %v373, %v446
      %448 = vst [vmem:[%s415 + $0x20] sm:$0xf] %v447
      %v449 = vld [vmem:[%s415 + $0x24] sm:$0x1]
      %v450 = vsel %vm424, %v374, %v449
      %451 = vst [vmem:[%s415 + $0x24] sm:$0x1] %v450
      %v452 = vld [vmem:[%s415 + $0x28] sm:$0xf]
      %v453 = vsel %vm418, %v381, %v452
      %454 = vst [vmem:[%s415 + $0x28] sm:$0xf] %v453
      %v455 = vld [vmem:[%s415 + $0x2c] sm:$0x1]
      %v456 = vsel %vm424, %v382, %v455
      %457 = vst [vmem:[%s415 + $0x2c] sm:$0x1] %v456
      %v458 = vld [vmem:[%s415 + $0x30] sm:$0xf]
      %v459 = vsel %vm418, %v389, %v458
      %460 = vst [vmem:[%s415 + $0x30] sm:$0xf] %v459
      %v461 = vld [vmem:[%s415 + $0x34] sm:$0x1]
      %v462 = vsel %vm424, %v390, %v461
      %463 = vst [vmem:[%s415 + $0x34] sm:$0x1] %v462
      %v464 = vld [vmem:[%s415 + $0x38] sm:$0xf]
      %v465 = vsel %vm418, %v397, %v464
      %466 = vst [vmem:[%s415 + $0x38] sm:$0xf] %v465
      %v467 = vld [vmem:[%s415 + $0x3c] sm:$0x1]
      %v468 = vsel %vm424, %v398, %v467
      %469 = vst [vmem:[%s415 + $0x3c] sm:$0x1] %v468
      %v470 = vld [vmem:[#allocation2] sm:$0xf]
      %v471 = vld [vmem:[#allocation2 + $0x8] sm:$0xf]
      %v472 = vld [vmem:[#allocation2 + $0x10] sm:$0xf]
      %v473 = vld [vmem:[#allocation2 + $0x18] sm:$0xf]
      %v474 = vld [vmem:[#allocation2 + $0x20] sm:$0xf]
      %v475 = vld [vmem:[#allocation2 + $0x28] sm:$0xf]
      %v476 = vld [vmem:[#allocation2 + $0x30] sm:$0xf]
      %v477 = vld [vmem:[#allocation2 + $0x38] sm:$0xf]
      %v478 = vld [vmem:[#allocation2 + $0x4] sm:$0x1]
      %v479 = vld [vmem:[#allocation2 + $0xc] sm:$0x1]
      %v480 = vld [vmem:[#allocation2 + $0x14] sm:$0x1]
      %v481 = vld [vmem:[#allocation2 + $0x1c] sm:$0x1]
      %v482 = vld [vmem:[#allocation2 + $0x24] sm:$0x1]
      %v483 = vld [vmem:[#allocation2 + $0x2c] sm:$0x1]
      %v484 = vld [vmem:[#allocation2 + $0x34] sm:$0x1]
      %v485 = vld [vmem:[#allocation2 + $0x3c] sm:$0x1]
      %v486 = vld [vmem:[#allocation2] sm:$0xe]
      %v487 = vld [vmem:[#allocation2 + $0x8] sm:$0xe]
      %v488 = vld [vmem:[#allocation2 + $0x10] sm:$0xe]
      %v489 = vld [vmem:[#allocation2 + $0x18] sm:$0xe]
      %v490 = vld [vmem:[#allocation2 + $0x20] sm:$0xe]
      %v491 = vld [vmem:[#allocation2 + $0x28] sm:$0xe]
      %v492 = vld [vmem:[#allocation2 + $0x30] sm:$0xe]
      %v493 = vld [vmem:[#allocation2 + $0x38] sm:$0xe]
      %v510 = vunpack.c.l.b16 %v470
      %v511 = vunpack.c.l.b16 %v478
      %v512 = vunpack.c.l.b16 %v471
      %v513 = vunpack.c.l.b16 %v479
      %v514 = vunpack.c.l.b16 %v472
      %v515 = vunpack.c.l.b16 %v480
      %v516 = vunpack.c.l.b16 %v473
      %v517 = vunpack.c.l.b16 %v481
      %v518 = vunpack.c.l.b16 %v474
      %v519 = vunpack.c.l.b16 %v482
      %v520 = vunpack.c.l.b16 %v475
      %v521 = vunpack.c.l.b16 %v483
      %v522 = vunpack.c.l.b16 %v476
      %v523 = vunpack.c.l.b16 %v484
      %v524 = vunpack.c.l.b16 %v477
      %v525 = vunpack.c.l.b16 %v485
      %v526 = vpack.c.b16 %v511, %v510
      %v527 = vpack.c.b16 %v513, %v512
      %v528 = vpack.c.b16 %v515, %v514
      %v529 = vpack.c.b16 %v517, %v516
      %v530 = vpack.c.b16 %v519, %v518
      %v531 = vpack.c.b16 %v521, %v520
      %v532 = vpack.c.b16 %v523, %v522
      %v533 = vpack.c.b16 %v525, %v524
      %v535 = vshrl.u32 %v526, 16
      %v537 = vshll.u32 %v526, 16
      %v539 = vrot.slane %v537, 1
      %v540 = vor.u32 %v535, %v539
      %v542 = vshrl.u32 %v527, 16
      %v544 = vshll.u32 %v527, 16
      %v546 = vrot.slane %v544, 1
      %v547 = vor.u32 %v542, %v546
      %v549 = vshrl.u32 %v528, 16
      %v551 = vshll.u32 %v528, 16
      %v553 = vrot.slane %v551, 1
      %v554 = vor.u32 %v549, %v553
      %v556 = vshrl.u32 %v529, 16
      %v558 = vshll.u32 %v529, 16
      %v560 = vrot.slane %v558, 1
      %v561 = vor.u32 %v556, %v560
      %v563 = vshrl.u32 %v530, 16
      %v565 = vshll.u32 %v530, 16
      %v567 = vrot.slane %v565, 1
      %v568 = vor.u32 %v563, %v567
      %v570 = vshrl.u32 %v531, 16
      %v572 = vshll.u32 %v531, 16
      %v574 = vrot.slane %v572, 1
      %v575 = vor.u32 %v570, %v574
      %v577 = vshrl.u32 %v532, 16
      %v579 = vshll.u32 %v532, 16
      %v581 = vrot.slane %v579, 1
      %v582 = vor.u32 %v577, %v581
      %v584 = vshrl.u32 %v533, 16
      %v586 = vshll.u32 %v533, 16
      %v588 = vrot.slane %v586, 1
      %v589 = vor.u32 %v584, %v588
      %v598 = vunpack.c.l.b16 %v486
      %v599 = vunpack.c.l.b16 %v487
      %v600 = vunpack.c.l.b16 %v488
      %v601 = vunpack.c.l.b16 %v489
      %v602 = vunpack.c.l.b16 %v490
      %v603 = vunpack.c.l.b16 %v491
      %v604 = vunpack.c.l.b16 %v492
      %v605 = vunpack.c.l.b16 %v493
      %v606 = vpack.c.b16 %v511, %v598
      %v607 = vpack.c.b16 %v513, %v599
      %v608 = vpack.c.b16 %v515, %v600
      %v609 = vpack.c.b16 %v517, %v601
      %v610 = vpack.c.b16 %v519, %v602
      %v611 = vpack.c.b16 %v521, %v603
      %v612 = vpack.c.b16 %v523, %v604
      %v613 = vpack.c.b16 %v525, %v605
      %v614 = vrot.slane %v606, 1
      %v615 = vrot.slane %v607, 1
      %v616 = vrot.slane %v608, 1
      %v617 = vrot.slane %v609, 1
      %v618 = vrot.slane %v610, 1
      %v619 = vrot.slane %v611, 1
      %v620 = vrot.slane %v612, 1
      %v621 = vrot.slane %v613, 1
      %v622 = vunpack.c.l.b16 %v540
      %v623 = vunpack.c.l.b16 %v614
      %v624 = vunpack.c.l.b16 %v547
      %v625 = vunpack.c.l.b16 %v615
      %v626 = vunpack.c.l.b16 %v554
      %v627 = vunpack.c.l.b16 %v616
      %v628 = vunpack.c.l.b16 %v561
      %v629 = vunpack.c.l.b16 %v617
      %v630 = vunpack.c.l.b16 %v568
      %v631 = vunpack.c.l.b16 %v618
      %v632 = vunpack.c.l.b16 %v575
      %v633 = vunpack.c.l.b16 %v619
      %v634 = vunpack.c.l.b16 %v582
      %v635 = vunpack.c.l.b16 %v620
      %v636 = vunpack.c.l.b16 %v589
      %v637 = vunpack.c.l.b16 %v621
      %v638 = vld [vmem:[%s3] sm:$0xf]
      %v639 = vld [vmem:[%s3 + $0x4] sm:$0xf]
      %v640 = vld [vmem:[%s3 + $0x8] sm:$0xf]
      %v641 = vld [vmem:[%s3 + $0xc] sm:$0xf]
      %v642 = vld [vmem:[%s3 + $0x10] sm:$0xf]
      %v643 = vld [vmem:[%s3 + $0x14] sm:$0xf]
      %v644 = vld [vmem:[%s3 + $0x18] sm:$0xf]
      %v645 = vld [vmem:[%s3 + $0x1c] sm:$0xf]
      %v646 = vld [vmem:[%s3 + $0x20] sm:$0xf]
      %v647 = vld [vmem:[%s3 + $0x24] sm:$0xf]
      %v648 = vld [vmem:[%s3 + $0x28] sm:$0xf]
      %v649 = vld [vmem:[%s3 + $0x2c] sm:$0xf]
      %v650 = vld [vmem:[%s3 + $0x30] sm:$0xf]
      %v651 = vld [vmem:[%s3 + $0x34] sm:$0xf]
      %v652 = vld [vmem:[%s3 + $0x38] sm:$0xf]
      %v653 = vld [vmem:[%s3 + $0x3c] sm:$0xf]
      %v654 = vld [vmem:[%s3 + $0x40] sm:$0xf]
      %v655 = vld [vmem:[%s3 + $0x44] sm:$0xf]
      %v656 = vld [vmem:[%s3 + $0x48] sm:$0xf]
      %v657 = vld [vmem:[%s3 + $0x4c] sm:$0xf]
      %v658 = vld [vmem:[%s3 + $0x50] sm:$0xf]
      %v659 = vld [vmem:[%s3 + $0x54] sm:$0xf]
      %v660 = vld [vmem:[%s3 + $0x58] sm:$0xf]
      %v661 = vld [vmem:[%s3 + $0x5c] sm:$0xf]
      %v662 = vld [vmem:[%s3 + $0x60] sm:$0xf]
      %v663 = vld [vmem:[%s3 + $0x64] sm:$0xf]
      %v664 = vld [vmem:[%s3 + $0x68] sm:$0xf]
      %v665 = vld [vmem:[%s3 + $0x6c] sm:$0xf]
      %v666 = vld [vmem:[%s3 + $0x70] sm:$0xf]
      %v667 = vld [vmem:[%s3 + $0x74] sm:$0xf]
      %v668 = vld [vmem:[%s3 + $0x78] sm:$0xf]
      %v669 = vld [vmem:[%s3 + $0x7c] sm:$0xf]
      %v670 = vld [vmem:[%s3 + $0x80] sm:$0xf]
      %v671 = vld [vmem:[%s3 + $0x84] sm:$0xf]
      %v672 = vld [vmem:[%s3 + $0x88] sm:$0xf]
      %v673 = vld [vmem:[%s3 + $0x8c] sm:$0xf]
      %v674 = vld [vmem:[%s3 + $0x90] sm:$0xf]
      %v675 = vld [vmem:[%s3 + $0x94] sm:$0xf]
      %v676 = vld [vmem:[%s3 + $0x98] sm:$0xf]
      %v677 = vld [vmem:[%s3 + $0x9c] sm:$0xf]
      %v678 = vld [vmem:[%s3 + $0xa0] sm:$0xf]
      %v679 = vld [vmem:[%s3 + $0xa4] sm:$0xf]
      %v680 = vld [vmem:[%s3 + $0xa8] sm:$0xf]
      %v681 = vld [vmem:[%s3 + $0xac] sm:$0xf]
      %v682 = vld [vmem:[%s3 + $0xb0] sm:$0xf]
      %v683 = vld [vmem:[%s3 + $0xb4] sm:$0xf]
      %v684 = vld [vmem:[%s3 + $0xb8] sm:$0xf]
      %v685 = vld [vmem:[%s3 + $0xbc] sm:$0xf]
      %v686 = vld [vmem:[%s415] sm:$0xf]
      %v687 = vld [vmem:[%s415 + $0x8] sm:$0xf]
      %v688 = vld [vmem:[%s415 + $0x10] sm:$0xf]
      %v689 = vld [vmem:[%s415 + $0x18] sm:$0xf]
      %v690 = vld [vmem:[%s415 + $0x20] sm:$0xf]
      %v691 = vld [vmem:[%s415 + $0x28] sm:$0xf]
      %v692 = vld [vmem:[%s415 + $0x30] sm:$0xf]
      %v693 = vld [vmem:[%s415 + $0x38] sm:$0xf]
      %v694 = vld [vmem:[%s415 + $0x4] sm:$0x1]
      %v695 = vld [vmem:[%s415 + $0xc] sm:$0x1]
      %v696 = vld [vmem:[%s415 + $0x14] sm:$0x1]
      %v697 = vld [vmem:[%s415 + $0x1c] sm:$0x1]
      %v698 = vld [vmem:[%s415 + $0x24] sm:$0x1]
      %v699 = vld [vmem:[%s415 + $0x2c] sm:$0x1]
      %v700 = vld [vmem:[%s415 + $0x34] sm:$0x1]
      %v701 = vld [vmem:[%s415 + $0x3c] sm:$0x1]
      %v702 = vld [vmem:[%s415] sm:$0xe]
      %v703 = vld [vmem:[%s415 + $0x8] sm:$0xe]
      %v704 = vld [vmem:[%s415 + $0x10] sm:$0xe]
      %v705 = vld [vmem:[%s415 + $0x18] sm:$0xe]
      %v706 = vld [vmem:[%s415 + $0x20] sm:$0xe]
      %v707 = vld [vmem:[%s415 + $0x28] sm:$0xe]
      %v708 = vld [vmem:[%s415 + $0x30] sm:$0xe]
      %v709 = vld [vmem:[%s415 + $0x38] sm:$0xe]
      %v726 = vunpack.c.l.b16 %v686
      %v727 = vunpack.c.l.b16 %v694
      %v728 = vunpack.c.l.b16 %v687
      %v729 = vunpack.c.l.b16 %v695
      %v730 = vunpack.c.l.b16 %v688
      %v731 = vunpack.c.l.b16 %v696
      %v732 = vunpack.c.l.b16 %v689
      %v733 = vunpack.c.l.b16 %v697
      %v734 = vunpack.c.l.b16 %v690
      %v735 = vunpack.c.l.b16 %v698
      %v736 = vunpack.c.l.b16 %v691
      %v737 = vunpack.c.l.b16 %v699
      %v738 = vunpack.c.l.b16 %v692
      %v739 = vunpack.c.l.b16 %v700
      %v740 = vunpack.c.l.b16 %v693
      %v741 = vunpack.c.l.b16 %v701
      %v742 = vpack.c.b16 %v727, %v726
      %v743 = vpack.c.b16 %v729, %v728
      %v744 = vpack.c.b16 %v731, %v730
      %v745 = vpack.c.b16 %v733, %v732
      %v746 = vpack.c.b16 %v735, %v734
      %v747 = vpack.c.b16 %v737, %v736
      %v748 = vpack.c.b16 %v739, %v738
      %v749 = vpack.c.b16 %v741, %v740
      %v751 = vshrl.u32 %v742, 16
      %v753 = vshll.u32 %v742, 16
      %v755 = vrot.slane %v753, 1
      %v756 = vor.u32 %v751, %v755
      %v758 = vshrl.u32 %v743, 16
      %v760 = vshll.u32 %v743, 16
      %v762 = vrot.slane %v760, 1
      %v763 = vor.u32 %v758, %v762
      %v765 = vshrl.u32 %v744, 16
      %v767 = vshll.u32 %v744, 16
      %v769 = vrot.slane %v767, 1
      %v770 = vor.u32 %v765, %v769
      %v772 = vshrl.u32 %v745, 16
      %v774 = vshll.u32 %v745, 16
      %v776 = vrot.slane %v774, 1
      %v777 = vor.u32 %v772, %v776
      %v779 = vshrl.u32 %v746, 16
      %v781 = vshll.u32 %v746, 16
      %v783 = vrot.slane %v781, 1
      %v784 = vor.u32 %v779, %v783
      %v786 = vshrl.u32 %v747, 16
      %v788 = vshll.u32 %v747, 16
      %v790 = vrot.slane %v788, 1
      %v791 = vor.u32 %v786, %v790
      %v793 = vshrl.u32 %v748, 16
      %v795 = vshll.u32 %v748, 16
      %v797 = vrot.slane %v795, 1
      %v798 = vor.u32 %v793, %v797
      %v800 = vshrl.u32 %v749, 16
      %v802 = vshll.u32 %v749, 16
      %v804 = vrot.slane %v802, 1
      %v805 = vor.u32 %v800, %v804
      %v814 = vunpack.c.l.b16 %v702
      %v815 = vunpack.c.l.b16 %v703
      %v816 = vunpack.c.l.b16 %v704
      %v817 = vunpack.c.l.b16 %v705
      %v818 = vunpack.c.l.b16 %v706
      %v819 = vunpack.c.l.b16 %v707
      %v820 = vunpack.c.l.b16 %v708
      %v821 = vunpack.c.l.b16 %v709
      %v822 = vpack.c.b16 %v727, %v814
      %v823 = vpack.c.b16 %v729, %v815
      %v824 = vpack.c.b16 %v731, %v816
      %v825 = vpack.c.b16 %v733, %v817
      %v826 = vpack.c.b16 %v735, %v818
      %v827 = vpack.c.b16 %v737, %v819
      %v828 = vpack.c.b16 %v739, %v820
      %v829 = vpack.c.b16 %v741, %v821
      %v830 = vrot.slane %v822, 1
      %v831 = vrot.slane %v823, 1
      %v832 = vrot.slane %v824, 1
      %v833 = vrot.slane %v825, 1
      %v834 = vrot.slane %v826, 1
      %v835 = vrot.slane %v827, 1
      %v836 = vrot.slane %v828, 1
      %v837 = vrot.slane %v829, 1
      %v838 = vunpack.c.l.b16 %v756
      %v839 = vunpack.c.l.b16 %v830
      %v840 = vunpack.c.l.b16 %v763
      %v841 = vunpack.c.l.b16 %v831
      %v842 = vunpack.c.l.b16 %v770
      %v843 = vunpack.c.l.b16 %v832
      %v844 = vunpack.c.l.b16 %v777
      %v845 = vunpack.c.l.b16 %v833
      %v846 = vunpack.c.l.b16 %v784
      %v847 = vunpack.c.l.b16 %v834
      %v848 = vunpack.c.l.b16 %v791
      %v849 = vunpack.c.l.b16 %v835
      %v850 = vunpack.c.l.b16 %v798
      %v851 = vunpack.c.l.b16 %v836
      %v852 = vunpack.c.l.b16 %v805
      %v853 = vunpack.c.l.b16 %v837
      %s854 = scalar_lea.vmem %s3, 192
      %v855 = vld [vmem:[%s854] sm:$0xf]
      %v856 = vld [vmem:[%s854 + $0x4] sm:$0xf]
      %v857 = vld [vmem:[%s854 + $0x8] sm:$0xf]
      %v858 = vld [vmem:[%s854 + $0xc] sm:$0xf]
      %v859 = vld [vmem:[%s854 + $0x10] sm:$0xf]
      %v860 = vld [vmem:[%s854 + $0x14] sm:$0xf]
      %v861 = vld [vmem:[%s854 + $0x18] sm:$0xf]
      %v862 = vld [vmem:[%s854 + $0x1c] sm:$0xf]
      %v863 = vld [vmem:[%s854 + $0x20] sm:$0xf]
      %v864 = vld [vmem:[%s854 + $0x24] sm:$0xf]
      %v865 = vld [vmem:[%s854 + $0x28] sm:$0xf]
      %v866 = vld [vmem:[%s854 + $0x2c] sm:$0xf]
      %v867 = vld [vmem:[%s854 + $0x30] sm:$0xf]
      %v868 = vld [vmem:[%s854 + $0x34] sm:$0xf]
      %v869 = vld [vmem:[%s854 + $0x38] sm:$0xf]
      %v870 = vld [vmem:[%s854 + $0x3c] sm:$0xf]
      %v871 = vld [vmem:[%s854 + $0x40] sm:$0xf]
      %v872 = vld [vmem:[%s854 + $0x44] sm:$0xf]
      %v873 = vld [vmem:[%s854 + $0x48] sm:$0xf]
      %v874 = vld [vmem:[%s854 + $0x4c] sm:$0xf]
      %v875 = vld [vmem:[%s854 + $0x50] sm:$0xf]
      %v876 = vld [vmem:[%s854 + $0x54] sm:$0xf]
      %v877 = vld [vmem:[%s854 + $0x58] sm:$0xf]
      %v878 = vld [vmem:[%s854 + $0x5c] sm:$0xf]
      %v879 = vld [vmem:[%s854 + $0x60] sm:$0xf]
      %v880 = vld [vmem:[%s854 + $0x64] sm:$0xf]
      %v881 = vld [vmem:[%s854 + $0x68] sm:$0xf]
      %v882 = vld [vmem:[%s854 + $0x6c] sm:$0xf]
      %v883 = vld [vmem:[%s854 + $0x70] sm:$0xf]
      %v884 = vld [vmem:[%s854 + $0x74] sm:$0xf]
      %v885 = vld [vmem:[%s854 + $0x78] sm:$0xf]
      %v886 = vld [vmem:[%s854 + $0x7c] sm:$0xf]
      %v887 = vld [vmem:[%s854 + $0x80] sm:$0xf]
      %v888 = vld [vmem:[%s854 + $0x84] sm:$0xf]
      %v889 = vld [vmem:[%s854 + $0x88] sm:$0xf]
      %v890 = vld [vmem:[%s854 + $0x8c] sm:$0xf]
      %v891 = vld [vmem:[%s854 + $0x90] sm:$0xf]
      %v892 = vld [vmem:[%s854 + $0x94] sm:$0xf]
      %v893 = vld [vmem:[%s854 + $0x98] sm:$0xf]
      %v894 = vld [vmem:[%s854 + $0x9c] sm:$0xf]
      %v895 = vld [vmem:[%s854 + $0xa0] sm:$0xf]
      %v896 = vld [vmem:[%s854 + $0xa4] sm:$0xf]
      %v897 = vld [vmem:[%s854 + $0xa8] sm:$0xf]
      %v898 = vld [vmem:[%s854 + $0xac] sm:$0xf]
      %v899 = vld [vmem:[%s854 + $0xb0] sm:$0xf]
      %v900 = vld [vmem:[%s854 + $0xb4] sm:$0xf]
      %v901 = vld [vmem:[%s854 + $0xb8] sm:$0xf]
      %v902 = vld [vmem:[%s854 + $0xbc] sm:$0xf]
      %v903 = vpack.c.b16 %v728, %v726
      %v904 = vpack.c.b16 %v840, %v838
      %v905 = vpack.c.b16 %v841, %v839
      %v906 = vpack.c.b16 %v732, %v730
      %v907 = vpack.c.b16 %v844, %v842
      %v908 = vpack.c.b16 %v845, %v843
      %v909 = vpack.c.b16 %v736, %v734
      %v910 = vpack.c.b16 %v848, %v846
      %v911 = vpack.c.b16 %v849, %v847
      %v912 = vpack.c.b16 %v740, %v738
      %v913 = vpack.c.b16 %v852, %v850
      %v914 = vpack.c.b16 %v853, %v851
      %v975 = vunpack.c.l.b16 %v855
      %v976 = vunpack.c.l.b16 %v856
      %v977 = vunpack.c.l.b16 %v857
      %v978 = vunpack.c.l.b16 %v858
      %v979 = vunpack.c.l.b16 %v859
      %v980 = vunpack.c.l.b16 %v860
      %v981 = vunpack.c.l.b16 %v861
      %v982 = vunpack.c.l.b16 %v862
      %v983 = vunpack.c.l.b16 %v863
      %v984 = vunpack.c.l.b16 %v864
      %v985 = vunpack.c.l.b16 %v865
      %v986 = vunpack.c.l.b16 %v866
      %v987 = vunpack.c.l.b16 %v867
      %v988 = vunpack.c.l.b16 %v868
      %v989 = vunpack.c.l.b16 %v869
      %v990 = vunpack.c.l.b16 %v870
      %v991 = vunpack.c.l.b16 %v871
      %v992 = vunpack.c.l.b16 %v872
      %v993 = vunpack.c.l.b16 %v873
      %v994 = vunpack.c.l.b16 %v874
      %v995 = vunpack.c.l.b16 %v875
      %v996 = vunpack.c.l.b16 %v876
      %v997 = vunpack.c.l.b16 %v877
      %v998 = vunpack.c.l.b16 %v878
      %v999 = vunpack.c.l.b16 %v879
      %v1000 = vunpack.c.l.b16 %v880
      %v1001 = vunpack.c.l.b16 %v881
      %v1002 = vunpack.c.l.b16 %v882
      %v1003 = vunpack.c.l.b16 %v883
      %v1004 = vunpack.c.l.b16 %v884
      %v1005 = vunpack.c.l.b16 %v885
      %v1006 = vunpack.c.l.b16 %v886
      %v1007 = vunpack.c.l.b16 %v887
      %v1008 = vunpack.c.l.b16 %v888
      %v1009 = vunpack.c.l.b16 %v889
      %v1010 = vunpack.c.l.b16 %v890
      %v1011 = vunpack.c.l.b16 %v891
      %v1012 = vunpack.c.l.b16 %v892
      %v1013 = vunpack.c.l.b16 %v893
      %v1014 = vunpack.c.l.b16 %v894
      %v1015 = vunpack.c.l.b16 %v895
      %v1016 = vunpack.c.l.b16 %v896
      %v1017 = vunpack.c.l.b16 %v897
      %v1018 = vunpack.c.l.b16 %v898
      %v1019 = vunpack.c.l.b16 %v899
      %v1020 = vunpack.c.l.b16 %v900
      %v1021 = vunpack.c.l.b16 %v901
      %v1022 = vunpack.c.l.b16 %v902
      %v1023 = vpack.c.b16 %v976, %v975
      %v1024 = vpack.c.b16 %v978, %v977
      %v1025 = vpack.c.b16 %v980, %v979
      %v1026 = vpack.c.b16 %v982, %v981
      %v1027 = vpack.c.b16 %v984, %v983
      %v1028 = vpack.c.b16 %v986, %v985
      %v1029 = vpack.c.b16 %v988, %v987
      %v1030 = vpack.c.b16 %v990, %v989
      %v1031 = vpack.c.b16 %v992, %v991
      %v1032 = vpack.c.b16 %v994, %v993
      %v1033 = vpack.c.b16 %v996, %v995
      %v1034 = vpack.c.b16 %v998, %v997
      %v1035 = vpack.c.b16 %v1000, %v999
      %v1036 = vpack.c.b16 %v1002, %v1001
      %v1037 = vpack.c.b16 %v1004, %v1003
      %v1038 = vpack.c.b16 %v1006, %v1005
      %v1039 = vpack.c.b16 %v1008, %v1007
      %v1040 = vpack.c.b16 %v1010, %v1009
      %v1041 = vpack.c.b16 %v1012, %v1011
      %v1042 = vpack.c.b16 %v1014, %v1013
      %v1043 = vpack.c.b16 %v1016, %v1015
      %v1044 = vpack.c.b16 %v1018, %v1017
      %v1045 = vpack.c.b16 %v1020, %v1019
      %v1046 = vpack.c.b16 %v1022, %v1021
      %1071 = vmatprep.subr.bf16.mxu0 0
      %1072 = vmatpush1.bf16.msra.mxu0 %v1023
      %1073 = vmatprep.subr.bf16.mxu0 0
      %1074 = vmatpush1.bf16.msra.mxu0 %v1024
      %1075 = vmatprep.subr.bf16.mxu0 0
      %1076 = vmatpush1.bf16.msra.mxu0 %v1025
      %1077 = vmatprep.subr.bf16.mxu0 0
      %1078 = vmatpush1.bf16.msra.mxu0 %v1026
      %1079 = vmatprep.subr.bf16.mxu0 0
      %1080 = vmatpush1.bf16.msra.mxu0 %v1027
      %1081 = vmatprep.subr.bf16.mxu0 0
      %1082 = vmatpush1.bf16.msra.mxu0 %v1028
      %1083 = vmatprep.subr.bf16.mxu0 0
      %1084 = vmatpush1.bf16.msra.mxu0 %v1029
      %1085 = vmatprep.subr.bf16.mxu0 0
      %1086 = vmatpush1.bf16.msra.mxu0 %v1030
      %1087 = vmatprep.subr.bf16.mxu0 0
      %1088 = vmatpush1.bf16.msra.mxu0 %v1031
      %1089 = vmatprep.subr.bf16.mxu0 0
      %1090 = vmatpush1.bf16.msra.mxu0 %v1032
      %1091 = vmatprep.subr.bf16.mxu0 0
      %1092 = vmatpush1.bf16.msra.mxu0 %v1033
      %1093 = vmatprep.subr.bf16.mxu0 0
      %1094 = vmatpush1.bf16.msra.mxu0 %v1034
      %1095 = vmatprep.subr.bf16.mxu0 0
      %1096 = vmatpush1.bf16.msra.mxu0 %v1035
      %1097 = vmatprep.subr.bf16.mxu0 0
      %1098 = vmatpush1.bf16.msra.mxu0 %v1036
      %1099 = vmatprep.subr.bf16.mxu0 0
      %1100 = vmatpush1.bf16.msra.mxu0 %v1037
      %1101 = vmatprep.subr.bf16.mxu0 0
      %1102 = vmatpush1.bf16.msra.mxu0 %v1038
      %1103 = vmatprep.mubr.bf16.mxu0 %v904
      %1104 = vmatmul.mubr.bf16.gmra.mrb[0].mxu0 %v903
      %v1105 = vpop.f32.mrb[0].mxu0
      %v1106 = vadd.f32 0.0, %v1105
      %v1107 = vpop.f32.mrb[0].mxu0
      %v1108 = vpop.f32.mrb[0].mxu0
      %v1109 = vadd.f32 0.0, %v1108
      %v1110 = vpop.f32.mrb[0].mxu0
      %1111 = vmatprep.mubr.bf16.mxu0 %v907
      %1112 = vmatmul.mubr.bf16.gmra.mrb[0].mxu0 %v906
      %v1113 = vpop.f32.mrb[0].mxu0
      %v1114 = vadd.f32 0.0, %v1113
      %v1115 = vpop.f32.mrb[0].mxu0
      %v1116 = vpop.f32.mrb[0].mxu0
      %v1117 = vadd.f32 0.0, %v1116
      %v1118 = vpop.f32.mrb[0].mxu0
      %1119 = vmatprep.mubr.bf16.mxu0 %v910
      %1120 = vmatmul.mubr.bf16.gmra.mrb[0].mxu0 %v909
      %v1121 = vpop.f32.mrb[0].mxu0
      %v1122 = vadd.f32 0.0, %v1121
      %v1123 = vpop.f32.mrb[0].mxu0
      %v1124 = vpop.f32.mrb[0].mxu0
      %v1125 = vadd.f32 0.0, %v1124
      %v1126 = vpop.f32.mrb[0].mxu0
      %1127 = vmatprep.mubr.bf16.mxu0 %v913
      %1128 = vmatmul.mubr.bf16.gmra.mrb[0].mxu0 %v912
      %v1129 = vpop.f32.mrb[0].mxu0
      %v1130 = vadd.f32 0.0, %v1129
      %v1131 = vpop.f32.mrb[0].mxu0
      %v1132 = vpop.f32.mrb[0].mxu0
      %v1133 = vadd.f32 0.0, %v1132
      %v1134 = vpop.f32.mrb[0].mxu0
      %1135 = vdwg.mxu0
      %1136 = vmatprep.subr.bf16.mxu0 0
      %1137 = vmatpush1.bf16.msra.mxu0 %v1039
      %1138 = vmatprep.subr.bf16.mxu0 0
      %1139 = vmatpush1.bf16.msra.mxu0 %v1040
      %1140 = vmatprep.subr.bf16.mxu0 0
      %1141 = vmatpush1.bf16.msra.mxu0 %v1041
      %1142 = vmatprep.subr.bf16.mxu0 0
      %1143 = vmatpush1.bf16.msra.mxu0 %v1042
      %1144 = vmatprep.subr.bf16.mxu0 0
      %1145 = vmatpush1.bf16.msra.mxu0 %v1043
      %1146 = vmatprep.subr.bf16.mxu0 0
      %1147 = vmatpush1.bf16.msra.mxu0 %v1044
      %1148 = vmatprep.subr.bf16.mxu0 0
      %1149 = vmatpush1.bf16.msra.mxu0 %v1045
      %1150 = vmatprep.subr.bf16.mxu0 0
      %1151 = vmatpush1.bf16.msra.mxu0 %v1046
      %1152 = vmatprep.subr.bf16.mxu0 0
      %1153 = vmatpush1.bf16.msra.mxu0 0
      %1154 = vmatprep.subr.bf16.mxu0 0
      %1155 = vmatpush1.bf16.msra.mxu0 0
      %1156 = vmatprep.subr.bf16.mxu0 0
      %1157 = vmatpush1.bf16.msra.mxu0 0
      %1158 = vmatprep.subr.bf16.mxu0 0
      %1159 = vmatpush1.bf16.msra.mxu0 0
      %1160 = vmatprep.subr.bf16.mxu0 0
      %1161 = vmatpush1.bf16.msra.mxu0 0
      %1162 = vmatprep.subr.bf16.mxu0 0
      %1163 = vmatpush1.bf16.msra.mxu0 0
      %1164 = vmatprep.subr.bf16.mxu0 0
      %1165 = vmatpush1.bf16.msra.mxu0 0
      %1166 = vmatprep.subr.bf16.mxu0 0
      %1167 = vmatpush1.bf16.msra.mxu0 0
      %1168 = vmatprep.mubr.bf16.mxu0 0
      %1169 = vmatmul.mubr.bf16.gmra.mrb[0].mxu0 %v905
      %v1170 = vpop.f32.mrb[0].mxu0
      %v1171 = vadd.f32 %v1106, %v1170
      %v1172 = vpop.f32.mrb[0].mxu0
      %v1173 = vpop.f32.mrb[0].mxu0
      %v1174 = vadd.f32 %v1109, %v1173
      %v1175 = vpop.f32.mrb[0].mxu0
      %1176 = vmatprep.mubr.bf16.mxu0 0
      %1177 = vmatmul.mubr.bf16.gmra.mrb[0].mxu0 %v908
      %v1178 = vpop.f32.mrb[0].mxu0
      %v1179 = vadd.f32 %v1114, %v1178
      %v1180 = vpop.f32.mrb[0].mxu0
      %v1181 = vpop.f32.mrb[0].mxu0
      %v1182 = vadd.f32 %v1117, %v1181
      %v1183 = vpop.f32.mrb[0].mxu0
      %1184 = vmatprep.mubr.bf16.mxu0 0
      %1185 = vmatmul.mubr.bf16.gmra.mrb[0].mxu0 %v911
      %v1186 = vpop.f32.mrb[0].mxu0
      %v1187 = vadd.f32 %v1122, %v1186
      %v1188 = vpop.f32.mrb[0].mxu0
      %v1189 = vpop.f32.mrb[0].mxu0
      %v1190 = vadd.f32 %v1125, %v1189
      %v1191 = vpop.f32.mrb[0].mxu0
      %1192 = vmatprep.mubr.bf16.mxu0 0
      %1193 = vmatmul.mubr.bf16.gmra.mrb[0].mxu0 %v914
      %v1194 = vpop.f32.mrb[0].mxu0
      %v1195 = vadd.f32 %v1130, %v1194
      %v1196 = vpop.f32.mrb[0].mxu0
      %v1197 = vpop.f32.mrb[0].mxu0
      %v1198 = vadd.f32 %v1133, %v1197
      %v1199 = vpop.f32.mrb[0].mxu0
      %1200 = vdwg.mxu0
      %v1201 = vpack.c.b16 %v512, %v510
      %v1202 = vpack.c.b16 %v624, %v622
      %v1203 = vpack.c.b16 %v625, %v623
      %v1204 = vpack.c.b16 %v516, %v514
      %v1205 = vpack.c.b16 %v628, %v626
      %v1206 = vpack.c.b16 %v629, %v627
      %v1207 = vpack.c.b16 %v520, %v518
      %v1208 = vpack.c.b16 %v632, %v630
      %v1209 = vpack.c.b16 %v633, %v631
      %v1210 = vpack.c.b16 %v524, %v522
      %v1211 = vpack.c.b16 %v636, %v634
      %v1212 = vpack.c.b16 %v637, %v635
      %v1273 = vunpack.c.l.b16 %v638
      %v1274 = vunpack.c.l.b16 %v639
      %v1275 = vunpack.c.l.b16 %v640
      %v1276 = vunpack.c.l.b16 %v641
      %v1277 = vunpack.c.l.b16 %v642
      %v1278 = vunpack.c.l.b16 %v643
      %v1279 = vunpack.c.l.b16 %v644
      %v1280 = vunpack.c.l.b16 %v645
      %v1281 = vunpack.c.l.b16 %v646
      %v1282 = vunpack.c.l.b16 %v647
      %v1283 = vunpack.c.l.b16 %v648
      %v1284 = vunpack.c.l.b16 %v649
      %v1285 = vunpack.c.l.b16 %v650
      %v1286 = vunpack.c.l.b16 %v651
      %v1287 = vunpack.c.l.b16 %v652
      %v1288 = vunpack.c.l.b16 %v653
      %v1289 = vunpack.c.l.b16 %v654
      %v1290 = vunpack.c.l.b16 %v655
      %v1291 = vunpack.c.l.b16 %v656
      %v1292 = vunpack.c.l.b16 %v657
      %v1293 = vunpack.c.l.b16 %v658
      %v1294 = vunpack.c.l.b16 %v659
      %v1295 = vunpack.c.l.b16 %v660
      %v1296 = vunpack.c.l.b16 %v661
      %v1297 = vunpack.c.l.b16 %v662
      %v1298 = vunpack.c.l.b16 %v663
      %v1299 = vunpack.c.l.b16 %v664
      %v1300 = vunpack.c.l.b16 %v665
      %v1301 = vunpack.c.l.b16 %v666
      %v1302 = vunpack.c.l.b16 %v667
      %v1303 = vunpack.c.l.b16 %v668
      %v1304 = vunpack.c.l.b16 %v669
      %v1305 = vunpack.c.l.b16 %v670
      %v1306 = vunpack.c.l.b16 %v671
      %v1307 = vunpack.c.l.b16 %v672
      %v1308 = vunpack.c.l.b16 %v673
      %v1309 = vunpack.c.l.b16 %v674
      %v1310 = vunpack.c.l.b16 %v675
      %v1311 = vunpack.c.l.b16 %v676
      %v1312 = vunpack.c.l.b16 %v677
      %v1313 = vunpack.c.l.b16 %v678
      %v1314 = vunpack.c.l.b16 %v679
      %v1315 = vunpack.c.l.b16 %v680
      %v1316 = vunpack.c.l.b16 %v681
      %v1317 = vunpack.c.l.b16 %v682
      %v1318 = vunpack.c.l.b16 %v683
      %v1319 = vunpack.c.l.b16 %v684
      %v1320 = vunpack.c.l.b16 %v685
      %v1321 = vpack.c.b16 %v1274, %v1273
      %v1322 = vpack.c.b16 %v1276, %v1275
      %v1323 = vpack.c.b16 %v1278, %v1277
      %v1324 = vpack.c.b16 %v1280, %v1279
      %v1325 = vpack.c.b16 %v1282, %v1281
      %v1326 = vpack.c.b16 %v1284, %v1283
      %v1327 = vpack.c.b16 %v1286, %v1285
      %v1328 = vpack.c.b16 %v1288, %v1287
      %v1329 = vpack.c.b16 %v1290, %v1289
      %v1330 = vpack.c.b16 %v1292, %v1291
      %v1331 = vpack.c.b16 %v1294, %v1293
      %v1332 = vpack.c.b16 %v1296, %v1295
      %v1333 = vpack.c.b16 %v1298, %v1297
      %v1334 = vpack.c.b16 %v1300, %v1299
      %v1335 = vpack.c.b16 %v1302, %v1301
      %v1336 = vpack.c.b16 %v1304, %v1303
      %v1337 = vpack.c.b16 %v1306, %v1305
      %v1338 = vpack.c.b16 %v1308, %v1307
      %v1339 = vpack.c.b16 %v1310, %v1309
      %v1340 = vpack.c.b16 %v1312, %v1311
      %v1341 = vpack.c.b16 %v1314, %v1313
      %v1342 = vpack.c.b16 %v1316, %v1315
      %v1343 = vpack.c.b16 %v1318, %v1317
      %v1344 = vpack.c.b16 %v1320, %v1319
      %1369 = vmatprep.subr.bf16.mxu0 0
      %1370 = vmatpush1.bf16.msra.mxu0 %v1321
      %1371 = vmatprep.subr.bf16.mxu0 0
      %1372 = vmatpush1.bf16.msra.mxu0 %v1322
      %1373 = vmatprep.subr.bf16.mxu0 0
      %1374 = vmatpush1.bf16.msra.mxu0 %v1323
      %1375 = vmatprep.subr.bf16.mxu0 0
      %1376 = vmatpush1.bf16.msra.mxu0 %v1324
      %1377 = vmatprep.subr.bf16.mxu0 0
      %1378 = vmatpush1.bf16.msra.mxu0 %v1325
      %1379 = vmatprep.subr.bf16.mxu0 0
      %1380 = vmatpush1.bf16.msra.mxu0 %v1326
      %1381 = vmatprep.subr.bf16.mxu0 0
      %1382 = vmatpush1.bf16.msra.mxu0 %v1327
      %1383 = vmatprep.subr.bf16.mxu0 0
      %1384 = vmatpush1.bf16.msra.mxu0 %v1328
      %1385 = vmatprep.subr.bf16.mxu0 0
      %1386 = vmatpush1.bf16.msra.mxu0 %v1329
      %1387 = vmatprep.subr.bf16.mxu0 0
      %1388 = vmatpush1.bf16.msra.mxu0 %v1330
      %1389 = vmatprep.subr.bf16.mxu0 0
      %1390 = vmatpush1.bf16.msra.mxu0 %v1331
      %1391 = vmatprep.subr.bf16.mxu0 0
      %1392 = vmatpush1.bf16.msra.mxu0 %v1332
      %1393 = vmatprep.subr.bf16.mxu0 0
      %1394 = vmatpush1.bf16.msra.mxu0 %v1333
      %1395 = vmatprep.subr.bf16.mxu0 0
      %1396 = vmatpush1.bf16.msra.mxu0 %v1334
      %1397 = vmatprep.subr.bf16.mxu0 0
      %1398 = vmatpush1.bf16.msra.mxu0 %v1335
      %1399 = vmatprep.subr.bf16.mxu0 0
      %1400 = vmatpush1.bf16.msra.mxu0 %v1336
      %1401 = vmatprep.mubr.bf16.mxu0 %v1202
      %1402 = vmatmul.mubr.bf16.gmra.mrb[0].mxu0 %v1201
      %v1403 = vpop.f32.mrb[0].mxu0
      %v1404 = vadd.f32 %v1171, %v1403
      %v1405 = vpop.f32.mrb[0].mxu0
      %v1406 = vpop.f32.mrb[0].mxu0
      %v1407 = vadd.f32 %v1174, %v1406
      %v1408 = vpop.f32.mrb[0].mxu0
      %1409 = vmatprep.mubr.bf16.mxu0 %v1205
      %1410 = vmatmul.mubr.bf16.gmra.mrb[0].mxu0 %v1204
      %v1411 = vpop.f32.mrb[0].mxu0
      %v1412 = vadd.f32 %v1179, %v1411
      %v1413 = vpop.f32.mrb[0].mxu0
      %v1414 = vpop.f32.mrb[0].mxu0
      %v1415 = vadd.f32 %v1182, %v1414
      %v1416 = vpop.f32.mrb[0].mxu0
      %1417 = vmatprep.mubr.bf16.mxu0 %v1208
      %1418 = vmatmul.mubr.bf16.gmra.mrb[0].mxu0 %v1207
      %v1419 = vpop.f32.mrb[0].mxu0
      %v1420 = vadd.f32 %v1187, %v1419
      %v1421 = vpop.f32.mrb[0].mxu0
      %v1422 = vpop.f32.mrb[0].mxu0
      %v1423 = vadd.f32 %v1190, %v1422
      %v1424 = vpop.f32.mrb[0].mxu0
      %1425 = vmatprep.mubr.bf16.mxu0 %v1211
      %1426 = vmatmul.mubr.bf16.gmra.mrb[0].mxu0 %v1210
      %v1427 = vpop.f32.mrb[0].mxu0
      %v1428 = vadd.f32 %v1195, %v1427
      %v1429 = vpop.f32.mrb[0].mxu0
      %v1430 = vpop.f32.mrb[0].mxu0
      %v1431 = vadd.f32 %v1198, %v1430
      %v1432 = vpop.f32.mrb[0].mxu0
      %1433 = vdwg.mxu0
      %1434 = vmatprep.subr.bf16.mxu0 0
      %1435 = vmatpush1.bf16.msra.mxu0 %v1337
      %1436 = vmatprep.subr.bf16.mxu0 0
      %1437 = vmatpush1.bf16.msra.mxu0 %v1338
      %1438 = vmatprep.subr.bf16.mxu0 0
      %1439 = vmatpush1.bf16.msra.mxu0 %v1339
      %1440 = vmatprep.subr.bf16.mxu0 0
      %1441 = vmatpush1.bf16.msra.mxu0 %v1340
      %1442 = vmatprep.subr.bf16.mxu0 0
      %1443 = vmatpush1.bf16.msra.mxu0 %v1341
      %1444 = vmatprep.subr.bf16.mxu0 0
      %1445 = vmatpush1.bf16.msra.mxu0 %v1342
      %1446 = vmatprep.subr.bf16.mxu0 0
      %1447 = vmatpush1.bf16.msra.mxu0 %v1343
      %1448 = vmatprep.subr.bf16.mxu0 0
      %1449 = vmatpush1.bf16.msra.mxu0 %v1344
      %1450 = vmatprep.subr.bf16.mxu0 0
      %1451 = vmatpush1.bf16.msra.mxu0 0
      %1452 = vmatprep.subr.bf16.mxu0 0
      %1453 = vmatpush1.bf16.msra.mxu0 0
      %1454 = vmatprep.subr.bf16.mxu0 0
      %1455 = vmatpush1.bf16.msra.mxu0 0
      %1456 = vmatprep.subr.bf16.mxu0 0
      %1457 = vmatpush1.bf16.msra.mxu0 0
      %1458 = vmatprep.subr.bf16.mxu0 0
      %1459 = vmatpush1.bf16.msra.mxu0 0
      %1460 = vmatprep.subr.bf16.mxu0 0
      %1461 = vmatpush1.bf16.msra.mxu0 0
      %1462 = vmatprep.subr.bf16.mxu0 0
      %1463 = vmatpush1.bf16.msra.mxu0 0
      %1464 = vmatprep.subr.bf16.mxu0 0
      %1465 = vmatpush1.bf16.msra.mxu0 0
      %1466 = vmatprep.mubr.bf16.mxu0 0
      %1467 = vmatmul.mubr.bf16.gmra.mrb[0].mxu0 %v1203
      %v1468 = vpop.f32.mrb[0].mxu0
      %v1469 = vadd.f32 %v1404, %v1468
      %v1470 = vpop.f32.mrb[0].mxu0
      %v1471 = vpop.f32.mrb[0].mxu0
      %v1472 = vadd.f32 %v1407, %v1471
      %v1473 = vpop.f32.mrb[0].mxu0
      %1474 = vmatprep.mubr.bf16.mxu0 0
      %1475 = vmatmul.mubr.bf16.gmra.mrb[0].mxu0 %v1206
      %v1476 = vpop.f32.mrb[0].mxu0
      %v1477 = vadd.f32 %v1412, %v1476
      %v1478 = vpop.f32.mrb[0].mxu0
      %v1479 = vpop.f32.mrb[0].mxu0
      %v1480 = vadd.f32 %v1415, %v1479
      %v1481 = vpop.f32.mrb[0].mxu0
      %1482 = vmatprep.mubr.bf16.mxu0 0
      %1483 = vmatmul.mubr.bf16.gmra.mrb[0].mxu0 %v1209
      %v1484 = vpop.f32.mrb[0].mxu0
      %v1485 = vadd.f32 %v1420, %v1484
      %v1486 = vpop.f32.mrb[0].mxu0
      %v1487 = vpop.f32.mrb[0].mxu0
      %v1488 = vadd.f32 %v1423, %v1487
      %v1489 = vpop.f32.mrb[0].mxu0
      %1490 = vmatprep.mubr.bf16.mxu0 0
      %1491 = vmatmul.mubr.bf16.gmra.mrb[0].mxu0 %v1212
      %v1492 = vpop.f32.mrb[0].mxu0
      %v1493 = vadd.f32 %v1428, %v1492
      %v1494 = vpop.f32.mrb[0].mxu0
      %v1495 = vpop.f32.mrb[0].mxu0
      %v1496 = vadd.f32 %v1431, %v1495
      %v1497 = vpop.f32.mrb[0].mxu0
      %1498 = vdwg.mxu0
      %s1499 = scalar_lea.vmem [#allocation2], 16
      %v1500 = vld [vmem:[%s1499] sm:$0xf]
      %v1501 = vld [vmem:[%s1499 + $0x8] sm:$0xf]
      %v1502 = vld [vmem:[%s1499 + $0x10] sm:$0xf]
      %v1503 = vld [vmem:[%s1499 + $0x18] sm:$0xf]
      %v1504 = vld [vmem:[%s1499 + $0x20] sm:$0xf]
      %v1505 = vld [vmem:[%s1499 + $0x28] sm:$0xf]
      %v1506 = vld [vmem:[%s1499 + $0x30] sm:$0xf]
      %v1507 = vld [vmem:[%s1499 + $0x38] sm:$0xf]
      %v1508 = vld [vmem:[%s1499 + $0x4] sm:$0x1]
      %v1509 = vld [vmem:[%s1499 + $0xc] sm:$0x1]
      %v1510 = vld [vmem:[%s1499 + $0x14] sm:$0x1]
      %v1511 = vld [vmem:[%s1499 + $0x1c] sm:$0x1]
      %v1512 = vld [vmem:[%s1499 + $0x24] sm:$0x1]
      %v1513 = vld [vmem:[%s1499 + $0x2c] sm:$0x1]
      %v1514 = vld [vmem:[%s1499 + $0x34] sm:$0x1]
      %v1515 = vld [vmem:[%s1499 + $0x3c] sm:$0x1]
      %v1516 = vld [vmem:[%s1499] sm:$0xe]
      %v1517 = vld [vmem:[%s1499 + $0x8] sm:$0xe]
      %v1518 = vld [vmem:[%s1499 + $0x10] sm:$0xe]
      %v1519 = vld [vmem:[%s1499 + $0x18] sm:$0xe]
      %v1520 = vld [vmem:[%s1499 + $0x20] sm:$0xe]
      %v1521 = vld [vmem:[%s1499 + $0x28] sm:$0xe]
      %v1522 = vld [vmem:[%s1499 + $0x30] sm:$0xe]
      %v1523 = vld [vmem:[%s1499 + $0x38] sm:$0xe]
      %v1540 = vunpack.c.l.b16 %v1500
      %v1541 = vunpack.c.l.b16 %v1508
      %v1542 = vunpack.c.l.b16 %v1501
      %v1543 = vunpack.c.l.b16 %v1509
      %v1544 = vunpack.c.l.b16 %v1502
      %v1545 = vunpack.c.l.b16 %v1510
      %v1546 = vunpack.c.l.b16 %v1503
      %v1547 = vunpack.c.l.b16 %v1511
      %v1548 = vunpack.c.l.b16 %v1504
      %v1549 = vunpack.c.l.b16 %v1512
      %v1550 = vunpack.c.l.b16 %v1505
      %v1551 = vunpack.c.l.b16 %v1513
      %v1552 = vunpack.c.l.b16 %v1506
      %v1553 = vunpack.c.l.b16 %v1514
      %v1554 = vunpack.c.l.b16 %v1507
      %v1555 = vunpack.c.l.b16 %v1515
      %v1556 = vpack.c.b16 %v1541, %v1540
      %v1557 = vpack.c.b16 %v1543, %v1542
      %v1558 = vpack.c.b16 %v1545, %v1544
      %v1559 = vpack.c.b16 %v1547, %v1546
      %v1560 = vpack.c.b16 %v1549, %v1548
      %v1561 = vpack.c.b16 %v1551, %v1550
      %v1562 = vpack.c.b16 %v1553, %v1552
      %v1563 = vpack.c.b16 %v1555, %v1554
      %v1565 = vshrl.u32 %v1556, 16
      %v1567 = vshll.u32 %v1556, 16
      %v1569 = vrot.slane %v1567, 1
      %v1570 = vor.u32 %v1565, %v1569
      %v1572 = vshrl.u32 %v1557, 16
      %v1574 = vshll.u32 %v1557, 16
      %v1576 = vrot.slane %v1574, 1
      %v1577 = vor.u32 %v1572, %v1576
      %v1579 = vshrl.u32 %v1558, 16
      %v1581 = vshll.u32 %v1558, 16
      %v1583 = vrot.slane %v1581, 1
      %v1584 = vor.u32 %v1579, %v1583
      %v1586 = vshrl.u32 %v1559, 16
      %v1588 = vshll.u32 %v1559, 16
      %v1590 = vrot.slane %v1588, 1
      %v1591 = vor.u32 %v1586, %v1590
      %v1593 = vshrl.u32 %v1560, 16
      %v1595 = vshll.u32 %v1560, 16
      %v1597 = vrot.slane %v1595, 1
      %v1598 = vor.u32 %v1593, %v1597
      %v1600 = vshrl.u32 %v1561, 16
      %v1602 = vshll.u32 %v1561, 16
      %v1604 = vrot.slane %v1602, 1
      %v1605 = vor.u32 %v1600, %v1604
      %v1607 = vshrl.u32 %v1562, 16
      %v1609 = vshll.u32 %v1562, 16
      %v1611 = vrot.slane %v1609, 1
      %v1612 = vor.u32 %v1607, %v1611
      %v1614 = vshrl.u32 %v1563, 16
      %v1616 = vshll.u32 %v1563, 16
      %v1618 = vrot.slane %v1616, 1
      %v1619 = vor.u32 %v1614, %v1618
      %v1628 = vunpack.c.l.b16 %v1516
      %v1629 = vunpack.c.l.b16 %v1517
      %v1630 = vunpack.c.l.b16 %v1518
      %v1631 = vunpack.c.l.b16 %v1519
      %v1632 = vunpack.c.l.b16 %v1520
      %v1633 = vunpack.c.l.b16 %v1521
      %v1634 = vunpack.c.l.b16 %v1522
      %v1635 = vunpack.c.l.b16 %v1523
      %v1636 = vpack.c.b16 %v1541, %v1628
      %v1637 = vpack.c.b16 %v1543, %v1629
      %v1638 = vpack.c.b16 %v1545, %v1630
      %v1639 = vpack.c.b16 %v1547, %v1631
      %v1640 = vpack.c.b16 %v1549, %v1632
      %v1641 = vpack.c.b16 %v1551, %v1633
      %v1642 = vpack.c.b16 %v1553, %v1634
      %v1643 = vpack.c.b16 %v1555, %v1635
      %v1644 = vrot.slane %v1636, 1
      %v1645 = vrot.slane %v1637, 1
      %v1646 = vrot.slane %v1638, 1
      %v1647 = vrot.slane %v1639, 1
      %v1648 = vrot.slane %v1640, 1
      %v1649 = vrot.slane %v1641, 1
      %v1650 = vrot.slane %v1642, 1
      %v1651 = vrot.slane %v1643, 1
      %v1652 = vunpack.c.l.b16 %v1570
      %v1653 = vunpack.c.l.b16 %v1644
      %v1654 = vunpack.c.l.b16 %v1577
      %v1655 = vunpack.c.l.b16 %v1645
      %v1656 = vunpack.c.l.b16 %v1584
      %v1657 = vunpack.c.l.b16 %v1646
      %v1658 = vunpack.c.l.b16 %v1591
      %v1659 = vunpack.c.l.b16 %v1647
      %v1660 = vunpack.c.l.b16 %v1598
      %v1661 = vunpack.c.l.b16 %v1648
      %v1662 = vunpack.c.l.b16 %v1605
      %v1663 = vunpack.c.l.b16 %v1649
      %v1664 = vunpack.c.l.b16 %v1612
      %v1665 = vunpack.c.l.b16 %v1650
      %v1666 = vunpack.c.l.b16 %v1619
      %v1667 = vunpack.c.l.b16 %v1651
      %s1668 = scalar_lea.vmem %s3, 384
      %v1669 = vld [vmem:[%s1668] sm:$0xf]
      %v1670 = vld [vmem:[%s1668 + $0x4] sm:$0xf]
      %v1671 = vld [vmem:[%s1668 + $0x8] sm:$0xf]
      %v1672 = vld [vmem:[%s1668 + $0xc] sm:$0xf]
      %v1673 = vld [vmem:[%s1668 + $0x10] sm:$0xf]
      %v1674 = vld [vmem:[%s1668 + $0x14] sm:$0xf]
      %v1675 = vld [vmem:[%s1668 + $0x18] sm:$0xf]
      %v1676 = vld [vmem:[%s1668 + $0x1c] sm:$0xf]
      %v1677 = vld [vmem:[%s1668 + $0x20] sm:$0xf]
      %v1678 = vld [vmem:[%s1668 + $0x24] sm:$0xf]
      %v1679 = vld [vmem:[%s1668 + $0x28] sm:$0xf]
      %v1680 = vld [vmem:[%s1668 + $0x2c] sm:$0xf]
      %v1681 = vld [vmem:[%s1668 + $0x30] sm:$0xf]
      %v1682 = vld [vmem:[%s1668 + $0x34] sm:$0xf]
      %v1683 = vld [vmem:[%s1668 + $0x38] sm:$0xf]
      %v1684 = vld [vmem:[%s1668 + $0x3c] sm:$0xf]
      %v1685 = vld [vmem:[%s1668 + $0x40] sm:$0xf]
      %v1686 = vld [vmem:[%s1668 + $0x44] sm:$0xf]
      %v1687 = vld [vmem:[%s1668 + $0x48] sm:$0xf]
      %v1688 = vld [vmem:[%s1668 + $0x4c] sm:$0xf]
      %v1689 = vld [vmem:[%s1668 + $0x50] sm:$0xf]
      %v1690 = vld [vmem:[%s1668 + $0x54] sm:$0xf]
      %v1691 = vld [vmem:[%s1668 + $0x58] sm:$0xf]
      %v1692 = vld [vmem:[%s1668 + $0x5c] sm:$0xf]
      %v1693 = vld [vmem:[%s1668 + $0x60] sm:$0xf]
      %v1694 = vld [vmem:[%s1668 + $0x64] sm:$0xf]
      %v1695 = vld [vmem:[%s1668 + $0x68] sm:$0xf]
      %v1696 = vld [vmem:[%s1668 + $0x6c] sm:$0xf]
      %v1697 = vld [vmem:[%s1668 + $0x70] sm:$0xf]
      %v1698 = vld [vmem:[%s1668 + $0x74] sm:$0xf]
      %v1699 = vld [vmem:[%s1668 + $0x78] sm:$0xf]
      %v1700 = vld [vmem:[%s1668 + $0x7c] sm:$0xf]
      %v1701 = vld [vmem:[%s1668 + $0x80] sm:$0xf]
      %v1702 = vld [vmem:[%s1668 + $0x84] sm:$0xf]
      %v1703 = vld [vmem:[%s1668 + $0x88] sm:$0xf]
      %v1704 = vld [vmem:[%s1668 + $0x8c] sm:$0xf]
      %v1705 = vld [vmem:[%s1668 + $0x90] sm:$0xf]
      %v1706 = vld [vmem:[%s1668 + $0x94] sm:$0xf]
      %v1707 = vld [vmem:[%s1668 + $0x98] sm:$0xf]
      %v1708 = vld [vmem:[%s1668 + $0x9c] sm:$0xf]
      %v1709 = vld [vmem:[%s1668 + $0xa0] sm:$0xf]
      %v1710 = vld [vmem:[%s1668 + $0xa4] sm:$0xf]
      %v1711 = vld [vmem:[%s1668 + $0xa8] sm:$0xf]
      %v1712 = vld [vmem:[%s1668 + $0xac] sm:$0xf]
      %v1713 = vld [vmem:[%s1668 + $0xb0] sm:$0xf]
      %v1714 = vld [vmem:[%s1668 + $0xb4] sm:$0xf]
      %v1715 = vld [vmem:[%s1668 + $0xb8] sm:$0xf]
      %v1716 = vld [vmem:[%s1668 + $0xbc] sm:$0xf]
      %v1717 = vpack.c.b16 %v1542, %v1540
      %v1718 = vpack.c.b16 %v1654, %v1652
      %v1719 = vpack.c.b16 %v1655, %v1653
      %v1720 = vpack.c.b16 %v1546, %v1544
      %v1721 = vpack.c.b16 %v1658, %v1656
      %v1722 = vpack.c.b16 %v1659, %v1657
      %v1723 = vpack.c.b16 %v1550, %v1548
      %v1724 = vpack.c.b16 %v1662, %v1660
      %v1725 = vpack.c.b16 %v1663, %v1661
      %v1726 = vpack.c.b16 %v1554, %v1552
      %v1727 = vpack.c.b16 %v1666, %v1664
      %v1728 = vpack.c.b16 %v1667, %v1665
      %v1789 = vunpack.c.l.b16 %v1669
      %v1790 = vunpack.c.l.b16 %v1670
      %v1791 = vunpack.c.l.b16 %v1671
      %v1792 = vunpack.c.l.b16 %v1672
      %v1793 = vunpack.c.l.b16 %v1673
      %v1794 = vunpack.c.l.b16 %v1674
      %v1795 = vunpack.c.l.b16 %v1675
      %v1796 = vunpack.c.l.b16 %v1676
      %v1797 = vunpack.c.l.b16 %v1677
      %v1798 = vunpack.c.l.b16 %v1678
      %v1799 = vunpack.c.l.b16 %v1679
      %v1800 = vunpack.c.l.b16 %v1680
      %v1801 = vunpack.c.l.b16 %v1681
      %v1802 = vunpack.c.l.b16 %v1682
      %v1803 = vunpack.c.l.b16 %v1683
      %v1804 = vunpack.c.l.b16 %v1684
      %v1805 = vunpack.c.l.b16 %v1685
      %v1806 = vunpack.c.l.b16 %v1686
      %v1807 = vunpack.c.l.b16 %v1687
      %v1808 = vunpack.c.l.b16 %v1688
      %v1809 = vunpack.c.l.b16 %v1689
      %v1810 = vunpack.c.l.b16 %v1690
      %v1811 = vunpack.c.l.b16 %v1691
      %v1812 = vunpack.c.l.b16 %v1692
      %v1813 = vunpack.c.l.b16 %v1693
      %v1814 = vunpack.c.l.b16 %v1694
      %v1815 = vunpack.c.l.b16 %v1695
      %v1816 = vunpack.c.l.b16 %v1696
      %v1817 = vunpack.c.l.b16 %v1697
      %v1818 = vunpack.c.l.b16 %v1698
      %v1819 = vunpack.c.l.b16 %v1699
      %v1820 = vunpack.c.l.b16 %v1700
      %v1821 = vunpack.c.l.b16 %v1701
      %v1822 = vunpack.c.l.b16 %v1702
      %v1823 = vunpack.c.l.b16 %v1703
      %v1824 = vunpack.c.l.b16 %v1704
      %v1825 = vunpack.c.l.b16 %v1705
      %v1826 = vunpack.c.l.b16 %v1706
      %v1827 = vunpack.c.l.b16 %v1707
      %v1828 = vunpack.c.l.b16 %v1708
      %v1829 = vunpack.c.l.b16 %v1709
      %v1830 = vunpack.c.l.b16 %v1710
      %v1831 = vunpack.c.l.b16 %v1711
      %v1832 = vunpack.c.l.b16 %v1712
      %v1833 = vunpack.c.l.b16 %v1713
      %v1834 = vunpack.c.l.b16 %v1714
      %v1835 = vunpack.c.l.b16 %v1715
      %v1836 = vunpack.c.l.b16 %v1716
      %v1837 = vpack.c.b16 %v1790, %v1789
      %v1838 = vpack.c.b16 %v1792, %v1791
      %v1839 = vpack.c.b16 %v1794, %v1793
      %v1840 = vpack.c.b16 %v1796, %v1795
      %v1841 = vpack.c.b16 %v1798, %v1797
      %v1842 = vpack.c.b16 %v1800, %v1799
      %v1843 = vpack.c.b16 %v1802, %v1801
      %v1844 = vpack.c.b16 %v1804, %v1803
      %v1845 = vpack.c.b16 %v1806, %v1805
      %v1846 = vpack.c.b16 %v1808, %v1807
      %v1847 = vpack.c.b16 %v1810, %v1809
      %v1848 = vpack.c.b16 %v1812, %v1811
      %v1849 = vpack.c.b16 %v1814, %v1813
      %v1850 = vpack.c.b16 %v1816, %v1815
      %v1851 = vpack.c.b16 %v1818, %v1817
      %v1852 = vpack.c.b16 %v1820, %v1819
      %v1853 = vpack.c.b16 %v1822, %v1821
      %v1854 = vpack.c.b16 %v1824, %v1823
      %v1855 = vpack.c.b16 %v1826, %v1825
      %v1856 = vpack.c.b16 %v1828, %v1827
      %v1857 = vpack.c.b16 %v1830, %v1829
      %v1858 = vpack.c.b16 %v1832, %v1831
      %v1859 = vpack.c.b16 %v1834, %v1833
      %v1860 = vpack.c.b16 %v1836, %v1835
      %1885 = vmatprep.subr.bf16.mxu0 0
      %1886 = vmatpush1.bf16.msra.mxu0 %v1837
      %1887 = vmatprep.subr.bf16.mxu0 0
      %1888 = vmatpush1.bf16.msra.mxu0 %v1838
      %1889 = vmatprep.subr.bf16.mxu0 0
      %1890 = vmatpush1.bf16.msra.mxu0 %v1839
      %1891 = vmatprep.subr.bf16.mxu0 0
      %1892 = vmatpush1.bf16.msra.mxu0 %v1840
      %1893 = vmatprep.subr.bf16.mxu0 0
      %1894 = vmatpush1.bf16.msra.mxu0 %v1841
      %1895 = vmatprep.subr.bf16.mxu0 0
      %1896 = vmatpush1.bf16.msra.mxu0 %v1842
      %1897 = vmatprep.subr.bf16.mxu0 0
      %1898 = vmatpush1.bf16.msra.mxu0 %v1843
      %1899 = vmatprep.subr.bf16.mxu0 0
      %1900 = vmatpush1.bf16.msra.mxu0 %v1844
      %1901 = vmatprep.subr.bf16.mxu0 0
      %1902 = vmatpush1.bf16.msra.mxu0 %v1845
      %1903 = vmatprep.subr.bf16.mxu0 0
      %1904 = vmatpush1.bf16.msra.mxu0 %v1846
      %1905 = vmatprep.subr.bf16.mxu0 0
      %1906 = vmatpush1.bf16.msra.mxu0 %v1847
      %1907 = vmatprep.subr.bf16.mxu0 0
      %1908 = vmatpush1.bf16.msra.mxu0 %v1848
      %1909 = vmatprep.subr.bf16.mxu0 0
      %1910 = vmatpush1.bf16.msra.mxu0 %v1849
      %1911 = vmatprep.subr.bf16.mxu0 0
      %1912 = vmatpush1.bf16.msra.mxu0 %v1850
      %1913 = vmatprep.subr.bf16.mxu0 0
      %1914 = vmatpush1.bf16.msra.mxu0 %v1851
      %1915 = vmatprep.subr.bf16.mxu0 0
      %1916 = vmatpush1.bf16.msra.mxu0 %v1852
      %1917 = vmatprep.mubr.bf16.mxu0 %v1718
      %1918 = vmatmul.mubr.bf16.gmra.mrb[0].mxu0 %v1717
      %v1919 = vpop.f32.mrb[0].mxu0
      %v1920 = vadd.f32 0.0, %v1919
      %v1921 = vpop.f32.mrb[0].mxu0
      %v1922 = vpop.f32.mrb[0].mxu0
      %v1923 = vadd.f32 0.0, %v1922
      %v1924 = vpop.f32.mrb[0].mxu0
      %1925 = vmatprep.mubr.bf16.mxu0 %v1721
      %1926 = vmatmul.mubr.bf16.gmra.mrb[0].mxu0 %v1720
      %v1927 = vpop.f32.mrb[0].mxu0
      %v1928 = vadd.f32 0.0, %v1927
      %v1929 = vpop.f32.mrb[0].mxu0
      %v1930 = vpop.f32.mrb[0].mxu0
      %v1931 = vadd.f32 0.0, %v1930
      %v1932 = vpop.f32.mrb[0].mxu0
      %1933 = vmatprep.mubr.bf16.mxu0 %v1724
      %1934 = vmatmul.mubr.bf16.gmra.mrb[0].mxu0 %v1723
      %v1935 = vpop.f32.mrb[0].mxu0
      %v1936 = vadd.f32 0.0, %v1935
      %v1937 = vpop.f32.mrb[0].mxu0
      %v1938 = vpop.f32.mrb[0].mxu0
      %v1939 = vadd.f32 0.0, %v1938
      %v1940 = vpop.f32.mrb[0].mxu0
      %1941 = vmatprep.mubr.bf16.mxu0 %v1727
      %1942 = vmatmul.mubr.bf16.gmra.mrb[0].mxu0 %v1726
      %v1943 = vpop.f32.mrb[0].mxu0
      %v1944 = vadd.f32 0.0, %v1943
      %v1945 = vpop.f32.mrb[0].mxu0
      %v1946 = vpop.f32.mrb[0].mxu0
      %v1947 = vadd.f32 0.0, %v1946
      %v1948 = vpop.f32.mrb[0].mxu0
      %1949 = vdwg.mxu0
      %1950 = vmatprep.subr.bf16.mxu0 0
      %1951 = vmatpush1.bf16.msra.mxu0 %v1853
      %1952 = vmatprep.subr.bf16.mxu0 0
      %1953 = vmatpush1.bf16.msra.mxu0 %v1854
      %1954 = vmatprep.subr.bf16.mxu0 0
      %1955 = vmatpush1.bf16.msra.mxu0 %v1855
      %1956 = vmatprep.subr.bf16.mxu0 0
      %1957 = vmatpush1.bf16.msra.mxu0 %v1856
      %1958 = vmatprep.subr.bf16.mxu0 0
      %1959 = vmatpush1.bf16.msra.mxu0 %v1857
      %1960 = vmatprep.subr.bf16.mxu0 0
      %1961 = vmatpush1.bf16.msra.mxu0 %v1858
      %1962 = vmatprep.subr.bf16.mxu0 0
      %1963 = vmatpush1.bf16.msra.mxu0 %v1859
      %1964 = vmatprep.subr.bf16.mxu0 0
      %1965 = vmatpush1.bf16.msra.mxu0 %v1860
      %1966 = vmatprep.subr.bf16.mxu0 0
      %1967 = vmatpush1.bf16.msra.mxu0 0
      %1968 = vmatprep.subr.bf16.mxu0 0
      %1969 = vmatpush1.bf16.msra.mxu0 0
      %1970 = vmatprep.subr.bf16.mxu0 0
      %1971 = vmatpush1.bf16.msra.mxu0 0
      %1972 = vmatprep.subr.bf16.mxu0 0
      %1973 = vmatpush1.bf16.msra.mxu0 0
      %1974 = vmatprep.subr.bf16.mxu0 0
      %1975 = vmatpush1.bf16.msra.mxu0 0
      %1976 = vmatprep.subr.bf16.mxu0 0
      %1977 = vmatpush1.bf16.msra.mxu0 0
      %1978 = vmatprep.subr.bf16.mxu0 0
      %1979 = vmatpush1.bf16.msra.mxu0 0
      %1980 = vmatprep.subr.bf16.mxu0 0
      %1981 = vmatpush1.bf16.msra.mxu0 0
      %1982 = vmatprep.mubr.bf16.mxu0 0
      %1983 = vmatmul.mubr.bf16.gmra.mrb[0].mxu0 %v1719
      %v1984 = vpop.f32.mrb[0].mxu0
      %v1985 = vadd.f32 %v1920, %v1984
      %v1986 = vpop.f32.mrb[0].mxu0
      %v1987 = vpop.f32.mrb[0].mxu0
      %v1988 = vadd.f32 %v1923, %v1987
      %v1989 = vpop.f32.mrb[0].mxu0
      %1990 = vmatprep.mubr.bf16.mxu0 0
      %1991 = vmatmul.mubr.bf16.gmra.mrb[0].mxu0 %v1722
      %v1992 = vpop.f32.mrb[0].mxu0
      %v1993 = vadd.f32 %v1928, %v1992
      %v1994 = vpop.f32.mrb[0].mxu0
      %v1995 = vpop.f32.mrb[0].mxu0
      %v1996 = vadd.f32 %v1931, %v1995
      %v1997 = vpop.f32.mrb[0].mxu0
      %1998 = vmatprep.mubr.bf16.mxu0 0
      %1999 = vmatmul.mubr.bf16.gmra.mrb[0].mxu0 %v1725
      %v2000 = vpop.f32.mrb[0].mxu0
      %v2001 = vadd.f32 %v1936, %v2000
      %v2002 = vpop.f32.mrb[0].mxu0
      %v2003 = vpop.f32.mrb[0].mxu0
      %v2004 = vadd.f32 %v1939, %v2003
      %v2005 = vpop.f32.mrb[0].mxu0
      %2006 = vmatprep.mubr.bf16.mxu0 0
      %2007 = vmatmul.mubr.bf16.gmra.mrb[0].mxu0 %v1728
      %v2008 = vpop.f32.mrb[0].mxu0
      %v2009 = vadd.f32 %v1944, %v2008
      %v2010 = vpop.f32.mrb[0].mxu0
      %v2011 = vpop.f32.mrb[0].mxu0
      %v2012 = vadd.f32 %v1947, %v2011
      %v2013 = vpop.f32.mrb[0].mxu0
      %2014 = vdwg.mxu0
      %v2015 = vadd.f32 %v1469, %v1985
      %v2016 = vadd.f32 %v1472, %v1988
      %v2017 = vadd.f32 %v1477, %v1993
      %v2018 = vadd.f32 %v1480, %v1996
      %v2019 = vadd.f32 %v1485, %v2001
      %v2020 = vadd.f32 %v1488, %v2004
      %v2021 = vadd.f32 %v1493, %v2009
      %v2022 = vadd.f32 %v1496, %v2012
      %v2023 = vadd.f32 %v2015, %v2016
      %v2024 = vadd.f32 %v2023, %v2017
      %v2025 = vadd.f32 %v2024, %v2018
      %v2026 = vadd.f32 %v2025, %v2019
      %v2027 = vadd.f32 %v2026, %v2020
      %v2028 = vadd.f32 %v2027, %v2021
      %v2029 = vadd.f32 %v2028, %v2022
      %v2030 = vrot.slane %v2029, 4
      %v2031 = vadd.f32 %v2029, %v2030
      %v2032 = vrot.slane %v2031, 2
      %v2033 = vadd.f32 %v2031, %v2032
      %v2034 = vrot.slane %v2033, 1
      %v2035 = vadd.f32 %v2033, %v2034
      %v2036 = vmul.f32 %v2015, %v2015
      %v2037 = vmul.f32 %v2016, %v2016
      %v2038 = vmul.f32 %v2017, %v2017
      %v2039 = vmul.f32 %v2018, %v2018
      %v2040 = vmul.f32 %v2019, %v2019
      %v2041 = vmul.f32 %v2020, %v2020
      %v2042 = vmul.f32 %v2021, %v2021
      %v2043 = vmul.f32 %v2022, %v2022
      %v2044 = vadd.f32 %v2036, %v2037
      %v2045 = vadd.f32 %v2044, %v2038
      %v2046 = vadd.f32 %v2045, %v2039
      %v2047 = vadd.f32 %v2046, %v2040
      %v2048 = vadd.f32 %v2047, %v2041
      %v2049 = vadd.f32 %v2048, %v2042
      %v2050 = vadd.f32 %v2049, %v2043
      %v2051 = vrot.slane %v2050, 4
      %v2052 = vadd.f32 %v2050, %v2051
      %v2053 = vrot.slane %v2052, 2
      %v2054 = vadd.f32 %v2052, %v2053
      %v2055 = vrot.slane %v2054, 1
      %v2056 = vadd.f32 %v2054, %v2055
      %vm2057 = vcmask 1040384
      %v2058 = vsel %vm2057, %v2035, %v2056
      %2059 = vst [vmem:[%s235] sm:$0x3] %v2058
      %v2060 = vpack.c.bf16 %v2016, %v2015
      %v2061 = vpack.c.bf16 %v2018, %v2017
      %v2062 = vpack.c.bf16 %v2020, %v2019
      %v2063 = vpack.c.bf16 %v2022, %v2021
      %v2068 = vunpack.c.l.b16 %v2060
      %v2069 = vunpack.c.h.b16 %v2060
      %v2070 = vunpack.c.l.b16 %v2061
      %v2071 = vunpack.c.h.b16 %v2061
      %v2072 = vunpack.c.l.b16 %v2062
      %v2073 = vunpack.c.h.b16 %v2062
      %v2074 = vunpack.c.l.b16 %v2063
      %v2075 = vunpack.c.h.b16 %v2063
      %v2076 = vpack.c.b16 %v2068, %v2068
      %v2077 = vpack.c.b16 %v2069, %v2069
      %v2078 = vpack.c.b16 %v2070, %v2070
      %v2079 = vpack.c.b16 %v2071, %v2071
      %v2080 = vpack.c.b16 %v2072, %v2072
      %v2081 = vpack.c.b16 %v2073, %v2073
      %v2082 = vpack.c.b16 %v2074, %v2074
      %v2083 = vpack.c.b16 %v2075, %v2075
      %2092 = vst [vmem:[%s231] sm:$0xf] %v2076
      %2093 = vst [vmem:[%s231 + $0x4] sm:$0xf] %v2077
      %2094 = vst [vmem:[%s231 + $0x8] sm:$0xf] %v2078
      %2095 = vst [vmem:[%s231 + $0xc] sm:$0xf] %v2079
      %2096 = vst [vmem:[%s231 + $0x10] sm:$0xf] %v2080
      %2097 = vst [vmem:[%s231 + $0x14] sm:$0xf] %v2081
      %2098 = vst [vmem:[%s231 + $0x18] sm:$0xf] %v2082
      %2099 = vst [vmem:[%s231 + $0x1c] sm:$0xf] %v2083
      %p2100 = scmp.lt.s32.totalorder %s17, 1
      %s2101 = scalar_select %p2100, %s17, 1
      %s2102 = smul.addr %s2101, 8
      %s2103 = smul.addr %s2102, 4
      %s2104 = scalar_lea.vmem %s4, %s2103
      %p2105 = scmp.lt.s32.totalorder %s17, 1
      %s2106 = scalar_select %p2105, %s17, 1
      %s2107 = smul.addr %s2106, 2
      %s2108 = scalar_lea.vmem %s5, %s2107
      // Predicated region
      $region37: #{basic_block_forward.4} parent=35 // pred_check
        %p2109 = pneg %p124
      $region38: #{basic_block_forward.4} parent=35 // pred_check_branch
        %2111 = sbr.rel (%p2109) target = $region40
      $region39: #{basic_block_forward.4} parent=35 // pred_region
        _
      $region40: #{basic_block_forward.4} parent=35 // pred_fallthru
        _
      // Predicated region
      $region41: #{basic_block_forward.4} parent=35 // pred_check
        %p2112 = pneg %p150
      $region42: #{basic_block_forward.4} parent=35 // pred_check_branch
        %2114 = sbr.rel (%p2112) target = $region44
      $region43: #{basic_block_forward.4} parent=35 // pred_region
        _
      $region44: #{basic_block_forward.4} parent=35 // pred_fallthru
        _
    $region36: #{basic_block_forward.4} parent=5 // pred_fallthru
      _
    %p2115 = scmp.le.s32.totalorder 2, %s12
    // Predicated region
    $region45: #{basic_block_forward.4} parent=5 // pred_check
      %p2116 = pneg %p2115
    $region46: #{basic_block_forward.4} parent=5 // pred_check_branch
      %2118 = sbr.rel (%p2116) target = $region48
    $region47: #{basic_block_forward.4} parent=5 // pred_region
      %s2119 = ssub.s32 %s12, 2
      // Predicated region
      $region49: #{basic_block_forward.4} parent=47 // pred_check
        %p2120 = pneg %p130
      $region50: #{basic_block_forward.4} parent=47 // pred_check_branch
        %2122 = sbr.rel (%p2120) target = $region52
      $region51: #{basic_block_forward.4} parent=47 // pred_region
        %p2123 = scmp.lt.s32.totalorder %s18, 1
        %s2124 = scalar_select %p2123, %s18, 1
        %s2125 = smul.addr %s2124, 8
        %s2126 = smul.addr %s2125, 4
        %s2127 = scalar_lea.vmem %s4, %s2126
      $region52: #{basic_block_forward.4} parent=47 // pred_fallthru
        _
      // Predicated region
      $region53: #{basic_block_forward.4} parent=47 // pred_check
        %p2128 = pneg %p156
      $region54: #{basic_block_forward.4} parent=47 // pred_check_branch
        %2130 = sbr.rel (%p2128) target = $region56
      $region55: #{basic_block_forward.4} parent=47 // pred_region
        %p2131 = scmp.lt.s32.totalorder %s18, 1
        %s2132 = scalar_select %p2131, %s18, 1
        %s2133 = smul.addr %s2132, 2
        %s2134 = scalar_lea.vmem %s5, %s2133
      $region56: #{basic_block_forward.4} parent=47 // pred_fallthru
        _
    $region48: #{basic_block_forward.4} parent=5 // pred_fallthru
      _
  $region6: #{basic_block_forward.4} parent=0 // loop_footer
    %s16 = sadd.s32 1, %s12
  $region7: #{basic_block_forward.4} parent=0 // loop_footer_branch
    %11 = sbr.rel target = $region3
  $region8: #{basic_block_forward.4} parent=0 // loop_exit
    _

</llo_original>
